<compile_context>
chip_gen: v7x
topology: tpu7x:2x2x1
jax: 0.10.0
libtpu: 0.0.40
codegen_flags: <defaults>
</compile_context>

<pallas_src>
import functools

import jax
import jax.numpy as jnp
from jax import lax
from jax.experimental import pallas as pl
from jax.experimental.pallas import tpu as pltpu


def _round_up(x, m):
    return ((x + m - 1) // m) * m


def _pad_to(a, shape):
    return jnp.zeros(shape, a.dtype).at[tuple(slice(0, s) for s in a.shape)].set(a)


# ---------------------------------------------------------------------------
# Kernel
# ---------------------------------------------------------------------------
def vrf_kernel(x_ref, mask_ref, wih_ref, whh_ref, b_ref,
               w1_ref, b1_ref, w2_ref, b2_ref, sigma_ref, mu_ref,
               out_ref, h_scr, c_scr, xp_scr, *, tt, tb, hp, unroll):
    """One (batch-tile, time-tile) grid step.

    x_ref    : (TT*TB, I)   time-major-within-tile input slab (bf16/f32)
    mask_ref : (TT*TB, 1)   f32 {0,1} validity mask (t < length)
    wih_ref  : (I, 4Hp)  whh_ref: (Hp, 4Hp)  b_ref: (1, 4Hp)  gate order (i,f,o,g)
    w1_ref   : (Hp, F1p) b1_ref: (1, F1p)
    w2_ref   : (F1p, Op) b2_ref / sigma_ref / mu_ref: (1, Op)
    out_ref  : (TB, Op)
    h_scr/c_scr : (TB, Hp) f32 LSTM state, persists across the time grid axis
    xp_scr   : (TT*TB, 4Hp) f32 hoisted input-projection slab
    """
    ti = pl.program_id(1)

    @pl.when(ti == 0)
    def _init():
        h_scr[...] = jnp.zeros_like(h_scr)
        c_scr[...] = jnp.zeros_like(c_scr)

    cdt = wih_ref.dtype  # matmul operand dtype (bf16 or f32)
    h3 = 3 * hp

    # Hoisted input projection: ONE MXU matmul for the whole time tile, stored
    # to an explicit VMEM scratch (not a huge SSA value).
    xp_scr[...] = (jnp.dot(x_ref[...].astype(cdt), wih_ref[...],
                           preferred_element_type=jnp.float32) + b_ref[...])

    # Recurrence: bounded-unroll fori_loop; only h @ W_hh + nonlinearities are
    # on the serial chain.
    def step(s, carry):
        lo = pl.multiple_of(s * tb, 8)
        h = h_scr[...]
        c = c_scr[...]
        g = xp_scr[pl.ds(lo, tb), :] + jnp.dot(
            h.astype(cdt), whh_ref[...], preferred_element_type=jnp.float32)
        # sigmoid via tanh: single EUP pass per element for the (i,f,o) slab.
        sig = 0.5 * jnp.tanh(0.5 * g[:, :h3]) + 0.5
        i_g = sig[:, 0:hp]
        f_g = sig[:, hp:2 * hp]
        o_g = sig[:, 2 * hp:h3]
        g_g = jnp.tanh(g[:, h3:])
        c_new = f_g * c + i_g * g_g
        h_new = o_g * jnp.tanh(c_new)
        m = mask_ref[pl.ds(lo, tb), :]            # (TB, 1), 1.0 while t < length
        h_scr[...] = m * h_new + (1.0 - m) * h    # exact freeze for m in {0,1}
        c_scr[...] = m * c_new + (1.0 - m) * c
        return carry

    lax.fori_loop(0, tt, step, 0, unroll=unroll)

    # fc head + de-standardization, only after the last time tile.
    @pl.when(ti == pl.num_programs(1) - 1)
    def _head():
        hl = h_scr[...]
        z1 = jnp.dot(hl.astype(cdt), w1_ref[...],
                     preferred_element_type=jnp.float32) + b1_ref[...]
        z1 = jnp.maximum(z1, 0.0)
        z2 = jnp.dot(z1.astype(cdt), w2_ref[...],
                     preferred_element_type=jnp.float32) + b2_ref[...]
        out_ref[...] = z2 * sigma_ref[...] + mu_ref[...]


# ---------------------------------------------------------------------------
# Parameter preparation: gate reorder (i,f,g,o) -> (i,f,o,g), per-gate 128-lane
# padding, fc/output lane padding, bf16 cast of matmul operands.
# ---------------------------------------------------------------------------
def prepare_params(params, hp, f1p, op, matmul_dtype):
    H = params["whh"].shape[0]

    def regate(w, row_pad):
        blocks = [w[:, k * H:(k + 1) * H] for k in range(4)]    # (i, f, g, o)
        i_, f_, g_, o_ = blocks
        padded = [_pad_to(b, (row_pad, hp)) for b in (i_, f_, o_, g_)]
        return jnp.concatenate(padded, axis=1)                  # (row_pad, 4Hp)

    I = params["wih"].shape[0]
    return {
        "wih": regate(params["wih"], I).astype(matmul_dtype),
        "whh": regate(params["whh"], hp).astype(matmul_dtype),
        "b":   regate(params["b"], 1).astype(jnp.float32),
        "w1":  _pad_to(params["w1"], (hp, f1p)).astype(matmul_dtype),
        "b1":  _pad_to(params["b1"], (1, f1p)).astype(jnp.float32),
        "w2":  _pad_to(params["w2"], (f1p, op)).astype(matmul_dtype),
        "b2":  _pad_to(params["b2"], (1, op)).astype(jnp.float32),
        "sigma": _pad_to(params["sigma"], (1, op)).astype(jnp.float32),
        "mu":    _pad_to(params["mu"], (1, op)).astype(jnp.float32),
    }


# ---------------------------------------------------------------------------
# Wrapper
# ---------------------------------------------------------------------------
def vrf_forward(x, lengths, params, *, tt=16, tb=128,
                matmul_dtype=jnp.bfloat16, unroll=8):
    """x: (B, T, I) float32 padded batch-first input; lengths: (B,) int."""
    B, T, I = x.shape
    H = params["whh"].shape[0]
    F1 = params["w1"].shape[1]
    O = params["w2"].shape[1]

    HP = _round_up(H, 128)     # per-gate lane padding
    F1P = _round_up(F1, 128)
    OP = _round_up(O, 128)     # lane-dense output slab

    # Batch tile: multiple of 8, no larger than the padded batch, and split so
    # there are >= 2 batch tiles when possible (v7x has 2 TCs; batch axis is
    # "parallel").
    Bp8 = _round_up(B, 8)
    tb = max(8, min(_round_up(tb, 8), Bp8))
    if tb >= Bp8 and Bp8 > 8:
        tb = _round_up((Bp8 + 1) // 2, 8)
    Bp = _round_up(B, tb)
    nb = Bp // tb

    tt = max(1, tt)
    Tp = _round_up(T, tt)
    nt = Tp // tt
    unroll = max(1, min(unroll, tt))

    kp = prepare_params(params, HP, F1P, OP, matmul_dtype)

    # Lay out x as (nb, Tp*tb, I): time-major within each batch tile so each
    # timestep is a lane-aligned, sublane-aligned row block of the slab.
    x_pad = jnp.zeros((Bp, Tp, I), jnp.float32).at[:B, :T, :].set(
        x.astype(jnp.float32))
    x_flat = (x_pad.reshape(nb, tb, Tp, I)
              .transpose(0, 2, 1, 3)
              .reshape(nb, Tp * tb, I)
              .astype(matmul_dtype))

    lens = jnp.zeros((Bp,), jnp.int32).at[:B].set(lengths.astype(jnp.int32))
    mask = (jnp.arange(Tp, dtype=jnp.int32)[None, :] < lens[:, None]).astype(jnp.float32)
    mask_flat = (mask.reshape(nb, tb, Tp)
                 .transpose(0, 2, 1)
                 .reshape(nb, Tp * tb, 1))

    kernel = functools.partial(vrf_kernel, tt=tt, tb=tb, hp=HP, unroll=unroll)

    def full(shape):
        return pl.BlockSpec(shape, lambda bi, ti: (0,) * len(shape))

    grid_spec = pltpu.PrefetchScalarGridSpec(
        num_scalar_prefetch=0,
        grid=(nb, nt),
        in_specs=[
            pl.BlockSpec((None, tt * tb, I), lambda bi, ti: (bi, ti, 0)),   # x
            pl.BlockSpec((None, tt * tb, 1), lambda bi, ti: (bi, ti, 0)),   # mask
            full(kp["wih"].shape), full(kp["whh"].shape), full(kp["b"].shape),
            full(kp["w1"].shape), full(kp["b1"].shape),
            full(kp["w2"].shape), full(kp["b2"].shape),
            full(kp["sigma"].shape), full(kp["mu"].shape),
        ],
        out_specs=pl.BlockSpec((tb, OP), lambda bi, ti: (bi, 0)),
        scratch_shapes=[pltpu.VMEM((tb, HP), jnp.float32),           # h
                        pltpu.VMEM((tb, HP), jnp.float32),           # c
                        pltpu.VMEM((tt * tb, 4 * HP), jnp.float32)], # xp slab
    )

    itemsize = jnp.dtype(matmul_dtype).itemsize
    w_bytes = sum(int(v.size) * jnp.dtype(v.dtype).itemsize for v in kp.values())
    vmem_est = (2 * tt * tb * I * itemsize        # x (double-buffered)
                + 2 * tt * tb * 4                 # mask
                + 2 * w_bytes                     # weights
                + 2 * tb * OP * 4                 # out
                + 4 * tb * HP * 4                 # h/c scratch (conservative)
                + tt * tb * 4 * HP * 4)           # xp scratch
    # >= 32 MiB scoped default, capped at 56 MiB so the build fits v7x (64 MiB).
    vmem_limit = int(min(max(32 * 1024 * 1024, 2 * vmem_est), 56 * 1024 * 1024))

    cost = pl.CostEstimate(
        flops=int(2 * (Tp * Bp * I * 4 * HP + Tp * Bp * HP * 4 * HP
                       + Bp * HP * F1P + Bp * F1P * OP)),
        transcendentals=int(Tp * Bp * 5 * HP),
        bytes_accessed=int(x_flat.size * itemsize + mask_flat.size * 4
                           + w_bytes + Bp * OP * 4),
    )

    out = pl.pallas_call(
        kernel,
        out_shape=jax.ShapeDtypeStruct((Bp, OP), jnp.float32),
        grid_spec=grid_spec,
        compiler_params=pltpu.CompilerParams(
            dimension_semantics=("parallel", "arbitrary"),
            vmem_limit_bytes=vmem_limit),
        cost_estimate=cost,
    )(x_flat, mask_flat, kp["wih"], kp["whh"], kp["b"],
      kp["w1"], kp["b1"], kp["w2"], kp["b2"], kp["sigma"], kp["mu"])

    return out[:B, :O]


# ---------------------------------------------------------------------------
# Pure-JAX reference (mirrors PyTorch packed-LSTM + fc + de-standardization)
# ---------------------------------------------------------------------------
def vrf_reference(x, lengths, params):
    B, T, I = x.shape
    H = params["whh"].shape[0]

    def cell(carry, x_t_and_t):
        h, c = carry
        x_t, t = x_t_and_t
        gates = x_t @ params["wih"] + h @ params["whh"] + params["b"]
        i_g = jax.nn.sigmoid(gates[:, 0:H])
        f_g = jax.nn.sigmoid(gates[:, H:2 * H])
        g_g = jnp.tanh(gates[:, 2 * H:3 * H])
        o_g = jax.nn.sigmoid(gates[:, 3 * H:4 * H])
        c_new = f_g * c + i_g * g_g
        h_new = o_g * jnp.tanh(c_new)
        valid = (t < lengths)[:, None]
        h = jnp.where(valid, h_new, h)
        c = jnp.where(valid, c_new, c)
        return (h, c), None

    h0 = jnp.zeros((B, H), jnp.float32)
    c0 = jnp.zeros((B, H), jnp.float32)
    xs = (jnp.transpose(x, (1, 0, 2)), jnp.arange(T))
    (h_last, _), _ = lax.scan(cell, (h0, c0), xs)
    z1 = jnp.maximum(h_last @ params["w1"] + params["b1"], 0.0)
    z2 = z1 @ params["w2"] + params["b2"]
    return z2 * params["sigma"] + params["mu"]


def init_params(key, input_size, hidden_size, fc_hidden, output_size):
    ks = jax.random.split(key, 10)
    bound = 1.0 / jnp.sqrt(hidden_size)
    u = lambda k, shape: jax.random.uniform(k, shape, jnp.float32, -bound, bound)
    return {
        # LSTM weights, gate order (i, f, g, o); b = b_ih + b_hh folded together
        "wih": u(ks[0], (input_size, 4 * hidden_size)),
        "whh": u(ks[1], (hidden_size, 4 * hidden_size)),
        "b":   u(ks[2], (1, 4 * hidden_size)),
        # fc head
        "w1":  u(ks[3], (hidden_size, fc_hidden)),
        "b1":  u(ks[4], (1, fc_hidden)),
        "w2":  u(ks[5], (fc_hidden, output_size)),
        "b2":  u(ks[6], (1, output_size)),
        # standardization (mu/sigma already tiled to output_size)
        "sigma": jax.random.uniform(ks[7], (1, output_size), jnp.float32, 0.5, 2.0),
        "mu":    jax.random.uniform(ks[8], (1, output_size), jnp.float32, -1.0, 1.0),
    }


if __name__ == "__main__":
    # Small shapes consistent with the module (input_size=4, output_size=2);
    # B and T chosen so both grid axes (batch tiles, time tiles) are exercised.
    B, T, I = 10, 24, 4
    H, F1, O = 32, 32, 2

    key = jax.random.PRNGKey(0)
    k_x, k_len, k_p = jax.random.split(key, 3)

    x = jax.random.normal(k_x, (B, T, I), jnp.float32)       # padded batch-first input
    lengths = jax.random.randint(k_len, (B,), 2, T + 1)      # valid lengths in [2, T]
    params = init_params(k_p, I, H, F1, O)

    ref = jax.block_until_ready(vrf_reference(x, lengths, params))

    # f32-operand path with small explicit tiles: tight semantic check of the
    # gate reorder / padding / masking / multi-tile state carry.
    out_f32 = jax.block_until_ready(
        vrf_forward(x, lengths, params, tt=8, tb=8, matmul_dtype=jnp.float32))
    assert out_f32.shape == (B, O)
    assert jnp.allclose(out_f32, ref, atol=1e-3, rtol=1e-3), (out_f32, ref)

    # Default (performance) path: bf16 matmul operands, tt=16, tb auto-clamped
    # to the padded batch; looser numeric tolerance.
    out_bf16 = jax.block_until_ready(vrf_forward(x, lengths, params))
    assert out_bf16.shape == (B, O)
    assert jnp.allclose(out_bf16, ref, atol=5e-2, rtol=5e-2), (out_bf16, ref)

    # TODO(synk): pack_padded_sequence's sort/unsort bookkeeping has no Pallas
    # equivalent; it is a no-op on the final output order and is replaced by
    # per-timestep length masking inside the kernel.
    print("KERNEL_OK")
</pallas_src>

<mosaic_0001>
module attributes {stable_mosaic.version = 11 : i64} {
  func.func @vrf_kernel(%arg0: i32, %arg1: i32, %arg2: memref<1x64x4xf32, #tpu.memory_space<vmem>>, %arg3: memref<1x64x1xf32, #tpu.memory_space<vmem>>, %arg4: memref<4x512xf32, #tpu.memory_space<vmem>>, %arg5: memref<128x512xf32, #tpu.memory_space<vmem>>, %arg6: memref<1x512xf32, #tpu.memory_space<vmem>>, %arg7: memref<128x128xf32, #tpu.memory_space<vmem>>, %arg8: memref<1x128xf32, #tpu.memory_space<vmem>>, %arg9: memref<128x128xf32, #tpu.memory_space<vmem>>, %arg10: memref<1x128xf32, #tpu.memory_space<vmem>>, %arg11: memref<1x128xf32, #tpu.memory_space<vmem>>, %arg12: memref<1x128xf32, #tpu.memory_space<vmem>>, %arg13: memref<8x128xf32, #tpu.memory_space<vmem>>, %arg14: memref<8x128xf32, #tpu.memory_space<vmem>>, %arg15: memref<8x128xf32, #tpu.memory_space<vmem>>, %arg16: memref<64x512xf32, #tpu.memory_space<vmem>>) attributes {dimension_semantics = [#tpu.dimension_semantics<parallel>, #tpu.dimension_semantics<arbitrary>], iteration_bounds = array<i64: 2, 3>, scalar_prefetch = 0 : i64, scratch_operands = 3 : i64, tpu.core_type = #tpu.core_type<tc>, window_params = [{transform_indices = @transform_0, window_bounds = array<i64: 1, 64, 4>}, {transform_indices = @transform_1, window_bounds = array<i64: 1, 64, 1>}, {pipeline_mode = #tpu.pipeline_mode<synchronous>, transform_indices = @transform_2, window_bounds = array<i64: 4, 512>}, {pipeline_mode = #tpu.pipeline_mode<synchronous>, transform_indices = @transform_3, window_bounds = array<i64: 128, 512>}, {pipeline_mode = #tpu.pipeline_mode<synchronous>, transform_indices = @transform_4, window_bounds = array<i64: 1, 512>}, {pipeline_mode = #tpu.pipeline_mode<synchronous>, transform_indices = @transform_5, window_bounds = array<i64: 128, 128>}, {pipeline_mode = #tpu.pipeline_mode<synchronous>, transform_indices = @transform_6, window_bounds = array<i64: 1, 128>}, {pipeline_mode = #tpu.pipeline_mode<synchronous>, transform_indices = @transform_7, window_bounds = array<i64: 128, 128>}, {pipeline_mode = #tpu.pipeline_mode<synchronous>, transform_indices = @transform_8, window_bounds = array<i64: 1, 128>}, {pipeline_mode = #tpu.pipeline_mode<synchronous>, transform_indices = @transform_9, window_bounds = array<i64: 1, 128>}, {pipeline_mode = #tpu.pipeline_mode<synchronous>, transform_indices = @transform_10, window_bounds = array<i64: 1, 128>}, {transform_indices = @transform_11, window_bounds = array<i64: 8, 128>}]} {
    %c0_i32 = arith.constant 0 : i32
    %0 = arith.cmpi eq, %arg1, %c0_i32 : i32
    %1 = arith.extui %0 : i1 to i32
    %c0_i32_0 = arith.constant 0 : i32
    %2 = arith.cmpi ne, %1, %c0_i32_0 : i32
    scf.if %2 {
      %cst_172 = arith.constant 0.000000e+00 : f32
      %382 = vector.broadcast %cst_172 : f32 to vector<8x128xf32>
      %c0_173 = arith.constant 0 : index
      %c0_174 = arith.constant 0 : index
      %383 = vector.load %arg14[%c0_173, %c0_174] : memref<8x128xf32, #tpu.memory_space<vmem>>, vector<8x128xf32>
      tpu.vector_store %arg14[%c0_173, %c0_174], %382 {strides = array<i32>} : memref<8x128xf32, #tpu.memory_space<vmem>>, vector<8x128xf32>,
      %cst_175 = arith.constant 0.000000e+00 : f32
      %384 = vector.broadcast %cst_175 : f32 to vector<8x128xf32>
      %c0_176 = arith.constant 0 : index
      %c0_177 = arith.constant 0 : index
      %385 = vector.load %arg15[%c0_176, %c0_177] : memref<8x128xf32, #tpu.memory_space<vmem>>, vector<8x128xf32>
      tpu.vector_store %arg15[%c0_176, %c0_177], %384 {strides = array<i32>} : memref<8x128xf32, #tpu.memory_space<vmem>>, vector<8x128xf32>,
    } else {
    }
    %c0 = arith.constant 0 : index
    %c0_1 = arith.constant 0 : index
    %c0_2 = arith.constant 0 : index
    %3 = vector.load %arg2[%c0, %c0_1, %c0_2] : memref<1x64x4xf32, #tpu.memory_space<vmem>>, vector<1x64x4xf32>
    %4 = vector.shape_cast %3 : vector<1x64x4xf32> to vector<64x4xf32>
    %c0_3 = arith.constant 0 : index
    %c0_4 = arith.constant 0 : index
    %5 = vector.load %arg4[%c0_3, %c0_4] : memref<4x512xf32, #tpu.memory_space<vmem>>, vector<4x512xf32>
    %cst = arith.constant dense<0.000000e+00> : vector<64x512xf32>
    %6 = tpu.matmul %4, %5, %cst {dimension_numbers = #tpu.dot_dimension_numbers<[1], [0], [0], [1], [0, 0, 1, 1], [], []>} : vector<64x4xf32>, vector<4x512xf32>, vector<64x512xf32> -> vector<64x512xf32>
    %c0_5 = arith.constant 0 : index
    %c0_6 = arith.constant 0 : index
    %7 = vector.load %arg6[%c0_5, %c0_6] : memref<1x512xf32, #tpu.memory_space<vmem>>, vector<1x512xf32>
    %8 = vector.broadcast %7 : vector<1x512xf32> to vector<64x512xf32>
    %9 = arith.addf %6, %8 : vector<64x512xf32>
    %c0_7 = arith.constant 0 : index
    %c0_8 = arith.constant 0 : index
    %10 = vector.load %arg16[%c0_7, %c0_8] : memref<64x512xf32, #tpu.memory_space<vmem>>, vector<64x512xf32>
    tpu.vector_store %arg16[%c0_7, %c0_8], %9 {strides = array<i32>} : memref<64x512xf32, #tpu.memory_space<vmem>>, vector<64x512xf32>,
    %c0_i32_9 = arith.constant 0 : i32
    %c8_i32 = arith.constant 8 : i32
    %11 = arith.muli %c0_i32_9, %c8_i32 : i32
    %12 = tpu.assume_multiple %11, 8 : i32
    %c0_10 = arith.constant 0 : index
    %c0_11 = arith.constant 0 : index
    %13 = vector.load %arg14[%c0_10, %c0_11] : memref<8x128xf32, #tpu.memory_space<vmem>>, vector<8x128xf32>
    %c0_12 = arith.constant 0 : index
    %c0_13 = arith.constant 0 : index
    %14 = vector.load %arg15[%c0_12, %c0_13] : memref<8x128xf32, #tpu.memory_space<vmem>>, vector<8x128xf32>
    %15 = arith.index_cast %12 : i32 to index
    %c0_14 = arith.constant 0 : index
    %16 = vector.load %arg16[%15, %c0_14] : memref<64x512xf32, #tpu.memory_space<vmem>>, vector<8x512xf32>
    %c0_15 = arith.constant 0 : index
    %c0_16 = arith.constant 0 : index
    %17 = vector.load %arg5[%c0_15, %c0_16] : memref<128x512xf32, #tpu.memory_space<vmem>>, vector<128x512xf32>
    %cst_17 = arith.constant dense<0.000000e+00> : vector<8x512xf32>
    %18 = tpu.matmul %13, %17, %cst_17 {dimension_numbers = #tpu.dot_dimension_numbers<[1], [0], [0], [1], [0, 0, 1, 1], [], []>} : vector<8x128xf32>, vector<128x512xf32>, vector<8x512xf32> -> vector<8x512xf32>
    %19 = arith.addf %16, %18 : vector<8x512xf32>
    %20 = vector.extract_strided_slice %19 {offsets = [0, 0], sizes = [8, 384], strides = [1, 1]} : vector<8x512xf32> to vector<8x384xf32>
    %cst_18 = arith.constant 5.000000e-01 : f32
    %21 = vector.broadcast %cst_18 : f32 to vector<8x384xf32>
    %22 = arith.mulf %21, %20 : vector<8x384xf32>
    %23 = math.tanh %22 : vector<8x384xf32>
    %cst_19 = arith.constant 5.000000e-01 : f32
    %24 = vector.broadcast %cst_19 : f32 to vector<8x384xf32>
    %25 = arith.mulf %24, %23 : vector<8x384xf32>
    %cst_20 = arith.constant 5.000000e-01 : f32
    %26 = vector.broadcast %cst_20 : f32 to vector<8x384xf32>
    %27 = arith.addf %25, %26 : vector<8x384xf32>
    %28 = vector.extract_strided_slice %27 {offsets = [0, 0], sizes = [8, 128], strides = [1, 1]} : vector<8x384xf32> to vector<8x128xf32>
    %29 = vector.extract_strided_slice %27 {offsets = [0, 128], sizes = [8, 128], strides = [1, 1]} : vector<8x384xf32> to vector<8x128xf32>
    %30 = vector.extract_strided_slice %27 {offsets = [0, 256], sizes = [8, 128], strides = [1, 1]} : vector<8x384xf32> to vector<8x128xf32>
    %31 = vector.extract_strided_slice %19 {offsets = [0, 384], sizes = [8, 128], strides = [1, 1]} : vector<8x512xf32> to vector<8x128xf32>
    %32 = math.tanh %31 : vector<8x128xf32>
    %33 = arith.mulf %29, %14 : vector<8x128xf32>
    %34 = arith.mulf %28, %32 : vector<8x128xf32>
    %35 = arith.addf %33, %34 : vector<8x128xf32>
    %36 = math.tanh %35 : vector<8x128xf32>
    %37 = arith.mulf %30, %36 : vector<8x128xf32>
    %c0_21 = arith.constant 0 : index
    %38 = arith.index_cast %12 : i32 to index
    %c0_22 = arith.constant 0 : index
    %39 = vector.load %arg3[%c0_21, %38, %c0_22] : memref<1x64x1xf32, #tpu.memory_space<vmem>>, vector<1x8x1xf32>
    %40 = vector.shape_cast %39 : vector<1x8x1xf32> to vector<8x1xf32>
    %41 = vector.broadcast %40 : vector<8x1xf32> to vector<8x128xf32>
    %42 = arith.mulf %41, %37 : vector<8x128xf32>
    %cst_23 = arith.constant 1.000000e+00 : f32
    %43 = vector.broadcast %cst_23 : f32 to vector<8x1xf32>
    %44 = arith.subf %43, %40 : vector<8x1xf32>
    %45 = vector.broadcast %44 : vector<8x1xf32> to vector<8x128xf32>
    %46 = arith.mulf %45, %13 : vector<8x128xf32>
    %47 = arith.addf %42, %46 : vector<8x128xf32>
    %c0_24 = arith.constant 0 : index
    %c0_25 = arith.constant 0 : index
    %48 = vector.load %arg14[%c0_24, %c0_25] : memref<8x128xf32, #tpu.memory_space<vmem>>, vector<8x128xf32>
    tpu.vector_store %arg14[%c0_24, %c0_25], %47 {strides = array<i32>} : memref<8x128xf32, #tpu.memory_space<vmem>>, vector<8x128xf32>,
    %49 = vector.broadcast %40 : vector<8x1xf32> to vector<8x128xf32>
    %50 = arith.mulf %49, %35 : vector<8x128xf32>
    %cst_26 = arith.constant 1.000000e+00 : f32
    %51 = vector.broadcast %cst_26 : f32 to vector<8x1xf32>
    %52 = arith.subf %51, %40 : vector<8x1xf32>
    %53 = vector.broadcast %52 : vector<8x1xf32> to vector<8x128xf32>
    %54 = arith.mulf %53, %14 : vector<8x128xf32>
    %55 = arith.addf %50, %54 : vector<8x128xf32>
    %c0_27 = arith.constant 0 : index
    %c0_28 = arith.constant 0 : index
    %56 = vector.load %arg15[%c0_27, %c0_28] : memref<8x128xf32, #tpu.memory_space<vmem>>, vector<8x128xf32>
    tpu.vector_store %arg15[%c0_27, %c0_28], %55 {strides = array<i32>} : memref<8x128xf32, #tpu.memory_space<vmem>>, vector<8x128xf32>,
    %c1_i32 = arith.constant 1 : i32
    %c8_i32_29 = arith.constant 8 : i32
    %57 = arith.muli %c1_i32, %c8_i32_29 : i32
    %58 = tpu.assume_multiple %57, 8 : i32
    %c0_30 = arith.constant 0 : index
    %c0_31 = arith.constant 0 : index
    %59 = vector.load %arg14[%c0_30, %c0_31] : memref<8x128xf32, #tpu.memory_space<vmem>>, vector<8x128xf32>
    %c0_32 = arith.constant 0 : index
    %c0_33 = arith.constant 0 : index
    %60 = vector.load %arg15[%c0_32, %c0_33] : memref<8x128xf32, #tpu.memory_space<vmem>>, vector<8x128xf32>
    %61 = arith.index_cast %58 : i32 to index
    %c0_34 = arith.constant 0 : index
    %62 = vector.load %arg16[%61, %c0_34] : memref<64x512xf32, #tpu.memory_space<vmem>>, vector<8x512xf32>
    %c0_35 = arith.constant 0 : index
    %c0_36 = arith.constant 0 : index
    %63 = vector.load %arg5[%c0_35, %c0_36] : memref<128x512xf32, #tpu.memory_space<vmem>>, vector<128x512xf32>
    %cst_37 = arith.constant dense<0.000000e+00> : vector<8x512xf32>
    %64 = tpu.matmul %59, %63, %cst_37 {dimension_numbers = #tpu.dot_dimension_numbers<[1], [0], [0], [1], [0, 0, 1, 1], [], []>} : vector<8x128xf32>, vector<128x512xf32>, vector<8x512xf32> -> vector<8x512xf32>
    %65 = arith.addf %62, %64 : vector<8x512xf32>
    %66 = vector.extract_strided_slice %65 {offsets = [0, 0], sizes = [8, 384], strides = [1, 1]} : vector<8x512xf32> to vector<8x384xf32>
    %cst_38 = arith.constant 5.000000e-01 : f32
    %67 = vector.broadcast %cst_38 : f32 to vector<8x384xf32>
    %68 = arith.mulf %67, %66 : vector<8x384xf32>
    %69 = math.tanh %68 : vector<8x384xf32>
    %cst_39 = arith.constant 5.000000e-01 : f32
    %70 = vector.broadcast %cst_39 : f32 to vector<8x384xf32>
    %71 = arith.mulf %70, %69 : vector<8x384xf32>
    %cst_40 = arith.constant 5.000000e-01 : f32
    %72 = vector.broadcast %cst_40 : f32 to vector<8x384xf32>
    %73 = arith.addf %71, %72 : vector<8x384xf32>
    %74 = vector.extract_strided_slice %73 {offsets = [0, 0], sizes = [8, 128], strides = [1, 1]} : vector<8x384xf32> to vector<8x128xf32>
    %75 = vector.extract_strided_slice %73 {offsets = [0, 128], sizes = [8, 128], strides = [1, 1]} : vector<8x384xf32> to vector<8x128xf32>
    %76 = vector.extract_strided_slice %73 {offsets = [0, 256], sizes = [8, 128], strides = [1, 1]} : vector<8x384xf32> to vector<8x128xf32>
    %77 = vector.extract_strided_slice %65 {offsets = [0, 384], sizes = [8, 128], strides = [1, 1]} : vector<8x512xf32> to vector<8x128xf32>
    %78 = math.tanh %77 : vector<8x128xf32>
    %79 = arith.mulf %75, %60 : vector<8x128xf32>
    %80 = arith.mulf %74, %78 : vector<8x128xf32>
    %81 = arith.addf %79, %80 : vector<8x128xf32>
    %82 = math.tanh %81 : vector<8x128xf32>
    %83 = arith.mulf %76, %82 : vector<8x128xf32>
    %c0_41 = arith.constant 0 : index
    %84 = arith.index_cast %58 : i32 to index
    %c0_42 = arith.constant 0 : index
    %85 = vector.load %arg3[%c0_41, %84, %c0_42] : memref<1x64x1xf32, #tpu.memory_space<vmem>>, vector<1x8x1xf32>
    %86 = vector.shape_cast %85 : vector<1x8x1xf32> to vector<8x1xf32>
    %87 = vector.broadcast %86 : vector<8x1xf32> to vector<8x128xf32>
    %88 = arith.mulf %87, %83 : vector<8x128xf32>
    %cst_43 = arith.constant 1.000000e+00 : f32
    %89 = vector.broadcast %cst_43 : f32 to vector<8x1xf32>
    %90 = arith.subf %89, %86 : vector<8x1xf32>
    %91 = vector.broadcast %90 : vector<8x1xf32> to vector<8x128xf32>
    %92 = arith.mulf %91, %59 : vector<8x128xf32>
    %93 = arith.addf %88, %92 : vector<8x128xf32>
    %c0_44 = arith.constant 0 : index
    %c0_45 = arith.constant 0 : index
    %94 = vector.load %arg14[%c0_44, %c0_45] : memref<8x128xf32, #tpu.memory_space<vmem>>, vector<8x128xf32>
    tpu.vector_store %arg14[%c0_44, %c0_45], %93 {strides = array<i32>} : memref<8x128xf32, #tpu.memory_space<vmem>>, vector<8x128xf32>,
    %95 = vector.broadcast %86 : vector<8x1xf32> to vector<8x128xf32>
    %96 = arith.mulf %95, %81 : vector<8x128xf32>
    %cst_46 = arith.constant 1.000000e+00 : f32
    %97 = vector.broadcast %cst_46 : f32 to vector<8x1xf32>
    %98 = arith.subf %97, %86 : vector<8x1xf32>
    %99 = vector.broadcast %98 : vector<8x1xf32> to vector<8x128xf32>
    %100 = arith.mulf %99, %60 : vector<8x128xf32>
    %101 = arith.addf %96, %100 : vector<8x128xf32>
    %c0_47 = arith.constant 0 : index
    %c0_48 = arith.constant 0 : index
    %102 = vector.load %arg15[%c0_47, %c0_48] : memref<8x128xf32, #tpu.memory_space<vmem>>, vector<8x128xf32>
    tpu.vector_store %arg15[%c0_47, %c0_48], %101 {strides = array<i32>} : memref<8x128xf32, #tpu.memory_space<vmem>>, vector<8x128xf32>,
    %c2_i32 = arith.constant 2 : i32
    %c8_i32_49 = arith.constant 8 : i32
    %103 = arith.muli %c2_i32, %c8_i32_49 : i32
    %104 = tpu.assume_multiple %103, 8 : i32
    %c0_50 = arith.constant 0 : index
    %c0_51 = arith.constant 0 : index
    %105 = vector.load %arg14[%c0_50, %c0_51] : memref<8x128xf32, #tpu.memory_space<vmem>>, vector<8x128xf32>
    %c0_52 = arith.constant 0 : index
    %c0_53 = arith.constant 0 : index
    %106 = vector.load %arg15[%c0_52, %c0_53] : memref<8x128xf32, #tpu.memory_space<vmem>>, vector<8x128xf32>
    %107 = arith.index_cast %104 : i32 to index
    %c0_54 = arith.constant 0 : index
    %108 = vector.load %arg16[%107, %c0_54] : memref<64x512xf32, #tpu.memory_space<vmem>>, vector<8x512xf32>
    %c0_55 = arith.constant 0 : index
    %c0_56 = arith.constant 0 : index
    %109 = vector.load %arg5[%c0_55, %c0_56] : memref<128x512xf32, #tpu.memory_space<vmem>>, vector<128x512xf32>
    %cst_57 = arith.constant dense<0.000000e+00> : vector<8x512xf32>
    %110 = tpu.matmul %105, %109, %cst_57 {dimension_numbers = #tpu.dot_dimension_numbers<[1], [0], [0], [1], [0, 0, 1, 1], [], []>} : vector<8x128xf32>, vector<128x512xf32>, vector<8x512xf32> -> vector<8x512xf32>
    %111 = arith.addf %108, %110 : vector<8x512xf32>
    %112 = vector.extract_strided_slice %111 {offsets = [0, 0], sizes = [8, 384], strides = [1, 1]} : vector<8x512xf32> to vector<8x384xf32>
    %cst_58 = arith.constant 5.000000e-01 : f32
    %113 = vector.broadcast %cst_58 : f32 to vector<8x384xf32>
    %114 = arith.mulf %113, %112 : vector<8x384xf32>
    %115 = math.tanh %114 : vector<8x384xf32>
    %cst_59 = arith.constant 5.000000e-01 : f32
    %116 = vector.broadcast %cst_59 : f32 to vector<8x384xf32>
    %117 = arith.mulf %116, %115 : vector<8x384xf32>
    %cst_60 = arith.constant 5.000000e-01 : f32
    %118 = vector.broadcast %cst_60 : f32 to vector<8x384xf32>
    %119 = arith.addf %117, %118 : vector<8x384xf32>
    %120 = vector.extract_strided_slice %119 {offsets = [0, 0], sizes = [8, 128], strides = [1, 1]} : vector<8x384xf32> to vector<8x128xf32>
    %121 = vector.extract_strided_slice %119 {offsets = [0, 128], sizes = [8, 128], strides = [1, 1]} : vector<8x384xf32> to vector<8x128xf32>
    %122 = vector.extract_strided_slice %119 {offsets = [0, 256], sizes = [8, 128], strides = [1, 1]} : vector<8x384xf32> to vector<8x128xf32>
    %123 = vector.extract_strided_slice %111 {offsets = [0, 384], sizes = [8, 128], strides = [1, 1]} : vector<8x512xf32> to vector<8x128xf32>
    %124 = math.tanh %123 : vector<8x128xf32>
    %125 = arith.mulf %121, %106 : vector<8x128xf32>
    %126 = arith.mulf %120, %124 : vector<8x128xf32>
    %127 = arith.addf %125, %126 : vector<8x128xf32>
    %128 = math.tanh %127 : vector<8x128xf32>
    %129 = arith.mulf %122, %128 : vector<8x128xf32>
    %c0_61 = arith.constant 0 : index
    %130 = arith.index_cast %104 : i32 to index
    %c0_62 = arith.constant 0 : index
    %131 = vector.load %arg3[%c0_61, %130, %c0_62] : memref<1x64x1xf32, #tpu.memory_space<vmem>>, vector<1x8x1xf32>
    %132 = vector.shape_cast %131 : vector<1x8x1xf32> to vector<8x1xf32>
    %133 = vector.broadcast %132 : vector<8x1xf32> to vector<8x128xf32>
    %134 = arith.mulf %133, %129 : vector<8x128xf32>
    %cst_63 = arith.constant 1.000000e+00 : f32
    %135 = vector.broadcast %cst_63 : f32 to vector<8x1xf32>
    %136 = arith.subf %135, %132 : vector<8x1xf32>
    %137 = vector.broadcast %136 : vector<8x1xf32> to vector<8x128xf32>
    %138 = arith.mulf %137, %105 : vector<8x128xf32>
    %139 = arith.addf %134, %138 : vector<8x128xf32>
    %c0_64 = arith.constant 0 : index
    %c0_65 = arith.constant 0 : index
    %140 = vector.load %arg14[%c0_64, %c0_65] : memref<8x128xf32, #tpu.memory_space<vmem>>, vector<8x128xf32>
    tpu.vector_store %arg14[%c0_64, %c0_65], %139 {strides = array<i32>} : memref<8x128xf32, #tpu.memory_space<vmem>>, vector<8x128xf32>,
    %141 = vector.broadcast %132 : vector<8x1xf32> to vector<8x128xf32>
    %142 = arith.mulf %141, %127 : vector<8x128xf32>
    %cst_66 = arith.constant 1.000000e+00 : f32
    %143 = vector.broadcast %cst_66 : f32 to vector<8x1xf32>
    %144 = arith.subf %143, %132 : vector<8x1xf32>
    %145 = vector.broadcast %144 : vector<8x1xf32> to vector<8x128xf32>
    %146 = arith.mulf %145, %106 : vector<8x128xf32>
    %147 = arith.addf %142, %146 : vector<8x128xf32>
    %c0_67 = arith.constant 0 : index
    %c0_68 = arith.constant 0 : index
    %148 = vector.load %arg15[%c0_67, %c0_68] : memref<8x128xf32, #tpu.memory_space<vmem>>, vector<8x128xf32>
    tpu.vector_store %arg15[%c0_67, %c0_68], %147 {strides = array<i32>} : memref<8x128xf32, #tpu.memory_space<vmem>>, vector<8x128xf32>,
    %c3_i32 = arith.constant 3 : i32
    %c8_i32_69 = arith.constant 8 : i32
    %149 = arith.muli %c3_i32, %c8_i32_69 : i32
    %150 = tpu.assume_multiple %149, 8 : i32
    %c0_70 = arith.constant 0 : index
    %c0_71 = arith.constant 0 : index
    %151 = vector.load %arg14[%c0_70, %c0_71] : memref<8x128xf32, #tpu.memory_space<vmem>>, vector<8x128xf32>
    %c0_72 = arith.constant 0 : index
    %c0_73 = arith.constant 0 : index
    %152 = vector.load %arg15[%c0_72, %c0_73] : memref<8x128xf32, #tpu.memory_space<vmem>>, vector<8x128xf32>
    %153 = arith.index_cast %150 : i32 to index
    %c0_74 = arith.constant 0 : index
    %154 = vector.load %arg16[%153, %c0_74] : memref<64x512xf32, #tpu.memory_space<vmem>>, vector<8x512xf32>
    %c0_75 = arith.constant 0 : index
    %c0_76 = arith.constant 0 : index
    %155 = vector.load %arg5[%c0_75, %c0_76] : memref<128x512xf32, #tpu.memory_space<vmem>>, vector<128x512xf32>
    %cst_77 = arith.constant dense<0.000000e+00> : vector<8x512xf32>
    %156 = tpu.matmul %151, %155, %cst_77 {dimension_numbers = #tpu.dot_dimension_numbers<[1], [0], [0], [1], [0, 0, 1, 1], [], []>} : vector<8x128xf32>, vector<128x512xf32>, vector<8x512xf32> -> vector<8x512xf32>
    %157 = arith.addf %154, %156 : vector<8x512xf32>
    %158 = vector.extract_strided_slice %157 {offsets = [0, 0], sizes = [8, 384], strides = [1, 1]} : vector<8x512xf32> to vector<8x384xf32>
    %cst_78 = arith.constant 5.000000e-01 : f32
    %159 = vector.broadcast %cst_78 : f32 to vector<8x384xf32>
    %160 = arith.mulf %159, %158 : vector<8x384xf32>
    %161 = math.tanh %160 : vector<8x384xf32>
    %cst_79 = arith.constant 5.000000e-01 : f32
    %162 = vector.broadcast %cst_79 : f32 to vector<8x384xf32>
    %163 = arith.mulf %162, %161 : vector<8x384xf32>
    %cst_80 = arith.constant 5.000000e-01 : f32
    %164 = vector.broadcast %cst_80 : f32 to vector<8x384xf32>
    %165 = arith.addf %163, %164 : vector<8x384xf32>
    %166 = vector.extract_strided_slice %165 {offsets = [0, 0], sizes = [8, 128], strides = [1, 1]} : vector<8x384xf32> to vector<8x128xf32>
    %167 = vector.extract_strided_slice %165 {offsets = [0, 128], sizes = [8, 128], strides = [1, 1]} : vector<8x384xf32> to vector<8x128xf32>
    %168 = vector.extract_strided_slice %165 {offsets = [0, 256], sizes = [8, 128], strides = [1, 1]} : vector<8x384xf32> to vector<8x128xf32>
    %169 = vector.extract_strided_slice %157 {offsets = [0, 384], sizes = [8, 128], strides = [1, 1]} : vector<8x512xf32> to vector<8x128xf32>
    %170 = math.tanh %169 : vector<8x128xf32>
    %171 = arith.mulf %167, %152 : vector<8x128xf32>
    %172 = arith.mulf %166, %170 : vector<8x128xf32>
    %173 = arith.addf %171, %172 : vector<8x128xf32>
    %174 = math.tanh %173 : vector<8x128xf32>
    %175 = arith.mulf %168, %174 : vector<8x128xf32>
    %c0_81 = arith.constant 0 : index
    %176 = arith.index_cast %150 : i32 to index
    %c0_82 = arith.constant 0 : index
    %177 = vector.load %arg3[%c0_81, %176, %c0_82] : memref<1x64x1xf32, #tpu.memory_space<vmem>>, vector<1x8x1xf32>
    %178 = vector.shape_cast %177 : vector<1x8x1xf32> to vector<8x1xf32>
    %179 = vector.broadcast %178 : vector<8x1xf32> to vector<8x128xf32>
    %180 = arith.mulf %179, %175 : vector<8x128xf32>
    %cst_83 = arith.constant 1.000000e+00 : f32
    %181 = vector.broadcast %cst_83 : f32 to vector<8x1xf32>
    %182 = arith.subf %181, %178 : vector<8x1xf32>
    %183 = vector.broadcast %182 : vector<8x1xf32> to vector<8x128xf32>
    %184 = arith.mulf %183, %151 : vector<8x128xf32>
    %185 = arith.addf %180, %184 : vector<8x128xf32>
    %c0_84 = arith.constant 0 : index
    %c0_85 = arith.constant 0 : index
    %186 = vector.load %arg14[%c0_84, %c0_85] : memref<8x128xf32, #tpu.memory_space<vmem>>, vector<8x128xf32>
    tpu.vector_store %arg14[%c0_84, %c0_85], %185 {strides = array<i32>} : memref<8x128xf32, #tpu.memory_space<vmem>>, vector<8x128xf32>,
    %187 = vector.broadcast %178 : vector<8x1xf32> to vector<8x128xf32>
    %188 = arith.mulf %187, %173 : vector<8x128xf32>
    %cst_86 = arith.constant 1.000000e+00 : f32
    %189 = vector.broadcast %cst_86 : f32 to vector<8x1xf32>
    %190 = arith.subf %189, %178 : vector<8x1xf32>
    %191 = vector.broadcast %190 : vector<8x1xf32> to vector<8x128xf32>
    %192 = arith.mulf %191, %152 : vector<8x128xf32>
    %193 = arith.addf %188, %192 : vector<8x128xf32>
    %c0_87 = arith.constant 0 : index
    %c0_88 = arith.constant 0 : index
    %194 = vector.load %arg15[%c0_87, %c0_88] : memref<8x128xf32, #tpu.memory_space<vmem>>, vector<8x128xf32>
    tpu.vector_store %arg15[%c0_87, %c0_88], %193 {strides = array<i32>} : memref<8x128xf32, #tpu.memory_space<vmem>>, vector<8x128xf32>,
    %c4_i32 = arith.constant 4 : i32
    %c8_i32_89 = arith.constant 8 : i32
    %195 = arith.muli %c4_i32, %c8_i32_89 : i32
    %196 = tpu.assume_multiple %195, 8 : i32
    %c0_90 = arith.constant 0 : index
    %c0_91 = arith.constant 0 : index
    %197 = vector.load %arg14[%c0_90, %c0_91] : memref<8x128xf32, #tpu.memory_space<vmem>>, vector<8x128xf32>
    %c0_92 = arith.constant 0 : index
    %c0_93 = arith.constant 0 : index
    %198 = vector.load %arg15[%c0_92, %c0_93] : memref<8x128xf32, #tpu.memory_space<vmem>>, vector<8x128xf32>
    %199 = arith.index_cast %196 : i32 to index
    %c0_94 = arith.constant 0 : index
    %200 = vector.load %arg16[%199, %c0_94] : memref<64x512xf32, #tpu.memory_space<vmem>>, vector<8x512xf32>
    %c0_95 = arith.constant 0 : index
    %c0_96 = arith.constant 0 : index
    %201 = vector.load %arg5[%c0_95, %c0_96] : memref<128x512xf32, #tpu.memory_space<vmem>>, vector<128x512xf32>
    %cst_97 = arith.constant dense<0.000000e+00> : vector<8x512xf32>
    %202 = tpu.matmul %197, %201, %cst_97 {dimension_numbers = #tpu.dot_dimension_numbers<[1], [0], [0], [1], [0, 0, 1, 1], [], []>} : vector<8x128xf32>, vector<128x512xf32>, vector<8x512xf32> -> vector<8x512xf32>
    %203 = arith.addf %200, %202 : vector<8x512xf32>
    %204 = vector.extract_strided_slice %203 {offsets = [0, 0], sizes = [8, 384], strides = [1, 1]} : vector<8x512xf32> to vector<8x384xf32>
    %cst_98 = arith.constant 5.000000e-01 : f32
    %205 = vector.broadcast %cst_98 : f32 to vector<8x384xf32>
    %206 = arith.mulf %205, %204 : vector<8x384xf32>
    %207 = math.tanh %206 : vector<8x384xf32>
    %cst_99 = arith.constant 5.000000e-01 : f32
    %208 = vector.broadcast %cst_99 : f32 to vector<8x384xf32>
    %209 = arith.mulf %208, %207 : vector<8x384xf32>
    %cst_100 = arith.constant 5.000000e-01 : f32
    %210 = vector.broadcast %cst_100 : f32 to vector<8x384xf32>
    %211 = arith.addf %209, %210 : vector<8x384xf32>
    %212 = vector.extract_strided_slice %211 {offsets = [0, 0], sizes = [8, 128], strides = [1, 1]} : vector<8x384xf32> to vector<8x128xf32>
    %213 = vector.extract_strided_slice %211 {offsets = [0, 128], sizes = [8, 128], strides = [1, 1]} : vector<8x384xf32> to vector<8x128xf32>
    %214 = vector.extract_strided_slice %211 {offsets = [0, 256], sizes = [8, 128], strides = [1, 1]} : vector<8x384xf32> to vector<8x128xf32>
    %215 = vector.extract_strided_slice %203 {offsets = [0, 384], sizes = [8, 128], strides = [1, 1]} : vector<8x512xf32> to vector<8x128xf32>
    %216 = math.tanh %215 : vector<8x128xf32>
    %217 = arith.mulf %213, %198 : vector<8x128xf32>
    %218 = arith.mulf %212, %216 : vector<8x128xf32>
    %219 = arith.addf %217, %218 : vector<8x128xf32>
    %220 = math.tanh %219 : vector<8x128xf32>
    %221 = arith.mulf %214, %220 : vector<8x128xf32>
    %c0_101 = arith.constant 0 : index
    %222 = arith.index_cast %196 : i32 to index
    %c0_102 = arith.constant 0 : index
    %223 = vector.load %arg3[%c0_101, %222, %c0_102] : memref<1x64x1xf32, #tpu.memory_space<vmem>>, vector<1x8x1xf32>
    %224 = vector.shape_cast %223 : vector<1x8x1xf32> to vector<8x1xf32>
    %225 = vector.broadcast %224 : vector<8x1xf32> to vector<8x128xf32>
    %226 = arith.mulf %225, %221 : vector<8x128xf32>
    %cst_103 = arith.constant 1.000000e+00 : f32
    %227 = vector.broadcast %cst_103 : f32 to vector<8x1xf32>
    %228 = arith.subf %227, %224 : vector<8x1xf32>
    %229 = vector.broadcast %228 : vector<8x1xf32> to vector<8x128xf32>
    %230 = arith.mulf %229, %197 : vector<8x128xf32>
    %231 = arith.addf %226, %230 : vector<8x128xf32>
    %c0_104 = arith.constant 0 : index
    %c0_105 = arith.constant 0 : index
    %232 = vector.load %arg14[%c0_104, %c0_105] : memref<8x128xf32, #tpu.memory_space<vmem>>, vector<8x128xf32>
    tpu.vector_store %arg14[%c0_104, %c0_105], %231 {strides = array<i32>} : memref<8x128xf32, #tpu.memory_space<vmem>>, vector<8x128xf32>,
    %233 = vector.broadcast %224 : vector<8x1xf32> to vector<8x128xf32>
    %234 = arith.mulf %233, %219 : vector<8x128xf32>
    %cst_106 = arith.constant 1.000000e+00 : f32
    %235 = vector.broadcast %cst_106 : f32 to vector<8x1xf32>
    %236 = arith.subf %235, %224 : vector<8x1xf32>
    %237 = vector.broadcast %236 : vector<8x1xf32> to vector<8x128xf32>
    %238 = arith.mulf %237, %198 : vector<8x128xf32>
    %239 = arith.addf %234, %238 : vector<8x128xf32>
    %c0_107 = arith.constant 0 : index
    %c0_108 = arith.constant 0 : index
    %240 = vector.load %arg15[%c0_107, %c0_108] : memref<8x128xf32, #tpu.memory_space<vmem>>, vector<8x128xf32>
    tpu.vector_store %arg15[%c0_107, %c0_108], %239 {strides = array<i32>} : memref<8x128xf32, #tpu.memory_space<vmem>>, vector<8x128xf32>,
    %c5_i32 = arith.constant 5 : i32
    %c8_i32_109 = arith.constant 8 : i32
    %241 = arith.muli %c5_i32, %c8_i32_109 : i32
    %242 = tpu.assume_multiple %241, 8 : i32
    %c0_110 = arith.constant 0 : index
    %c0_111 = arith.constant 0 : index
    %243 = vector.load %arg14[%c0_110, %c0_111] : memref<8x128xf32, #tpu.memory_space<vmem>>, vector<8x128xf32>
    %c0_112 = arith.constant 0 : index
    %c0_113 = arith.constant 0 : index
    %244 = vector.load %arg15[%c0_112, %c0_113] : memref<8x128xf32, #tpu.memory_space<vmem>>, vector<8x128xf32>
    %245 = arith.index_cast %242 : i32 to index
    %c0_114 = arith.constant 0 : index
    %246 = vector.load %arg16[%245, %c0_114] : memref<64x512xf32, #tpu.memory_space<vmem>>, vector<8x512xf32>
    %c0_115 = arith.constant 0 : index
    %c0_116 = arith.constant 0 : index
    %247 = vector.load %arg5[%c0_115, %c0_116] : memref<128x512xf32, #tpu.memory_space<vmem>>, vector<128x512xf32>
    %cst_117 = arith.constant dense<0.000000e+00> : vector<8x512xf32>
    %248 = tpu.matmul %243, %247, %cst_117 {dimension_numbers = #tpu.dot_dimension_numbers<[1], [0], [0], [1], [0, 0, 1, 1], [], []>} : vector<8x128xf32>, vector<128x512xf32>, vector<8x512xf32> -> vector<8x512xf32>
    %249 = arith.addf %246, %248 : vector<8x512xf32>
    %250 = vector.extract_strided_slice %249 {offsets = [0, 0], sizes = [8, 384], strides = [1, 1]} : vector<8x512xf32> to vector<8x384xf32>
    %cst_118 = arith.constant 5.000000e-01 : f32
    %251 = vector.broadcast %cst_118 : f32 to vector<8x384xf32>
    %252 = arith.mulf %251, %250 : vector<8x384xf32>
    %253 = math.tanh %252 : vector<8x384xf32>
    %cst_119 = arith.constant 5.000000e-01 : f32
    %254 = vector.broadcast %cst_119 : f32 to vector<8x384xf32>
    %255 = arith.mulf %254, %253 : vector<8x384xf32>
    %cst_120 = arith.constant 5.000000e-01 : f32
    %256 = vector.broadcast %cst_120 : f32 to vector<8x384xf32>
    %257 = arith.addf %255, %256 : vector<8x384xf32>
    %258 = vector.extract_strided_slice %257 {offsets = [0, 0], sizes = [8, 128], strides = [1, 1]} : vector<8x384xf32> to vector<8x128xf32>
    %259 = vector.extract_strided_slice %257 {offsets = [0, 128], sizes = [8, 128], strides = [1, 1]} : vector<8x384xf32> to vector<8x128xf32>
    %260 = vector.extract_strided_slice %257 {offsets = [0, 256], sizes = [8, 128], strides = [1, 1]} : vector<8x384xf32> to vector<8x128xf32>
    %261 = vector.extract_strided_slice %249 {offsets = [0, 384], sizes = [8, 128], strides = [1, 1]} : vector<8x512xf32> to vector<8x128xf32>
    %262 = math.tanh %261 : vector<8x128xf32>
    %263 = arith.mulf %259, %244 : vector<8x128xf32>
    %264 = arith.mulf %258, %262 : vector<8x128xf32>
    %265 = arith.addf %263, %264 : vector<8x128xf32>
    %266 = math.tanh %265 : vector<8x128xf32>
    %267 = arith.mulf %260, %266 : vector<8x128xf32>
    %c0_121 = arith.constant 0 : index
    %268 = arith.index_cast %242 : i32 to index
    %c0_122 = arith.constant 0 : index
    %269 = vector.load %arg3[%c0_121, %268, %c0_122] : memref<1x64x1xf32, #tpu.memory_space<vmem>>, vector<1x8x1xf32>
    %270 = vector.shape_cast %269 : vector<1x8x1xf32> to vector<8x1xf32>
    %271 = vector.broadcast %270 : vector<8x1xf32> to vector<8x128xf32>
    %272 = arith.mulf %271, %267 : vector<8x128xf32>
    %cst_123 = arith.constant 1.000000e+00 : f32
    %273 = vector.broadcast %cst_123 : f32 to vector<8x1xf32>
    %274 = arith.subf %273, %270 : vector<8x1xf32>
    %275 = vector.broadcast %274 : vector<8x1xf32> to vector<8x128xf32>
    %276 = arith.mulf %275, %243 : vector<8x128xf32>
    %277 = arith.addf %272, %276 : vector<8x128xf32>
    %c0_124 = arith.constant 0 : index
    %c0_125 = arith.constant 0 : index
    %278 = vector.load %arg14[%c0_124, %c0_125] : memref<8x128xf32, #tpu.memory_space<vmem>>, vector<8x128xf32>
    tpu.vector_store %arg14[%c0_124, %c0_125], %277 {strides = array<i32>} : memref<8x128xf32, #tpu.memory_space<vmem>>, vector<8x128xf32>,
    %279 = vector.broadcast %270 : vector<8x1xf32> to vector<8x128xf32>
    %280 = arith.mulf %279, %265 : vector<8x128xf32>
    %cst_126 = arith.constant 1.000000e+00 : f32
    %281 = vector.broadcast %cst_126 : f32 to vector<8x1xf32>
    %282 = arith.subf %281, %270 : vector<8x1xf32>
    %283 = vector.broadcast %282 : vector<8x1xf32> to vector<8x128xf32>
    %284 = arith.mulf %283, %244 : vector<8x128xf32>
    %285 = arith.addf %280, %284 : vector<8x128xf32>
    %c0_127 = arith.constant 0 : index
    %c0_128 = arith.constant 0 : index
    %286 = vector.load %arg15[%c0_127, %c0_128] : memref<8x128xf32, #tpu.memory_space<vmem>>, vector<8x128xf32>
    tpu.vector_store %arg15[%c0_127, %c0_128], %285 {strides = array<i32>} : memref<8x128xf32, #tpu.memory_space<vmem>>, vector<8x128xf32>,
    %c6_i32 = arith.constant 6 : i32
    %c8_i32_129 = arith.constant 8 : i32
    %287 = arith.muli %c6_i32, %c8_i32_129 : i32
    %288 = tpu.assume_multiple %287, 8 : i32
    %c0_130 = arith.constant 0 : index
    %c0_131 = arith.constant 0 : index
    %289 = vector.load %arg14[%c0_130, %c0_131] : memref<8x128xf32, #tpu.memory_space<vmem>>, vector<8x128xf32>
    %c0_132 = arith.constant 0 : index
    %c0_133 = arith.constant 0 : index
    %290 = vector.load %arg15[%c0_132, %c0_133] : memref<8x128xf32, #tpu.memory_space<vmem>>, vector<8x128xf32>
    %291 = arith.index_cast %288 : i32 to index
    %c0_134 = arith.constant 0 : index
    %292 = vector.load %arg16[%291, %c0_134] : memref<64x512xf32, #tpu.memory_space<vmem>>, vector<8x512xf32>
    %c0_135 = arith.constant 0 : index
    %c0_136 = arith.constant 0 : index
    %293 = vector.load %arg5[%c0_135, %c0_136] : memref<128x512xf32, #tpu.memory_space<vmem>>, vector<128x512xf32>
    %cst_137 = arith.constant dense<0.000000e+00> : vector<8x512xf32>
    %294 = tpu.matmul %289, %293, %cst_137 {dimension_numbers = #tpu.dot_dimension_numbers<[1], [0], [0], [1], [0, 0, 1, 1], [], []>} : vector<8x128xf32>, vector<128x512xf32>, vector<8x512xf32> -> vector<8x512xf32>
    %295 = arith.addf %292, %294 : vector<8x512xf32>
    %296 = vector.extract_strided_slice %295 {offsets = [0, 0], sizes = [8, 384], strides = [1, 1]} : vector<8x512xf32> to vector<8x384xf32>
    %cst_138 = arith.constant 5.000000e-01 : f32
    %297 = vector.broadcast %cst_138 : f32 to vector<8x384xf32>
    %298 = arith.mulf %297, %296 : vector<8x384xf32>
    %299 = math.tanh %298 : vector<8x384xf32>
    %cst_139 = arith.constant 5.000000e-01 : f32
    %300 = vector.broadcast %cst_139 : f32 to vector<8x384xf32>
    %301 = arith.mulf %300, %299 : vector<8x384xf32>
    %cst_140 = arith.constant 5.000000e-01 : f32
    %302 = vector.broadcast %cst_140 : f32 to vector<8x384xf32>
    %303 = arith.addf %301, %302 : vector<8x384xf32>
    %304 = vector.extract_strided_slice %303 {offsets = [0, 0], sizes = [8, 128], strides = [1, 1]} : vector<8x384xf32> to vector<8x128xf32>
    %305 = vector.extract_strided_slice %303 {offsets = [0, 128], sizes = [8, 128], strides = [1, 1]} : vector<8x384xf32> to vector<8x128xf32>
    %306 = vector.extract_strided_slice %303 {offsets = [0, 256], sizes = [8, 128], strides = [1, 1]} : vector<8x384xf32> to vector<8x128xf32>
    %307 = vector.extract_strided_slice %295 {offsets = [0, 384], sizes = [8, 128], strides = [1, 1]} : vector<8x512xf32> to vector<8x128xf32>
    %308 = math.tanh %307 : vector<8x128xf32>
    %309 = arith.mulf %305, %290 : vector<8x128xf32>
    %310 = arith.mulf %304, %308 : vector<8x128xf32>
    %311 = arith.addf %309, %310 : vector<8x128xf32>
    %312 = math.tanh %311 : vector<8x128xf32>
    %313 = arith.mulf %306, %312 : vector<8x128xf32>
    %c0_141 = arith.constant 0 : index
    %314 = arith.index_cast %288 : i32 to index
    %c0_142 = arith.constant 0 : index
    %315 = vector.load %arg3[%c0_141, %314, %c0_142] : memref<1x64x1xf32, #tpu.memory_space<vmem>>, vector<1x8x1xf32>
    %316 = vector.shape_cast %315 : vector<1x8x1xf32> to vector<8x1xf32>
    %317 = vector.broadcast %316 : vector<8x1xf32> to vector<8x128xf32>
    %318 = arith.mulf %317, %313 : vector<8x128xf32>
    %cst_143 = arith.constant 1.000000e+00 : f32
    %319 = vector.broadcast %cst_143 : f32 to vector<8x1xf32>
    %320 = arith.subf %319, %316 : vector<8x1xf32>
    %321 = vector.broadcast %320 : vector<8x1xf32> to vector<8x128xf32>
    %322 = arith.mulf %321, %289 : vector<8x128xf32>
    %323 = arith.addf %318, %322 : vector<8x128xf32>
    %c0_144 = arith.constant 0 : index
    %c0_145 = arith.constant 0 : index
    %324 = vector.load %arg14[%c0_144, %c0_145] : memref<8x128xf32, #tpu.memory_space<vmem>>, vector<8x128xf32>
    tpu.vector_store %arg14[%c0_144, %c0_145], %323 {strides = array<i32>} : memref<8x128xf32, #tpu.memory_space<vmem>>, vector<8x128xf32>,
    %325 = vector.broadcast %316 : vector<8x1xf32> to vector<8x128xf32>
    %326 = arith.mulf %325, %311 : vector<8x128xf32>
    %cst_146 = arith.constant 1.000000e+00 : f32
    %327 = vector.broadcast %cst_146 : f32 to vector<8x1xf32>
    %328 = arith.subf %327, %316 : vector<8x1xf32>
    %329 = vector.broadcast %328 : vector<8x1xf32> to vector<8x128xf32>
    %330 = arith.mulf %329, %290 : vector<8x128xf32>
    %331 = arith.addf %326, %330 : vector<8x128xf32>
    %c0_147 = arith.constant 0 : index
    %c0_148 = arith.constant 0 : index
    %332 = vector.load %arg15[%c0_147, %c0_148] : memref<8x128xf32, #tpu.memory_space<vmem>>, vector<8x128xf32>
    tpu.vector_store %arg15[%c0_147, %c0_148], %331 {strides = array<i32>} : memref<8x128xf32, #tpu.memory_space<vmem>>, vector<8x128xf32>,
    %c7_i32 = arith.constant 7 : i32
    %c8_i32_149 = arith.constant 8 : i32
    %333 = arith.muli %c7_i32, %c8_i32_149 : i32
    %334 = tpu.assume_multiple %333, 8 : i32
    %c0_150 = arith.constant 0 : index
    %c0_151 = arith.constant 0 : index
    %335 = vector.load %arg14[%c0_150, %c0_151] : memref<8x128xf32, #tpu.memory_space<vmem>>, vector<8x128xf32>
    %c0_152 = arith.constant 0 : index
    %c0_153 = arith.constant 0 : index
    %336 = vector.load %arg15[%c0_152, %c0_153] : memref<8x128xf32, #tpu.memory_space<vmem>>, vector<8x128xf32>
    %337 = arith.index_cast %334 : i32 to index
    %c0_154 = arith.constant 0 : index
    %338 = vector.load %arg16[%337, %c0_154] : memref<64x512xf32, #tpu.memory_space<vmem>>, vector<8x512xf32>
    %c0_155 = arith.constant 0 : index
    %c0_156 = arith.constant 0 : index
    %339 = vector.load %arg5[%c0_155, %c0_156] : memref<128x512xf32, #tpu.memory_space<vmem>>, vector<128x512xf32>
    %cst_157 = arith.constant dense<0.000000e+00> : vector<8x512xf32>
    %340 = tpu.matmul %335, %339, %cst_157 {dimension_numbers = #tpu.dot_dimension_numbers<[1], [0], [0], [1], [0, 0, 1, 1], [], []>} : vector<8x128xf32>, vector<128x512xf32>, vector<8x512xf32> -> vector<8x512xf32>
    %341 = arith.addf %338, %340 : vector<8x512xf32>
    %342 = vector.extract_strided_slice %341 {offsets = [0, 0], sizes = [8, 384], strides = [1, 1]} : vector<8x512xf32> to vector<8x384xf32>
    %cst_158 = arith.constant 5.000000e-01 : f32
    %343 = vector.broadcast %cst_158 : f32 to vector<8x384xf32>
    %344 = arith.mulf %343, %342 : vector<8x384xf32>
    %345 = math.tanh %344 : vector<8x384xf32>
    %cst_159 = arith.constant 5.000000e-01 : f32
    %346 = vector.broadcast %cst_159 : f32 to vector<8x384xf32>
    %347 = arith.mulf %346, %345 : vector<8x384xf32>
    %cst_160 = arith.constant 5.000000e-01 : f32
    %348 = vector.broadcast %cst_160 : f32 to vector<8x384xf32>
    %349 = arith.addf %347, %348 : vector<8x384xf32>
    %350 = vector.extract_strided_slice %349 {offsets = [0, 0], sizes = [8, 128], strides = [1, 1]} : vector<8x384xf32> to vector<8x128xf32>
    %351 = vector.extract_strided_slice %349 {offsets = [0, 128], sizes = [8, 128], strides = [1, 1]} : vector<8x384xf32> to vector<8x128xf32>
    %352 = vector.extract_strided_slice %349 {offsets = [0, 256], sizes = [8, 128], strides = [1, 1]} : vector<8x384xf32> to vector<8x128xf32>
    %353 = vector.extract_strided_slice %341 {offsets = [0, 384], sizes = [8, 128], strides = [1, 1]} : vector<8x512xf32> to vector<8x128xf32>
    %354 = math.tanh %353 : vector<8x128xf32>
    %355 = arith.mulf %351, %336 : vector<8x128xf32>
    %356 = arith.mulf %350, %354 : vector<8x128xf32>
    %357 = arith.addf %355, %356 : vector<8x128xf32>
    %358 = math.tanh %357 : vector<8x128xf32>
    %359 = arith.mulf %352, %358 : vector<8x128xf32>
    %c0_161 = arith.constant 0 : index
    %360 = arith.index_cast %334 : i32 to index
    %c0_162 = arith.constant 0 : index
    %361 = vector.load %arg3[%c0_161, %360, %c0_162] : memref<1x64x1xf32, #tpu.memory_space<vmem>>, vector<1x8x1xf32>
    %362 = vector.shape_cast %361 : vector<1x8x1xf32> to vector<8x1xf32>
    %363 = vector.broadcast %362 : vector<8x1xf32> to vector<8x128xf32>
    %364 = arith.mulf %363, %359 : vector<8x128xf32>
    %cst_163 = arith.constant 1.000000e+00 : f32
    %365 = vector.broadcast %cst_163 : f32 to vector<8x1xf32>
    %366 = arith.subf %365, %362 : vector<8x1xf32>
    %367 = vector.broadcast %366 : vector<8x1xf32> to vector<8x128xf32>
    %368 = arith.mulf %367, %335 : vector<8x128xf32>
    %369 = arith.addf %364, %368 : vector<8x128xf32>
    %c0_164 = arith.constant 0 : index
    %c0_165 = arith.constant 0 : index
    %370 = vector.load %arg14[%c0_164, %c0_165] : memref<8x128xf32, #tpu.memory_space<vmem>>, vector<8x128xf32>
    tpu.vector_store %arg14[%c0_164, %c0_165], %369 {strides = array<i32>} : memref<8x128xf32, #tpu.memory_space<vmem>>, vector<8x128xf32>,
    %371 = vector.broadcast %362 : vector<8x1xf32> to vector<8x128xf32>
    %372 = arith.mulf %371, %357 : vector<8x128xf32>
    %cst_166 = arith.constant 1.000000e+00 : f32
    %373 = vector.broadcast %cst_166 : f32 to vector<8x1xf32>
    %374 = arith.subf %373, %362 : vector<8x1xf32>
    %375 = vector.broadcast %374 : vector<8x1xf32> to vector<8x128xf32>
    %376 = arith.mulf %375, %336 : vector<8x128xf32>
    %377 = arith.addf %372, %376 : vector<8x128xf32>
    %c0_167 = arith.constant 0 : index
    %c0_168 = arith.constant 0 : index
    %378 = vector.load %arg15[%c0_167, %c0_168] : memref<8x128xf32, #tpu.memory_space<vmem>>, vector<8x128xf32>
    tpu.vector_store %arg15[%c0_167, %c0_168], %377 {strides = array<i32>} : memref<8x128xf32, #tpu.memory_space<vmem>>, vector<8x128xf32>,
    %c8_i32_169 = arith.constant 8 : i32
    %c2_i32_170 = arith.constant 2 : i32
    %379 = arith.cmpi eq, %arg1, %c2_i32_170 : i32
    %380 = arith.extui %379 : i1 to i32
    %c0_i32_171 = arith.constant 0 : i32
    %381 = arith.cmpi ne, %380, %c0_i32_171 : i32
    scf.if %381 {
      %c0_172 = arith.constant 0 : index
      %c0_173 = arith.constant 0 : index
      %382 = vector.load %arg14[%c0_172, %c0_173] : memref<8x128xf32, #tpu.memory_space<vmem>>, vector<8x128xf32>
      %c0_174 = arith.constant 0 : index
      %c0_175 = arith.constant 0 : index
      %383 = vector.load %arg7[%c0_174, %c0_175] : memref<128x128xf32, #tpu.memory_space<vmem>>, vector<128x128xf32>
      %cst_176 = arith.constant dense<0.000000e+00> : vector<8x128xf32>
      %384 = tpu.matmul %382, %383, %cst_176 {dimension_numbers = #tpu.dot_dimension_numbers<[1], [0], [0], [1], [0, 0, 1, 1], [], []>} : vector<8x128xf32>, vector<128x128xf32>, vector<8x128xf32> -> vector<8x128xf32>
      %c0_177 = arith.constant 0 : index
      %c0_178 = arith.constant 0 : index
      %385 = vector.load %arg8[%c0_177, %c0_178] : memref<1x128xf32, #tpu.memory_space<vmem>>, vector<1x128xf32>
      %386 = vector.broadcast %385 : vector<1x128xf32> to vector<8x128xf32>
      %387 = arith.addf %384, %386 : vector<8x128xf32>
      %cst_179 = arith.constant 0.000000e+00 : f32
      %388 = vector.broadcast %cst_179 : f32 to vector<8x128xf32>
      %389 = arith.maximumf %387, %388 : vector<8x128xf32>
      %c0_180 = arith.constant 0 : index
      %c0_181 = arith.constant 0 : index
      %390 = vector.load %arg9[%c0_180, %c0_181] : memref<128x128xf32, #tpu.memory_space<vmem>>, vector<128x128xf32>
      %cst_182 = arith.constant dense<0.000000e+00> : vector<8x128xf32>
      %391 = tpu.matmul %389, %390, %cst_182 {dimension_numbers = #tpu.dot_dimension_numbers<[1], [0], [0], [1], [0, 0, 1, 1], [], []>} : vector<8x128xf32>, vector<128x128xf32>, vector<8x128xf32> -> vector<8x128xf32>
      %c0_183 = arith.constant 0 : index
      %c0_184 = arith.constant 0 : index
      %392 = vector.load %arg10[%c0_183, %c0_184] : memref<1x128xf32, #tpu.memory_space<vmem>>, vector<1x128xf32>
      %393 = vector.broadcast %392 : vector<1x128xf32> to vector<8x128xf32>
      %394 = arith.addf %391, %393 : vector<8x128xf32>
      %c0_185 = arith.constant 0 : index
      %c0_186 = arith.constant 0 : index
      %395 = vector.load %arg11[%c0_185, %c0_186] : memref<1x128xf32, #tpu.memory_space<vmem>>, vector<1x128xf32>
      %396 = vector.broadcast %395 : vector<1x128xf32> to vector<8x128xf32>
      %397 = arith.mulf %394, %396 : vector<8x128xf32>
      %c0_187 = arith.constant 0 : index
      %c0_188 = arith.constant 0 : index
      %398 = vector.load %arg12[%c0_187, %c0_188] : memref<1x128xf32, #tpu.memory_space<vmem>>, vector<1x128xf32>
      %399 = vector.broadcast %398 : vector<1x128xf32> to vector<8x128xf32>
      %400 = arith.addf %397, %399 : vector<8x128xf32>
      %c0_189 = arith.constant 0 : index
      %c0_190 = arith.constant 0 : index
      %401 = vector.load %arg13[%c0_189, %c0_190] : memref<8x128xf32, #tpu.memory_space<vmem>>, vector<8x128xf32>
      tpu.vector_store %arg13[%c0_189, %c0_190], %400 {strides = array<i32>} : memref<8x128xf32, #tpu.memory_space<vmem>>, vector<8x128xf32>,
    } else {
    }
    return
  }
  func.func @transform_0(%arg0: i32, %arg1: i32) -> (i32, i32, i32) {
    %c0_i32 = arith.constant 0 : i32
    %c0_i32_0 = arith.constant 0 : i32
    return %arg0, %arg1, %c0_i32 : i32, i32, i32
  }
  func.func @transform_1(%arg0: i32, %arg1: i32) -> (i32, i32, i32) {
    %c0_i32 = arith.constant 0 : i32
    %c0_i32_0 = arith.constant 0 : i32
    return %arg0, %arg1, %c0_i32 : i32, i32, i32
  }
  func.func @transform_2(%arg0: i32, %arg1: i32) -> (i32, i32) {
    %c0_i32 = arith.constant 0 : i32
    %c0_i32_0 = arith.constant 0 : i32
    %c0_i32_1 = arith.constant 0 : i32
    return %c0_i32, %c0_i32_0 : i32, i32
  }
  func.func @transform_3(%arg0: i32, %arg1: i32) -> (i32, i32) {
    %c0_i32 = arith.constant 0 : i32
    %c0_i32_0 = arith.constant 0 : i32
    %c0_i32_1 = arith.constant 0 : i32
    return %c0_i32, %c0_i32_0 : i32, i32
  }
  func.func @transform_4(%arg0: i32, %arg1: i32) -> (i32, i32) {
    %c0_i32 = arith.constant 0 : i32
    %c0_i32_0 = arith.constant 0 : i32
    %c0_i32_1 = arith.constant 0 : i32
    return %c0_i32, %c0_i32_0 : i32, i32
  }
  func.func @transform_5(%arg0: i32, %arg1: i32) -> (i32, i32) {
    %c0_i32 = arith.constant 0 : i32
    %c0_i32_0 = arith.constant 0 : i32
    %c0_i32_1 = arith.constant 0 : i32
    return %c0_i32, %c0_i32_0 : i32, i32
  }
  func.func @transform_6(%arg0: i32, %arg1: i32) -> (i32, i32) {
    %c0_i32 = arith.constant 0 : i32
    %c0_i32_0 = arith.constant 0 : i32
    %c0_i32_1 = arith.constant 0 : i32
    return %c0_i32, %c0_i32_0 : i32, i32
  }
  func.func @transform_7(%arg0: i32, %arg1: i32) -> (i32, i32) {
    %c0_i32 = arith.constant 0 : i32
    %c0_i32_0 = arith.constant 0 : i32
    %c0_i32_1 = arith.constant 0 : i32
    return %c0_i32, %c0_i32_0 : i32, i32
  }
  func.func @transform_8(%arg0: i32, %arg1: i32) -> (i32, i32) {
    %c0_i32 = arith.constant 0 : i32
    %c0_i32_0 = arith.constant 0 : i32
    %c0_i32_1 = arith.constant 0 : i32
    return %c0_i32, %c0_i32_0 : i32, i32
  }
  func.func @transform_9(%arg0: i32, %arg1: i32) -> (i32, i32) {
    %c0_i32 = arith.constant 0 : i32
    %c0_i32_0 = arith.constant 0 : i32
    %c0_i32_1 = arith.constant 0 : i32
    return %c0_i32, %c0_i32_0 : i32, i32
  }
  func.func @transform_10(%arg0: i32, %arg1: i32) -> (i32, i32) {
    %c0_i32 = arith.constant 0 : i32
    %c0_i32_0 = arith.constant 0 : i32
    %c0_i32_1 = arith.constant 0 : i32
    return %c0_i32, %c0_i32_0 : i32, i32
  }
  func.func @transform_11(%arg0: i32, %arg1: i32) -> (i32, i32) {
    %c0_i32 = arith.constant 0 : i32
    %c0_i32_0 = arith.constant 0 : i32
    return %arg0, %c0_i32 : i32, i32
  }
}

</mosaic_0001>

<llo_original>
// kernel: tpu_custom_call.1
$region0: #{tpu_custom_call.1}
  #allocation0 [shape = 'u32[]', space=smem, size = 0x4, offset = 0x4, fixed_abs, tag = 'smem constant byte address 0x4 - core index']
  #allocation1 [shape = 'u32[144,128]{1,0:T(1,128)}', space=vmem, size = 0x12000, scoped, tag = 'internal scratch']
  #allocation2 [shape = 'f32[8,128]{1,0:T(8,128)}', space=vmem, size = 0x1000, scoped, tag = 'scratch operand']
  #allocation3 [shape = 'f32[8,128]{1,0:T(8,128)}', space=vmem, size = 0x1000, scoped, tag = 'scratch operand']
  #allocation4 [shape = 'f32[64,512]{1,0:T(8,128)}', space=vmem, size = 0x20000, scoped, tag = 'scratch operand']
  %s0 = inlined_call_operand.vmem [shape: f32[2,192,4], index: 0, kind: input, shape index: {}]
  %s1 = inlined_call_operand.vmem [shape: f32[2,192,1], index: 1, kind: input, shape index: {}]
  %s2 = inlined_call_operand.vmem [shape: f32[4,512], index: 2, kind: input, shape index: {}]
  %s3 = inlined_call_operand.vmem [shape: f32[128,512], index: 3, kind: input, shape index: {}]
  %s4 = inlined_call_operand.vmem [shape: f32[1,512], index: 4, kind: input, shape index: {}]
  %s5 = inlined_call_operand.vmem [shape: f32[128,128], index: 5, kind: input, shape index: {}]
  %s6 = inlined_call_operand.vmem [shape: f32[1,128], index: 6, kind: input, shape index: {}]
  %s7 = inlined_call_operand.vmem [shape: f32[128,128], index: 7, kind: input, shape index: {}]
  %s8 = inlined_call_operand.vmem [shape: f32[1,128], index: 8, kind: input, shape index: {}]
  %s9 = inlined_call_operand.vmem [shape: f32[1,128], index: 9, kind: input, shape index: {}]
  %s10 = inlined_call_operand.vmem [shape: f32[1,128], index: 10, kind: input, shape index: {}]
  %s11 = inlined_call_operand.hbm [shape: f32[16,128], index: 11, kind: output, shape index: {}]
  %s12 = sld [smem:[#allocation0]]
  $region85: #{tpu_custom_call.1} parent=0
    _
  %s14 = ssub.s32 1, %s12
  %s15 = scalar_select 0, %s14, %s12
  $region1: #{tpu_custom_call.1} parent=0
    #allocation5 [shape = 'u8[8192]{0}', space=vmem, size = 0x2000, scoped, tag = 'output window, operand 0']
    #allocation6 [shape = 's32[2]{0}', space=sflag, size = 0x8, scoped, tag = 'scoped memory for tpu_custom_call.1']
    %16 = vsyncpa [#allocation6], 0
    %s17 = scalar_lea.sflag [#allocation6], 1
    %18 = vsyncpa %s17, 0
    loop: start=0, step=1, limit=8
    $region2: #{tpu_custom_call.1} parent=1 // loop_pre_header
      _
    $region3: #{tpu_custom_call.1} parent=1 // loop_header
      %s20 = sphi 0, %s24
      %p21 = scmp.ge.s32.totalorder %s20, 8
      %s27 = sphi 0, %s39
      %s28 = sphi 0, %s35
      %s29 = sphi 0, %s27
      %s30 = sphi 0, %s28
      %s31 = sphi 0, %s29
      %s32 = sphi 0, %s30
      %s44 = sphi 0, %s46
      %s47 = sphi 0, %s44
      %s48 = sphi 0, %s47
      %s64 = sphi 0, %s48
      %s72 = sphi 0, %s74
      %s75 = sphi 0, %s72
      %s76 = sphi 0, %s75
      %s92 = sphi 0, %s76
      %s96 = sphi 0, %s96
      %s98 = sphi 0, %s96
      %s99 = sphi 0, %s98
      %s113 = sphi 0, %s99
      %s117 = sphi 0, %s117
      %s119 = sphi 0, %s117
      %s120 = sphi 0, %s119
      %s134 = sphi 0, %s120
      %s138 = sphi 0, %s138
      %s140 = sphi 0, %s138
      %s141 = sphi 0, %s140
      %s155 = sphi 0, %s141
      %s159 = sphi 0, %s159
      %s161 = sphi 0, %s159
      %s162 = sphi 0, %s161
      %s176 = sphi 0, %s162
      %s180 = sphi 0, %s180
      %s182 = sphi 0, %s180
      %s183 = sphi 0, %s182
      %s197 = sphi 0, %s183
      %s201 = sphi 0, %s201
      %s203 = sphi 0, %s201
      %s204 = sphi 0, %s203
      %s218 = sphi 0, %s204
      %s222 = sphi 0, %s222
      %s224 = sphi 0, %s222
      %s225 = sphi 0, %s224
      %s239 = sphi 0, %s225
      %s243 = sphi 0, %s243
      %s245 = sphi 0, %s243
      %s246 = sphi 0, %s245
      %s260 = sphi 0, %s246
      %s264 = sphi 0, %s264
      %s266 = sphi 0, %s264
      %s267 = sphi 0, %s266
      %s281 = sphi 0, %s267
      %s287 = sphi 0, %s289
      %s290 = sphi 0, %s287
      %s291 = sphi 0, %s290
      %s307 = sphi 0, %s291
    $region4: #{tpu_custom_call.1} parent=1 // loop_header_branch
      %23 = sbr.rel (%p21) target = $region8
    $region5: #{tpu_custom_call.1} parent=1 // loop_body
      %s25 = ssub.s32 %s20, 1
      %s26 = ssub.s32 %s20, 2
      %s33 = sadd.s32 1, %s28
      %p34 = scmp.ge.s32.totalorder %s33, 3
      %s35 = scalar_select %p34, 0, %s33
      %s36 = sadd.s32 1, %s27
      %s37 = scalar_select %p34, %s36, %s27
      %p38 = scmp.ge.s32.totalorder %s37, 2
      %s39 = scalar_select %p38, 0, %s37
      %s40 = ssub.s32 %s27, %s39
      %s41 = ssub.s32 %s28, %s35
      %s42 = sor.u32 %s40, %s41
      %p43 = scmp.eq.s32.totalorder %s42, 0
      %s45 = sadd.s32 %s44, 1
      %s46 = scalar_select %p43, %s44, %s45
      %p49 = pneg %p43
      %p50 = scmp.eq.s32.totalorder %s20, 5
      %p51 = por %p49, %p50
      %p52 = scmp.ne.s32.totalorder %s44, %s47
      %p53 = scmp.eq.s32.totalorder %s20, 0
      %p54 = por %p52, %p53
      %p55 = scmp.ne.s32.totalorder %s44, %s47
      %p56 = scmp.eq.s32.totalorder %s25, 5
      %p57 = por %p55, %p56
      %p58 = scmp.ne.s32.totalorder %s47, %s48
      %p59 = scmp.eq.s32.totalorder %s25, 0
      %p60 = por %p58, %p59
      %p61 = scmp.ne.s32.totalorder %s47, %s48
      %p62 = scmp.eq.s32.totalorder %s26, 5
      %p63 = por %p61, %p62
      %p65 = scmp.ne.s32.totalorder %s48, %s64
      %p66 = scmp.eq.s32.totalorder %s26, 0
      %p67 = por %p65, %p66
      %s68 = ssub.s32 %s27, %s39
      %s69 = ssub.s32 %s28, %s35
      %s70 = sor.u32 %s68, %s69
      %p71 = scmp.eq.s32.totalorder %s70, 0
      %s73 = sadd.s32 %s72, 1
      %s74 = scalar_select %p71, %s72, %s73
      %p77 = pneg %p71
      %p78 = scmp.eq.s32.totalorder %s20, 5
      %p79 = por %p77, %p78
      %p80 = scmp.ne.s32.totalorder %s72, %s75
      %p81 = scmp.eq.s32.totalorder %s20, 0
      %p82 = por %p80, %p81
      %p83 = scmp.ne.s32.totalorder %s72, %s75
      %p84 = scmp.eq.s32.totalorder %s25, 5
      %p85 = por %p83, %p84
      %p86 = scmp.ne.s32.totalorder %s75, %s76
      %p87 = scmp.eq.s32.totalorder %s25, 0
      %p88 = por %p86, %p87
      %p89 = scmp.ne.s32.totalorder %s75, %s76
      %p90 = scmp.eq.s32.totalorder %s26, 5
      %p91 = por %p89, %p90
      %p93 = scmp.ne.s32.totalorder %s76, %s92
      %p94 = scmp.eq.s32.totalorder %s26, 0
      %p95 = por %p93, %p94
      %s97 = sadd.s32 %s96, 1
      %p100 = scmp.eq.s32.totalorder %s20, 5
      %p101 = scmp.ne.s32.totalorder %s96, %s98
      %p102 = scmp.eq.s32.totalorder %s20, 0
      %p103 = por %p101, %p102
      %p104 = scmp.ne.s32.totalorder %s96, %s98
      %p105 = scmp.eq.s32.totalorder %s25, 5
      %p106 = por %p104, %p105
      %p107 = scmp.ne.s32.totalorder %s98, %s99
      %p108 = scmp.eq.s32.totalorder %s25, 0
      %p109 = por %p107, %p108
      %p110 = scmp.ne.s32.totalorder %s98, %s99
      %p111 = scmp.eq.s32.totalorder %s26, 5
      %p112 = por %p110, %p111
      %p114 = scmp.ne.s32.totalorder %s99, %s113
      %p115 = scmp.eq.s32.totalorder %s26, 0
      %p116 = por %p114, %p115
      %s118 = sadd.s32 %s117, 1
      %p121 = scmp.eq.s32.totalorder %s20, 5
      %p122 = scmp.ne.s32.totalorder %s117, %s119
      %p123 = scmp.eq.s32.totalorder %s20, 0
      %p124 = por %p122, %p123
      %p125 = scmp.ne.s32.totalorder %s117, %s119
      %p126 = scmp.eq.s32.totalorder %s25, 5
      %p127 = por %p125, %p126
      %p128 = scmp.ne.s32.totalorder %s119, %s120
      %p129 = scmp.eq.s32.totalorder %s25, 0
      %p130 = por %p128, %p129
      %p131 = scmp.ne.s32.totalorder %s119, %s120
      %p132 = scmp.eq.s32.totalorder %s26, 5
      %p133 = por %p131, %p132
      %p135 = scmp.ne.s32.totalorder %s120, %s134
      %p136 = scmp.eq.s32.totalorder %s26, 0
      %p137 = por %p135, %p136
      %s139 = sadd.s32 %s138, 1
      %p142 = scmp.eq.s32.totalorder %s20, 5
      %p143 = scmp.ne.s32.totalorder %s138, %s140
      %p144 = scmp.eq.s32.totalorder %s20, 0
      %p145 = por %p143, %p144
      %p146 = scmp.ne.s32.totalorder %s138, %s140
      %p147 = scmp.eq.s32.totalorder %s25, 5
      %p148 = por %p146, %p147
      %p149 = scmp.ne.s32.totalorder %s140, %s141
      %p150 = scmp.eq.s32.totalorder %s25, 0
      %p151 = por %p149, %p150
      %p152 = scmp.ne.s32.totalorder %s140, %s141
      %p153 = scmp.eq.s32.totalorder %s26, 5
      %p154 = por %p152, %p153
      %p156 = scmp.ne.s32.totalorder %s141, %s155
      %p157 = scmp.eq.s32.totalorder %s26, 0
      %p158 = por %p156, %p157
      %s160 = sadd.s32 %s159, 1
      %p163 = scmp.eq.s32.totalorder %s20, 5
      %p164 = scmp.ne.s32.totalorder %s159, %s161
      %p165 = scmp.eq.s32.totalorder %s20, 0
      %p166 = por %p164, %p165
      %p167 = scmp.ne.s32.totalorder %s159, %s161
      %p168 = scmp.eq.s32.totalorder %s25, 5
      %p169 = por %p167, %p168
      %p170 = scmp.ne.s32.totalorder %s161, %s162
      %p171 = scmp.eq.s32.totalorder %s25, 0
      %p172 = por %p170, %p171
      %p173 = scmp.ne.s32.totalorder %s161, %s162
      %p174 = scmp.eq.s32.totalorder %s26, 5
      %p175 = por %p173, %p174
      %p177 = scmp.ne.s32.totalorder %s162, %s176
      %p178 = scmp.eq.s32.totalorder %s26, 0
      %p179 = por %p177, %p178
      %s181 = sadd.s32 %s180, 1
      %p184 = scmp.eq.s32.totalorder %s20, 5
      %p185 = scmp.ne.s32.totalorder %s180, %s182
      %p186 = scmp.eq.s32.totalorder %s20, 0
      %p187 = por %p185, %p186
      %p188 = scmp.ne.s32.totalorder %s180, %s182
      %p189 = scmp.eq.s32.totalorder %s25, 5
      %p190 = por %p188, %p189
      %p191 = scmp.ne.s32.totalorder %s182, %s183
      %p192 = scmp.eq.s32.totalorder %s25, 0
      %p193 = por %p191, %p192
      %p194 = scmp.ne.s32.totalorder %s182, %s183
      %p195 = scmp.eq.s32.totalorder %s26, 5
      %p196 = por %p194, %p195
      %p198 = scmp.ne.s32.totalorder %s183, %s197
      %p199 = scmp.eq.s32.totalorder %s26, 0
      %p200 = por %p198, %p199
      %s202 = sadd.s32 %s201, 1
      %p205 = scmp.eq.s32.totalorder %s20, 5
      %p206 = scmp.ne.s32.totalorder %s201, %s203
      %p207 = scmp.eq.s32.totalorder %s20, 0
      %p208 = por %p206, %p207
      %p209 = scmp.ne.s32.totalorder %s201, %s203
      %p210 = scmp.eq.s32.totalorder %s25, 5
      %p211 = por %p209, %p210
      %p212 = scmp.ne.s32.totalorder %s203, %s204
      %p213 = scmp.eq.s32.totalorder %s25, 0
      %p214 = por %p212, %p213
      %p215 = scmp.ne.s32.totalorder %s203, %s204
      %p216 = scmp.eq.s32.totalorder %s26, 5
      %p217 = por %p215, %p216
      %p219 = scmp.ne.s32.totalorder %s204, %s218
      %p220 = scmp.eq.s32.totalorder %s26, 0
      %p221 = por %p219, %p220
      %s223 = sadd.s32 %s222, 1
      %p226 = scmp.eq.s32.totalorder %s20, 5
      %p227 = scmp.ne.s32.totalorder %s222, %s224
      %p228 = scmp.eq.s32.totalorder %s20, 0
      %p229 = por %p227, %p228
      %p230 = scmp.ne.s32.totalorder %s222, %s224
      %p231 = scmp.eq.s32.totalorder %s25, 5
      %p232 = por %p230, %p231
      %p233 = scmp.ne.s32.totalorder %s224, %s225
      %p234 = scmp.eq.s32.totalorder %s25, 0
      %p235 = por %p233, %p234
      %p236 = scmp.ne.s32.totalorder %s224, %s225
      %p237 = scmp.eq.s32.totalorder %s26, 5
      %p238 = por %p236, %p237
      %p240 = scmp.ne.s32.totalorder %s225, %s239
      %p241 = scmp.eq.s32.totalorder %s26, 0
      %p242 = por %p240, %p241
      %s244 = sadd.s32 %s243, 1
      %p247 = scmp.eq.s32.totalorder %s20, 5
      %p248 = scmp.ne.s32.totalorder %s243, %s245
      %p249 = scmp.eq.s32.totalorder %s20, 0
      %p250 = por %p248, %p249
      %p251 = scmp.ne.s32.totalorder %s243, %s245
      %p252 = scmp.eq.s32.totalorder %s25, 5
      %p253 = por %p251, %p252
      %p254 = scmp.ne.s32.totalorder %s245, %s246
      %p255 = scmp.eq.s32.totalorder %s25, 0
      %p256 = por %p254, %p255
      %p257 = scmp.ne.s32.totalorder %s245, %s246
      %p258 = scmp.eq.s32.totalorder %s26, 5
      %p259 = por %p257, %p258
      %p261 = scmp.ne.s32.totalorder %s246, %s260
      %p262 = scmp.eq.s32.totalorder %s26, 0
      %p263 = por %p261, %p262
      %s265 = sadd.s32 %s264, 1
      %p268 = scmp.eq.s32.totalorder %s20, 5
      %p269 = scmp.ne.s32.totalorder %s264, %s266
      %p270 = scmp.eq.s32.totalorder %s20, 0
      %p271 = por %p269, %p270
      %p272 = scmp.ne.s32.totalorder %s264, %s266
      %p273 = scmp.eq.s32.totalorder %s25, 5
      %p274 = por %p272, %p273
      %p275 = scmp.ne.s32.totalorder %s266, %s267
      %p276 = scmp.eq.s32.totalorder %s25, 0
      %p277 = por %p275, %p276
      %p278 = scmp.ne.s32.totalorder %s266, %s267
      %p279 = scmp.eq.s32.totalorder %s26, 5
      %p280 = por %p278, %p279
      %p282 = scmp.ne.s32.totalorder %s267, %s281
      %p283 = scmp.eq.s32.totalorder %s26, 0
      %p284 = por %p282, %p283
      %s285 = ssub.s32 %s27, %s39
      %p286 = scmp.eq.s32.totalorder %s285, 0
      %s288 = sadd.s32 %s287, 1
      %s289 = scalar_select %p286, %s287, %s288
      %p292 = pneg %p286
      %p293 = scmp.eq.s32.totalorder %s20, 5
      %p294 = por %p292, %p293
      %p295 = scmp.ne.s32.totalorder %s287, %s290
      %p296 = scmp.eq.s32.totalorder %s20, 0
      %p297 = por %p295, %p296
      %p298 = scmp.ne.s32.totalorder %s287, %s290
      %p299 = scmp.eq.s32.totalorder %s25, 5
      %p300 = por %p298, %p299
      %p301 = scmp.ne.s32.totalorder %s290, %s291
      %p302 = scmp.eq.s32.totalorder %s25, 0
      %p303 = por %p301, %p302
      %p304 = scmp.ne.s32.totalorder %s290, %s291
      %p305 = scmp.eq.s32.totalorder %s26, 5
      %p306 = por %p304, %p305
      %p308 = scmp.ne.s32.totalorder %s291, %s307
      %p309 = scmp.eq.s32.totalorder %s26, 0
      %p310 = por %p308, %p309
      %p311 = scmp.le.s32.totalorder 1, %s20
      %p312 = scmp.lt.s32.totalorder %s20, 7
      %p313 = pnand %p311, %p312
      %p314 = pneg %p313
      // Predicated region
      $region9: #{tpu_custom_call.1} parent=5 // pred_check
        _
      $region10: #{tpu_custom_call.1} parent=5 // pred_check_branch
        %316 = sbr.rel (%p313) target = $region12
      $region11: #{tpu_custom_call.1} parent=5 // pred_region
        %s317 = ssub.s32 %s20, 1
        // Predicated region
        $region13: #{tpu_custom_call.1} parent=11 // pred_check
          %p318 = pneg %p109
        $region14: #{tpu_custom_call.1} parent=11 // pred_check_branch
          %320 = sbr.rel (%p318) target = $region16
        $region15: #{tpu_custom_call.1} parent=11 // pred_region
          _
        $region16: #{tpu_custom_call.1} parent=11 // pred_fallthru
          _
        // Predicated region
        $region17: #{tpu_custom_call.1} parent=11 // pred_check
          %p321 = pneg %p130
        $region18: #{tpu_custom_call.1} parent=11 // pred_check_branch
          %323 = sbr.rel (%p321) target = $region20
        $region19: #{tpu_custom_call.1} parent=11 // pred_region
          _
        $region20: #{tpu_custom_call.1} parent=11 // pred_fallthru
          _
        // Predicated region
        $region21: #{tpu_custom_call.1} parent=11 // pred_check
          %p324 = pneg %p151
        $region22: #{tpu_custom_call.1} parent=11 // pred_check_branch
          %326 = sbr.rel (%p324) target = $region24
        $region23: #{tpu_custom_call.1} parent=11 // pred_region
          _
        $region24: #{tpu_custom_call.1} parent=11 // pred_fallthru
          _
        // Predicated region
        $region25: #{tpu_custom_call.1} parent=11 // pred_check
          %p327 = pneg %p172
        $region26: #{tpu_custom_call.1} parent=11 // pred_check_branch
          %329 = sbr.rel (%p327) target = $region28
        $region27: #{tpu_custom_call.1} parent=11 // pred_region
          _
        $region28: #{tpu_custom_call.1} parent=11 // pred_fallthru
          _
        // Predicated region
        $region29: #{tpu_custom_call.1} parent=11 // pred_check
          %p330 = pneg %p193
        $region30: #{tpu_custom_call.1} parent=11 // pred_check_branch
          %332 = sbr.rel (%p330) target = $region32
        $region31: #{tpu_custom_call.1} parent=11 // pred_region
          _
        $region32: #{tpu_custom_call.1} parent=11 // pred_fallthru
          _
        // Predicated region
        $region33: #{tpu_custom_call.1} parent=11 // pred_check
          %p333 = pneg %p214
        $region34: #{tpu_custom_call.1} parent=11 // pred_check_branch
          %335 = sbr.rel (%p333) target = $region36
        $region35: #{tpu_custom_call.1} parent=11 // pred_region
          _
        $region36: #{tpu_custom_call.1} parent=11 // pred_fallthru
          _
        // Predicated region
        $region37: #{tpu_custom_call.1} parent=11 // pred_check
          %p336 = pneg %p235
        $region38: #{tpu_custom_call.1} parent=11 // pred_check_branch
          %338 = sbr.rel (%p336) target = $region40
        $region39: #{tpu_custom_call.1} parent=11 // pred_region
          _
        $region40: #{tpu_custom_call.1} parent=11 // pred_fallthru
          _
        // Predicated region
        $region41: #{tpu_custom_call.1} parent=11 // pred_check
          %p339 = pneg %p256
        $region42: #{tpu_custom_call.1} parent=11 // pred_check_branch
          %341 = sbr.rel (%p339) target = $region44
        $region43: #{tpu_custom_call.1} parent=11 // pred_region
          _
        $region44: #{tpu_custom_call.1} parent=11 // pred_fallthru
          _
        // Predicated region
        $region45: #{tpu_custom_call.1} parent=11 // pred_check
          %p342 = pneg %p277
        $region46: #{tpu_custom_call.1} parent=11 // pred_check_branch
          %344 = sbr.rel (%p342) target = $region48
        $region47: #{tpu_custom_call.1} parent=11 // pred_region
          _
        $region48: #{tpu_custom_call.1} parent=11 // pred_fallthru
          _
      $region12: #{tpu_custom_call.1} parent=5 // pred_fallthru
        _
      %p345 = scmp.lt.s32.totalorder %s20, 6
      // Predicated region
      $region49: #{tpu_custom_call.1} parent=5 // pred_check
        %p346 = pneg %p345
      $region50: #{tpu_custom_call.1} parent=5 // pred_check_branch
        %348 = sbr.rel (%p346) target = $region52
      $region51: #{tpu_custom_call.1} parent=5 // pred_region
        // Predicated region
        $region53: #{tpu_custom_call.1} parent=51 // pred_check
          %p349 = pneg %p54
        $region54: #{tpu_custom_call.1} parent=51 // pred_check_branch
          %351 = sbr.rel (%p349) target = $region56
        $region55: #{tpu_custom_call.1} parent=51 // pred_region
          %s352 = smul.u32 8, %s28
          %p353 = scmp.lt.s32.totalorder %s27, 1
          %s354 = scalar_select %p353, %s27, 1
          %p355 = scmp.lt.s32.totalorder %s352, 23
          %s356 = scalar_select %p355, %s352, 23
          %s357 = smul.addr %s354, 24
          %s358 = sadd.s32 %s356, %s357
          %s359 = smul.addr %s358, 8
          %s360 = scalar_lea.vmem %s0, %s359
          %s361 = smul.u32 8, %s28
        $region56: #{tpu_custom_call.1} parent=51 // pred_fallthru
          _
        // Predicated region
        $region57: #{tpu_custom_call.1} parent=51 // pred_check
          %p362 = pneg %p82
        $region58: #{tpu_custom_call.1} parent=51 // pred_check_branch
          %364 = sbr.rel (%p362) target = $region60
        $region59: #{tpu_custom_call.1} parent=51 // pred_region
          %s365 = smul.u32 8, %s28
          %p366 = scmp.lt.s32.totalorder %s27, 1
          %s367 = scalar_select %p366, %s27, 1
          %p368 = scmp.lt.s32.totalorder %s365, 23
          %s369 = scalar_select %p368, %s365, 23
          %s370 = smul.addr %s367, 24
          %s371 = sadd.s32 %s369, %s370
          %s372 = smul.addr %s371, 8
          %s373 = scalar_lea.vmem %s1, %s372
          %s374 = smul.u32 8, %s28
        $region60: #{tpu_custom_call.1} parent=51 // pred_fallthru
          _
      $region52: #{tpu_custom_call.1} parent=5 // pred_fallthru
        _
      %p375 = scmp.le.s32.totalorder 1, %s20
      %p376 = scmp.lt.s32.totalorder %s20, 7
      %p377 = pnand %p375, %p376
      %p378 = pneg %p377
      // Predicated region
      $region61: #{tpu_custom_call.1} parent=5 // pred_check
        _
      $region62: #{tpu_custom_call.1} parent=5 // pred_check_branch
        %380 = sbr.rel (%p377) target = $region64
      $region63: #{tpu_custom_call.1} parent=5 // pred_region
        %s381 = ssub.s32 %s20, 1
        %s382 = smul.u32 8, %s30
        %p383 = scmp.lt.s32.totalorder %s29, 1
        %s384 = scalar_select %p383, %s29, 1
        %p385 = scmp.lt.s32.totalorder %s382, 23
        %s386 = scalar_select %p385, %s382, 23
        %s387 = smul.addr %s384, 24
        %s388 = sadd.s32 %s386, %s387
        %s389 = smul.addr %s388, 8
        %s390 = scalar_lea.vmem %s0, %s389
        %p391 = pneg %p60
        %p392 = pneg %p57
        %s393 = smul.u32 8, %s30
        %p394 = scmp.lt.s32.totalorder %s29, 1
        %s395 = scalar_select %p394, %s29, 1
        %p396 = scmp.lt.s32.totalorder %s393, 23
        %s397 = scalar_select %p396, %s393, 23
        %s398 = smul.addr %s395, 24
        %s399 = sadd.s32 %s397, %s398
        %s400 = smul.addr %s399, 8
        %s401 = scalar_lea.vmem %s1, %s400
        %p402 = pneg %p88
        %p403 = pneg %p85
        %p404 = pneg %p109
        %p405 = pneg %p106
        %p406 = pneg %p130
        %p407 = pneg %p127
        %p408 = pneg %p151
        %p409 = pneg %p148
        %p410 = pneg %p172
        %p411 = pneg %p169
        %p412 = pneg %p193
        %p413 = pneg %p190
        %p414 = pneg %p214
        %p415 = pneg %p211
        %p416 = pneg %p235
        %p417 = pneg %p232
        %p418 = pneg %p256
        %p419 = pneg %p253
        %p420 = pneg %p277
        %p421 = pneg %p274
        %p422 = pneg %p303
        %p423 = pneg %p300
        %s424 = sand.u32 %s290, 1
        %s425 = scalar_lea.sflag [#allocation6], %s424
        %s426 = sand.u32 %s290, 1
        %s427 = smul.addr %s426, 8
        %s428 = scalar_lea.vmem [#allocation5], %s427
        %s429 = smul.u32 8, %s30
        %p430 = scmp.lt.s32.totalorder %s29, 1
        %s431 = scalar_select %p430, %s29, 1
        %p432 = scmp.lt.s32.totalorder %s429, 23
        %s433 = scalar_select %p432, %s429, 23
        %s434 = smul.addr %s431, 24
        %s435 = sadd.s32 %s433, %s434
        %s436 = smul.addr %s435, 8
        %s437 = scalar_lea.vmem %s0, %s436
        %s438 = smul.u32 8, %s30
        %s439 = smul.u32 8, %s30
        %p440 = scmp.lt.s32.totalorder %s29, 1
        %s441 = scalar_select %p440, %s29, 1
        %p442 = scmp.lt.s32.totalorder %s439, 23
        %s443 = scalar_select %p442, %s439, 23
        %s444 = smul.addr %s441, 24
        %s445 = sadd.s32 %s443, %s444
        %s446 = smul.addr %s445, 8
        %s447 = scalar_lea.vmem %s1, %s446
        %s448 = smul.u32 8, %s30
        %p449 = scmp.eq.s32.totalorder %s30, 0
        // Predicated region
        $region65: #{tpu_custom_call.1} parent=63 // pred_check
          %p450 = pneg %p449
        $region66: #{tpu_custom_call.1} parent=63 // pred_check_branch
          %452 = sbr.rel (%p450) target = $region68
        $region67: #{tpu_custom_call.1} parent=63 // pred_region
          %453 = vst [vmem:[#allocation2] sm:$0xff] 0.0
          %454 = vst [vmem:[#allocation3] sm:$0xff] 0.0
        $region68: #{tpu_custom_call.1} parent=63 // pred_fallthru
          _
        %v455 = vld [vmem:[%s437] sm:$0xff]
        %v456 = vld [vmem:[%s437 + $0x8] sm:$0xff]
        %v457 = vld [vmem:[%s437 + $0x10] sm:$0xff]
        %v458 = vld [vmem:[%s437 + $0x18] sm:$0xff]
        %v459 = vld [vmem:[%s437 + $0x20] sm:$0xff]
        %v460 = vld [vmem:[%s437 + $0x28] sm:$0xff]
        %v461 = vld [vmem:[%s437 + $0x30] sm:$0xff]
        %v462 = vld [vmem:[%s437 + $0x38] sm:$0xff]
        %v463 = vld [vmem:[%s2] sm:$0xff]
        %v464 = vld [vmem:[%s2 + $0x8] sm:$0xff]
        %v465 = vld [vmem:[%s4] sm:$0xf]
        %v467 = vlaneseq
        %v468 = vshrl.u32 %v467, 7
        %v469 = vsub.s32 0, %v468
        %v470 = vrot.slane %v465, %v469
        %v471 = vlaneseq
        %v472 = vshrl.u32 %v471, 7
        %v473 = vsub.s32 1, %v472
        %v474 = vrot.slane %v465, %v473
        %v475 = vlaneseq
        %v476 = vshrl.u32 %v475, 7
        %v477 = vsub.s32 2, %v476
        %v478 = vrot.slane %v465, %v477
        %v479 = vlaneseq
        %v480 = vshrl.u32 %v479, 7
        %v481 = vsub.s32 3, %v480
        %v482 = vrot.slane %v465, %v481
        %v489 = vcombine.high %v463, %v463
        %v490 = vcombine.high %v464, %v464
        %vm491 = vcmask 31744
        %v493 = vsel %vm491, %v455, 0
        %v496 = vsel %vm491, %v456, 0
        %v499 = vsel %vm491, %v457, 0
        %v502 = vsel %vm491, %v458, 0
        %v505 = vsel %vm491, %v459, 0
        %v508 = vsel %vm491, %v460, 0
        %v511 = vsel %vm491, %v461, 0
        %v514 = vsel %vm491, %v462, 0
        %vm516 = vcmask 1043456
        %v517 = vsel %vm516, %v463, 0
        %v519 = vsel %vm516, %v489, 0
        %v521 = vsel %vm516, %v464, 0
        %v523 = vsel %vm516, %v490, 0
        %525 = vmatprep.subr.mxu0 %v519
        %526 = vmatpush1.msra.mxu0 %v517
        %527 = vmatprep.subr.mxu0 0.0
        %528 = vmatpush1.msra.mxu0 0.0
        %529 = vmatprep.subr.mxu0 0.0
        %530 = vmatpush1.msra.mxu0 0.0
        %531 = vmatprep.subr.mxu0 0.0
        %532 = vmatpush1.msra.mxu0 0.0
        %533 = vmatprep.subr.mxu0 0.0
        %534 = vmatpush1.msra.mxu0 0.0
        %535 = vmatprep.subr.mxu0 0.0
        %536 = vmatpush1.msra.mxu0 0.0
        %537 = vmatprep.subr.mxu0 0.0
        %538 = vmatpush1.msra.mxu0 0.0
        %539 = vmatprep.subr.mxu0 0.0
        %540 = vmatpush1.msra.mxu0 0.0
        %541 = vmatprep.subr.mxu0 0.0
        %542 = vmatpush1.msra.mxu0 0.0
        %543 = vmatprep.subr.mxu0 0.0
        %544 = vmatpush1.msra.mxu0 0.0
        %545 = vmatprep.subr.mxu0 0.0
        %546 = vmatpush1.msra.mxu0 0.0
        %547 = vmatprep.subr.mxu0 0.0
        %548 = vmatpush1.msra.mxu0 0.0
        %549 = vmatprep.subr.mxu0 0.0
        %550 = vmatpush1.msra.mxu0 0.0
        %551 = vmatprep.subr.mxu0 0.0
        %552 = vmatpush1.msra.mxu0 0.0
        %553 = vmatprep.subr.mxu0 0.0
        %554 = vmatpush1.msra.mxu0 0.0
        %555 = vmatprep.subr.mxu0 0.0
        %556 = vmatpush1.msra.mxu0 0.0
        %557 = vmatprep.subr.mxu0 0.0
        %558 = vmatpush1.msra.mxu0 0.0
        %559 = vmatprep.subr.mxu0 0.0
        %560 = vmatpush1.msra.mxu0 0.0
        %561 = vmatprep.subr.mxu0 0.0
        %562 = vmatpush1.msra.mxu0 0.0
        %563 = vmatprep.subr.mxu0 0.0
        %564 = vmatpush1.msra.mxu0 0.0
        %565 = vmatprep.subr.mxu0 0.0
        %566 = vmatpush1.msra.mxu0 0.0
        %567 = vmatprep.subr.mxu0 0.0
        %568 = vmatpush1.msra.mxu0 0.0
        %569 = vmatprep.subr.mxu0 0.0
        %570 = vmatpush1.msra.mxu0 0.0
        %571 = vmatprep.subr.mxu0 0.0
        %572 = vmatpush1.msra.mxu0 0.0
        %573 = vmatprep.subr.mxu0 0.0
        %574 = vmatpush1.msra.mxu0 0.0
        %575 = vmatprep.subr.mxu0 0.0
        %576 = vmatpush1.msra.mxu0 0.0
        %577 = vmatprep.subr.mxu0 0.0
        %578 = vmatpush1.msra.mxu0 0.0
        %579 = vmatprep.subr.mxu0 0.0
        %580 = vmatpush1.msra.mxu0 0.0
        %581 = vmatprep.subr.mxu0 0.0
        %582 = vmatpush1.msra.mxu0 0.0
        %583 = vmatprep.subr.mxu0 0.0
        %584 = vmatpush1.msra.mxu0 0.0
        %585 = vmatprep.subr.mxu0 0.0
        %586 = vmatpush1.msra.mxu0 0.0
        %587 = vmatprep.subr.mxu0 0.0
        %588 = vmatpush1.msra.mxu0 0.0
        %589 = vmatprep.mubr.f32.mxu0 0.0
        %590 = vmatmul.mubr.f32.gmra.mrb[0].mxu0 %v493
        %v591 = vpop.f32.mrb[0].mxu0
        %v592 = vadd.f32 %v470, %v591
        %v593 = vpop.f32.mrb[0].mxu0
        %v594 = vadd.f32 %v474, %v593
        %595 = vmatprep.mubr.f32.mxu0 0.0
        %596 = vmatmul.mubr.f32.gmra.mrb[0].mxu0 %v496
        %v597 = vpop.f32.mrb[0].mxu0
        %v598 = vadd.f32 %v470, %v597
        %v599 = vpop.f32.mrb[0].mxu0
        %v600 = vadd.f32 %v474, %v599
        %601 = vmatprep.mubr.f32.mxu0 0.0
        %602 = vmatmul.mubr.f32.gmra.mrb[0].mxu0 %v499
        %v603 = vpop.f32.mrb[0].mxu0
        %v604 = vadd.f32 %v470, %v603
        %v605 = vpop.f32.mrb[0].mxu0
        %v606 = vadd.f32 %v474, %v605
        %607 = vmatprep.mubr.f32.mxu0 0.0
        %608 = vmatmul.mubr.f32.gmra.mrb[0].mxu0 %v502
        %v609 = vpop.f32.mrb[0].mxu0
        %v610 = vadd.f32 %v470, %v609
        %v611 = vpop.f32.mrb[0].mxu0
        %v612 = vadd.f32 %v474, %v611
        %613 = vmatprep.mubr.f32.mxu0 0.0
        %614 = vmatmul.mubr.f32.gmra.mrb[0].mxu0 %v505
        %v615 = vpop.f32.mrb[0].mxu0
        %v616 = vadd.f32 %v470, %v615
        %v617 = vpop.f32.mrb[0].mxu0
        %v618 = vadd.f32 %v474, %v617
        %619 = vmatprep.mubr.f32.mxu0 0.0
        %620 = vmatmul.mubr.f32.gmra.mrb[0].mxu0 %v508
        %v621 = vpop.f32.mrb[0].mxu0
        %v622 = vadd.f32 %v470, %v621
        %v623 = vpop.f32.mrb[0].mxu0
        %v624 = vadd.f32 %v474, %v623
        %625 = vmatprep.mubr.f32.mxu0 0.0
        %626 = vmatmul.mubr.f32.gmra.mrb[0].mxu0 %v511
        %v627 = vpop.f32.mrb[0].mxu0
        %v628 = vadd.f32 %v470, %v627
        %v629 = vpop.f32.mrb[0].mxu0
        %v630 = vadd.f32 %v474, %v629
        %631 = vmatprep.mubr.f32.mxu0 0.0
        %632 = vmatmul.mubr.f32.gmra.mrb[0].mxu0 %v514
        %v633 = vpop.f32.mrb[0].mxu0
        %v634 = vadd.f32 %v470, %v633
        %v635 = vpop.f32.mrb[0].mxu0
        %v636 = vadd.f32 %v474, %v635
        %637 = vdwg.mxu0
        %638 = vmatprep.subr.mxu0 %v523
        %639 = vmatpush1.msra.mxu0 %v521
        %640 = vmatprep.subr.mxu0 0.0
        %641 = vmatpush1.msra.mxu0 0.0
        %642 = vmatprep.subr.mxu0 0.0
        %643 = vmatpush1.msra.mxu0 0.0
        %644 = vmatprep.subr.mxu0 0.0
        %645 = vmatpush1.msra.mxu0 0.0
        %646 = vmatprep.subr.mxu0 0.0
        %647 = vmatpush1.msra.mxu0 0.0
        %648 = vmatprep.subr.mxu0 0.0
        %649 = vmatpush1.msra.mxu0 0.0
        %650 = vmatprep.subr.mxu0 0.0
        %651 = vmatpush1.msra.mxu0 0.0
        %652 = vmatprep.subr.mxu0 0.0
        %653 = vmatpush1.msra.mxu0 0.0
        %654 = vmatprep.subr.mxu0 0.0
        %655 = vmatpush1.msra.mxu0 0.0
        %656 = vmatprep.subr.mxu0 0.0
        %657 = vmatpush1.msra.mxu0 0.0
        %658 = vmatprep.subr.mxu0 0.0
        %659 = vmatpush1.msra.mxu0 0.0
        %660 = vmatprep.subr.mxu0 0.0
        %661 = vmatpush1.msra.mxu0 0.0
        %662 = vmatprep.subr.mxu0 0.0
        %663 = vmatpush1.msra.mxu0 0.0
        %664 = vmatprep.subr.mxu0 0.0
        %665 = vmatpush1.msra.mxu0 0.0
        %666 = vmatprep.subr.mxu0 0.0
        %667 = vmatpush1.msra.mxu0 0.0
        %668 = vmatprep.subr.mxu0 0.0
        %669 = vmatpush1.msra.mxu0 0.0
        %670 = vmatprep.subr.mxu0 0.0
        %671 = vmatpush1.msra.mxu0 0.0
        %672 = vmatprep.subr.mxu0 0.0
        %673 = vmatpush1.msra.mxu0 0.0
        %674 = vmatprep.subr.mxu0 0.0
        %675 = vmatpush1.msra.mxu0 0.0
        %676 = vmatprep.subr.mxu0 0.0
        %677 = vmatpush1.msra.mxu0 0.0
        %678 = vmatprep.subr.mxu0 0.0
        %679 = vmatpush1.msra.mxu0 0.0
        %680 = vmatprep.subr.mxu0 0.0
        %681 = vmatpush1.msra.mxu0 0.0
        %682 = vmatprep.subr.mxu0 0.0
        %683 = vmatpush1.msra.mxu0 0.0
        %684 = vmatprep.subr.mxu0 0.0
        %685 = vmatpush1.msra.mxu0 0.0
        %686 = vmatprep.subr.mxu0 0.0
        %687 = vmatpush1.msra.mxu0 0.0
        %688 = vmatprep.subr.mxu0 0.0
        %689 = vmatpush1.msra.mxu0 0.0
        %690 = vmatprep.subr.mxu0 0.0
        %691 = vmatpush1.msra.mxu0 0.0
        %692 = vmatprep.subr.mxu0 0.0
        %693 = vmatpush1.msra.mxu0 0.0
        %694 = vmatprep.subr.mxu0 0.0
        %695 = vmatpush1.msra.mxu0 0.0
        %696 = vmatprep.subr.mxu0 0.0
        %697 = vmatpush1.msra.mxu0 0.0
        %698 = vmatprep.subr.mxu0 0.0
        %699 = vmatpush1.msra.mxu0 0.0
        %700 = vmatprep.subr.mxu0 0.0
        %701 = vmatpush1.msra.mxu0 0.0
        %702 = vmatprep.mubr.f32.mxu0 0.0
        %703 = vmatmul.mubr.f32.gmra.mrb[0].mxu0 %v493
        %v704 = vpop.f32.mrb[0].mxu0
        %v705 = vadd.f32 %v478, %v704
        %v706 = vpop.f32.mrb[0].mxu0
        %v707 = vadd.f32 %v482, %v706
        %708 = vmatprep.mubr.f32.mxu0 0.0
        %709 = vmatmul.mubr.f32.gmra.mrb[0].mxu0 %v496
        %v710 = vpop.f32.mrb[0].mxu0
        %v711 = vadd.f32 %v478, %v710
        %v712 = vpop.f32.mrb[0].mxu0
        %v713 = vadd.f32 %v482, %v712
        %714 = vmatprep.mubr.f32.mxu0 0.0
        %715 = vmatmul.mubr.f32.gmra.mrb[0].mxu0 %v499
        %v716 = vpop.f32.mrb[0].mxu0
        %v717 = vadd.f32 %v478, %v716
        %v718 = vpop.f32.mrb[0].mxu0
        %v719 = vadd.f32 %v482, %v718
        %720 = vmatprep.mubr.f32.mxu0 0.0
        %721 = vmatmul.mubr.f32.gmra.mrb[0].mxu0 %v502
        %v722 = vpop.f32.mrb[0].mxu0
        %v723 = vadd.f32 %v478, %v722
        %v724 = vpop.f32.mrb[0].mxu0
        %v725 = vadd.f32 %v482, %v724
        %726 = vmatprep.mubr.f32.mxu0 0.0
        %727 = vmatmul.mubr.f32.gmra.mrb[0].mxu0 %v505
        %v728 = vpop.f32.mrb[0].mxu0
        %v729 = vadd.f32 %v478, %v728
        %v730 = vpop.f32.mrb[0].mxu0
        %v731 = vadd.f32 %v482, %v730
        %732 = vmatprep.mubr.f32.mxu0 0.0
        %733 = vmatmul.mubr.f32.gmra.mrb[0].mxu0 %v508
        %v734 = vpop.f32.mrb[0].mxu0
        %v735 = vadd.f32 %v478, %v734
        %v736 = vpop.f32.mrb[0].mxu0
        %v737 = vadd.f32 %v482, %v736
        %738 = vmatprep.mubr.f32.mxu0 0.0
        %739 = vmatmul.mubr.f32.gmra.mrb[0].mxu0 %v511
        %v740 = vpop.f32.mrb[0].mxu0
        %v741 = vadd.f32 %v478, %v740
        %v742 = vpop.f32.mrb[0].mxu0
        %v743 = vadd.f32 %v482, %v742
        %744 = vmatprep.mubr.f32.mxu0 0.0
        %745 = vmatmul.mubr.f32.gmra.mrb[0].mxu0 %v514
        %v746 = vpop.f32.mrb[0].mxu0
        %v747 = vadd.f32 %v478, %v746
        %v748 = vpop.f32.mrb[0].mxu0
        %v749 = vadd.f32 %v482, %v748
        %750 = vdwg.mxu0
        %751 = vst [vmem:[#allocation4] sm:$0xff] %v592
        %752 = vst [vmem:[#allocation4 + $0x8] sm:$0xff] %v594
        %753 = vst [vmem:[#allocation4 + $0x10] sm:$0xff] %v705
        %754 = vst [vmem:[#allocation4 + $0x18] sm:$0xff] %v707
        %755 = vst [vmem:[#allocation4 + $0x20] sm:$0xff] %v598
        %756 = vst [vmem:[#allocation4 + $0x28] sm:$0xff] %v600
        %757 = vst [vmem:[#allocation4 + $0x30] sm:$0xff] %v711
        %758 = vst [vmem:[#allocation4 + $0x38] sm:$0xff] %v713
        %759 = vst [vmem:[#allocation4 + $0x40] sm:$0xff] %v604
        %760 = vst [vmem:[#allocation4 + $0x48] sm:$0xff] %v606
        %761 = vst [vmem:[#allocation4 + $0x50] sm:$0xff] %v717
        %762 = vst [vmem:[#allocation4 + $0x58] sm:$0xff] %v719
        %763 = vst [vmem:[#allocation4 + $0x60] sm:$0xff] %v610
        %764 = vst [vmem:[#allocation4 + $0x68] sm:$0xff] %v612
        %765 = vst [vmem:[#allocation4 + $0x70] sm:$0xff] %v723
        %766 = vst [vmem:[#allocation4 + $0x78] sm:$0xff] %v725
        %767 = vst [vmem:[#allocation4 + $0x80] sm:$0xff] %v616
        %768 = vst [vmem:[#allocation4 + $0x88] sm:$0xff] %v618
        %769 = vst [vmem:[#allocation4 + $0x90] sm:$0xff] %v729
        %770 = vst [vmem:[#allocation4 + $0x98] sm:$0xff] %v731
        %771 = vst [vmem:[#allocation4 + $0xa0] sm:$0xff] %v622
        %772 = vst [vmem:[#allocation4 + $0xa8] sm:$0xff] %v624
        %773 = vst [vmem:[#allocation4 + $0xb0] sm:$0xff] %v735
        %774 = vst [vmem:[#allocation4 + $0xb8] sm:$0xff] %v737
        %775 = vst [vmem:[#allocation4 + $0xc0] sm:$0xff] %v628
        %776 = vst [vmem:[#allocation4 + $0xc8] sm:$0xff] %v630
        %777 = vst [vmem:[#allocation4 + $0xd0] sm:$0xff] %v741
        %778 = vst [vmem:[#allocation4 + $0xd8] sm:$0xff] %v743
        %779 = vst [vmem:[#allocation4 + $0xe0] sm:$0xff] %v634
        %780 = vst [vmem:[#allocation4 + $0xe8] sm:$0xff] %v636
        %781 = vst [vmem:[#allocation4 + $0xf0] sm:$0xff] %v747
        %782 = vst [vmem:[#allocation4 + $0xf8] sm:$0xff] %v749
        %v783 = vld [vmem:[#allocation2] sm:$0xff]
        %v784 = vld [vmem:[#allocation3] sm:$0xff]
        %s785 = smul.u32 0, 4
        %s786 = smul.addr %s785, 8
        %s787 = scalar_lea.vmem [#allocation4], %s786
        %v788 = vld [vmem:[%s787] sm:$0xff]
        %v789 = vld [vmem:[%s787 + $0x8] sm:$0xff]
        %v790 = vld [vmem:[%s787 + $0x10] sm:$0xff]
        %v791 = vld [vmem:[%s787 + $0x18] sm:$0xff]
        %v792 = vld [vmem:[%s3] sm:$0xff]
        %v793 = vld [vmem:[%s3 + $0x8] sm:$0xff]
        %v794 = vld [vmem:[%s3 + $0x10] sm:$0xff]
        %v795 = vld [vmem:[%s3 + $0x18] sm:$0xff]
        %v796 = vld [vmem:[%s3 + $0x20] sm:$0xff]
        %v797 = vld [vmem:[%s3 + $0x28] sm:$0xff]
        %v798 = vld [vmem:[%s3 + $0x30] sm:$0xff]
        %v799 = vld [vmem:[%s3 + $0x38] sm:$0xff]
        %v800 = vld [vmem:[%s3 + $0x40] sm:$0xff]
        %v801 = vld [vmem:[%s3 + $0x48] sm:$0xff]
        %v802 = vld [vmem:[%s3 + $0x50] sm:$0xff]
        %v803 = vld [vmem:[%s3 + $0x58] sm:$0xff]
        %v804 = vld [vmem:[%s3 + $0x60] sm:$0xff]
        %v805 = vld [vmem:[%s3 + $0x68] sm:$0xff]
        %v806 = vld [vmem:[%s3 + $0x70] sm:$0xff]
        %v807 = vld [vmem:[%s3 + $0x78] sm:$0xff]
        %v808 = vld [vmem:[%s3 + $0x80] sm:$0xff]
        %v809 = vld [vmem:[%s3 + $0x88] sm:$0xff]
        %v810 = vld [vmem:[%s3 + $0x90] sm:$0xff]
        %v811 = vld [vmem:[%s3 + $0x98] sm:$0xff]
        %v812 = vld [vmem:[%s3 + $0xa0] sm:$0xff]
        %v813 = vld [vmem:[%s3 + $0xa8] sm:$0xff]
        %v814 = vld [vmem:[%s3 + $0xb0] sm:$0xff]
        %v815 = vld [vmem:[%s3 + $0xb8] sm:$0xff]
        %v816 = vld [vmem:[%s3 + $0xc0] sm:$0xff]
        %v817 = vld [vmem:[%s3 + $0xc8] sm:$0xff]
        %v818 = vld [vmem:[%s3 + $0xd0] sm:$0xff]
        %v819 = vld [vmem:[%s3 + $0xd8] sm:$0xff]
        %v820 = vld [vmem:[%s3 + $0xe0] sm:$0xff]
        %v821 = vld [vmem:[%s3 + $0xe8] sm:$0xff]
        %v822 = vld [vmem:[%s3 + $0xf0] sm:$0xff]
        %v823 = vld [vmem:[%s3 + $0xf8] sm:$0xff]
        %v824 = vld [vmem:[%s3 + $0x100] sm:$0xff]
        %v825 = vld [vmem:[%s3 + $0x108] sm:$0xff]
        %v826 = vld [vmem:[%s3 + $0x110] sm:$0xff]
        %v827 = vld [vmem:[%s3 + $0x118] sm:$0xff]
        %v828 = vld [vmem:[%s3 + $0x120] sm:$0xff]
        %v829 = vld [vmem:[%s3 + $0x128] sm:$0xff]
        %v830 = vld [vmem:[%s3 + $0x130] sm:$0xff]
        %v831 = vld [vmem:[%s3 + $0x138] sm:$0xff]
        %v832 = vld [vmem:[%s3 + $0x140] sm:$0xff]
        %v833 = vld [vmem:[%s3 + $0x148] sm:$0xff]
        %v834 = vld [vmem:[%s3 + $0x150] sm:$0xff]
        %v835 = vld [vmem:[%s3 + $0x158] sm:$0xff]
        %v836 = vld [vmem:[%s3 + $0x160] sm:$0xff]
        %v837 = vld [vmem:[%s3 + $0x168] sm:$0xff]
        %v838 = vld [vmem:[%s3 + $0x170] sm:$0xff]
        %v839 = vld [vmem:[%s3 + $0x178] sm:$0xff]
        %v840 = vld [vmem:[%s3 + $0x180] sm:$0xff]
        %v841 = vld [vmem:[%s3 + $0x188] sm:$0xff]
        %v842 = vld [vmem:[%s3 + $0x190] sm:$0xff]
        %v843 = vld [vmem:[%s3 + $0x198] sm:$0xff]
        %v844 = vld [vmem:[%s3 + $0x1a0] sm:$0xff]
        %v845 = vld [vmem:[%s3 + $0x1a8] sm:$0xff]
        %v846 = vld [vmem:[%s3 + $0x1b0] sm:$0xff]
        %v847 = vld [vmem:[%s3 + $0x1b8] sm:$0xff]
        %v848 = vld [vmem:[%s3 + $0x1c0] sm:$0xff]
        %v849 = vld [vmem:[%s3 + $0x1c8] sm:$0xff]
        %v850 = vld [vmem:[%s3 + $0x1d0] sm:$0xff]
        %v851 = vld [vmem:[%s3 + $0x1d8] sm:$0xff]
        %v852 = vld [vmem:[%s3 + $0x1e0] sm:$0xff]
        %v853 = vld [vmem:[%s3 + $0x1e8] sm:$0xff]
        %v854 = vld [vmem:[%s3 + $0x1f0] sm:$0xff]
        %v855 = vld [vmem:[%s3 + $0x1f8] sm:$0xff]
        %856 = vmatprep.subr.mxu0 %v793
        %857 = vmatpush1.msra.mxu0 %v792
        %858 = vmatprep.subr.mxu0 %v797
        %859 = vmatpush1.msra.mxu0 %v796
        %860 = vmatprep.subr.mxu0 %v801
        %861 = vmatpush1.msra.mxu0 %v800
        %862 = vmatprep.subr.mxu0 %v805
        %863 = vmatpush1.msra.mxu0 %v804
        %864 = vmatprep.subr.mxu0 %v809
        %865 = vmatpush1.msra.mxu0 %v808
        %866 = vmatprep.subr.mxu0 %v813
        %867 = vmatpush1.msra.mxu0 %v812
        %868 = vmatprep.subr.mxu0 %v817
        %869 = vmatpush1.msra.mxu0 %v816
        %870 = vmatprep.subr.mxu0 %v821
        %871 = vmatpush1.msra.mxu0 %v820
        %872 = vmatprep.subr.mxu0 %v825
        %873 = vmatpush1.msra.mxu0 %v824
        %874 = vmatprep.subr.mxu0 %v829
        %875 = vmatpush1.msra.mxu0 %v828
        %876 = vmatprep.subr.mxu0 %v833
        %877 = vmatpush1.msra.mxu0 %v832
        %878 = vmatprep.subr.mxu0 %v837
        %879 = vmatpush1.msra.mxu0 %v836
        %880 = vmatprep.subr.mxu0 %v841
        %881 = vmatpush1.msra.mxu0 %v840
        %882 = vmatprep.subr.mxu0 %v845
        %883 = vmatpush1.msra.mxu0 %v844
        %884 = vmatprep.subr.mxu0 %v849
        %885 = vmatpush1.msra.mxu0 %v848
        %886 = vmatprep.subr.mxu0 %v853
        %887 = vmatpush1.msra.mxu0 %v852
        %888 = vmatprep.subr.mxu0 0.0
        %889 = vmatpush1.msra.mxu0 0.0
        %890 = vmatprep.subr.mxu0 0.0
        %891 = vmatpush1.msra.mxu0 0.0
        %892 = vmatprep.subr.mxu0 0.0
        %893 = vmatpush1.msra.mxu0 0.0
        %894 = vmatprep.subr.mxu0 0.0
        %895 = vmatpush1.msra.mxu0 0.0
        %896 = vmatprep.subr.mxu0 0.0
        %897 = vmatpush1.msra.mxu0 0.0
        %898 = vmatprep.subr.mxu0 0.0
        %899 = vmatpush1.msra.mxu0 0.0
        %900 = vmatprep.subr.mxu0 0.0
        %901 = vmatpush1.msra.mxu0 0.0
        %902 = vmatprep.subr.mxu0 0.0
        %903 = vmatpush1.msra.mxu0 0.0
        %904 = vmatprep.subr.mxu0 0.0
        %905 = vmatpush1.msra.mxu0 0.0
        %906 = vmatprep.subr.mxu0 0.0
        %907 = vmatpush1.msra.mxu0 0.0
        %908 = vmatprep.subr.mxu0 0.0
        %909 = vmatpush1.msra.mxu0 0.0
        %910 = vmatprep.subr.mxu0 0.0
        %911 = vmatpush1.msra.mxu0 0.0
        %912 = vmatprep.subr.mxu0 0.0
        %913 = vmatpush1.msra.mxu0 0.0
        %914 = vmatprep.subr.mxu0 0.0
        %915 = vmatpush1.msra.mxu0 0.0
        %916 = vmatprep.subr.mxu0 0.0
        %917 = vmatpush1.msra.mxu0 0.0
        %918 = vmatprep.subr.mxu0 0.0
        %919 = vmatpush1.msra.mxu0 0.0
        %920 = vmatprep.mubr.f32.mxu0 0.0
        %921 = vmatmul.mubr.f32.gmra.mrb[0].mxu0 %v783
        %v922 = vpop.f32.mrb[0].mxu0
        %v923 = vadd.f32 0.0, %v922
        %v924 = vpop.f32.mrb[0].mxu0
        %v925 = vadd.f32 0.0, %v924
        %926 = vdwg.mxu0
        %927 = vmatprep.subr.mxu0 %v795
        %928 = vmatpush1.msra.mxu0 %v794
        %929 = vmatprep.subr.mxu0 %v799
        %930 = vmatpush1.msra.mxu0 %v798
        %931 = vmatprep.subr.mxu0 %v803
        %932 = vmatpush1.msra.mxu0 %v802
        %933 = vmatprep.subr.mxu0 %v807
        %934 = vmatpush1.msra.mxu0 %v806
        %935 = vmatprep.subr.mxu0 %v811
        %936 = vmatpush1.msra.mxu0 %v810
        %937 = vmatprep.subr.mxu0 %v815
        %938 = vmatpush1.msra.mxu0 %v814
        %939 = vmatprep.subr.mxu0 %v819
        %940 = vmatpush1.msra.mxu0 %v818
        %941 = vmatprep.subr.mxu0 %v823
        %942 = vmatpush1.msra.mxu0 %v822
        %943 = vmatprep.subr.mxu0 %v827
        %944 = vmatpush1.msra.mxu0 %v826
        %945 = vmatprep.subr.mxu0 %v831
        %946 = vmatpush1.msra.mxu0 %v830
        %947 = vmatprep.subr.mxu0 %v835
        %948 = vmatpush1.msra.mxu0 %v834
        %949 = vmatprep.subr.mxu0 %v839
        %950 = vmatpush1.msra.mxu0 %v838
        %951 = vmatprep.subr.mxu0 %v843
        %952 = vmatpush1.msra.mxu0 %v842
        %953 = vmatprep.subr.mxu0 %v847
        %954 = vmatpush1.msra.mxu0 %v846
        %955 = vmatprep.subr.mxu0 %v851
        %956 = vmatpush1.msra.mxu0 %v850
        %957 = vmatprep.subr.mxu0 %v855
        %958 = vmatpush1.msra.mxu0 %v854
        %959 = vmatprep.subr.mxu0 0.0
        %960 = vmatpush1.msra.mxu0 0.0
        %961 = vmatprep.subr.mxu0 0.0
        %962 = vmatpush1.msra.mxu0 0.0
        %963 = vmatprep.subr.mxu0 0.0
        %964 = vmatpush1.msra.mxu0 0.0
        %965 = vmatprep.subr.mxu0 0.0
        %966 = vmatpush1.msra.mxu0 0.0
        %967 = vmatprep.subr.mxu0 0.0
        %968 = vmatpush1.msra.mxu0 0.0
        %969 = vmatprep.subr.mxu0 0.0
        %970 = vmatpush1.msra.mxu0 0.0
        %971 = vmatprep.subr.mxu0 0.0
        %972 = vmatpush1.msra.mxu0 0.0
        %973 = vmatprep.subr.mxu0 0.0
        %974 = vmatpush1.msra.mxu0 0.0
        %975 = vmatprep.subr.mxu0 0.0
        %976 = vmatpush1.msra.mxu0 0.0
        %977 = vmatprep.subr.mxu0 0.0
        %978 = vmatpush1.msra.mxu0 0.0
        %979 = vmatprep.subr.mxu0 0.0
        %980 = vmatpush1.msra.mxu0 0.0
        %981 = vmatprep.subr.mxu0 0.0
        %982 = vmatpush1.msra.mxu0 0.0
        %983 = vmatprep.subr.mxu0 0.0
        %984 = vmatpush1.msra.mxu0 0.0
        %985 = vmatprep.subr.mxu0 0.0
        %986 = vmatpush1.msra.mxu0 0.0
        %987 = vmatprep.subr.mxu0 0.0
        %988 = vmatpush1.msra.mxu0 0.0
        %989 = vmatprep.subr.mxu0 0.0
        %990 = vmatpush1.msra.mxu0 0.0
        %991 = vmatprep.mubr.f32.mxu0 0.0
        %992 = vmatmul.mubr.f32.gmra.mrb[0].mxu0 %v783
        %v993 = vpop.f32.mrb[0].mxu0
        %v994 = vadd.f32 0.0, %v993
        %v995 = vpop.f32.mrb[0].mxu0
        %v996 = vadd.f32 0.0, %v995
        %997 = vdwg.mxu0
        %v998 = vadd.f32 %v788, %v923
        %v999 = vadd.f32 %v789, %v925
        %v1000 = vadd.f32 %v790, %v994
        %v1001 = vadd.f32 %v791, %v996
        %v1002 = vmul.f32 %v998, 0.5
        %v1003 = vmul.f32 %v999, 0.5
        %v1004 = vmul.f32 %v1000, 0.5
        %v1005 = vtanh.pop %v1002
        %v1006 = vtanh.pop %v1003
        %v1007 = vtanh.pop %v1004
        %v1008 = vmul.f32 %v1005, 0.5
        %v1009 = vmul.f32 %v1006, 0.5
        %v1010 = vmul.f32 %v1007, 0.5
        %v1011 = vadd.f32 %v1008, 0.5
        %v1012 = vadd.f32 %v1009, 0.5
        %v1013 = vadd.f32 %v1010, 0.5
        %v1014 = vtanh.pop %v1001
        %v1015 = vmul.f32 %v1012, %v784
        %v1016 = vmul.f32 %v1011, %v1014
        %v1017 = vadd.f32 %v1015, %v1016
        %v1018 = vtanh.pop %v1017
        %v1019 = vmul.f32 %v1013, %v1018
        %v1020 = vld [vmem:[%s447] sm:$0xff]
        %1022 = vset.pattern.permute.xlu0 0
        %1023 = vperm.xlu0 %1022, %v1020
        %v1024 = vpop.permute.xlu0 %1023
        %v1026 = vmul.f32 %v1024, %v1019
        %v1027 = vsub.f32 1.0, %v1020
        %1029 = vset.pattern.permute.xlu0 0
        %1030 = vperm.xlu0 %1029, %v1027
        %v1031 = vpop.permute.xlu0 %1030
        %v1033 = vmul.f32 %v1031, %v783
        %v1034 = vadd.f32 %v1026, %v1033
        %1035 = vst [vmem:[#allocation2] sm:$0xff] %v1034
        %v1036 = vmul.f32 %v1024, %v1017
        %v1037 = vmul.f32 %v1031, %v784
        %v1038 = vadd.f32 %v1036, %v1037
        %1039 = vst [vmem:[#allocation3] sm:$0xff] %v1038
        %v1040 = vld [vmem:[#allocation2] sm:$0xff]
        %v1041 = vld [vmem:[#allocation3] sm:$0xff]
        %s1042 = smul.u32 1, 4
        %s1043 = smul.addr %s1042, 8
        %s1044 = scalar_lea.vmem [#allocation4], %s1043
        %v1045 = vld [vmem:[%s1044] sm:$0xff]
        %v1046 = vld [vmem:[%s1044 + $0x8] sm:$0xff]
        %v1047 = vld [vmem:[%s1044 + $0x10] sm:$0xff]
        %v1048 = vld [vmem:[%s1044 + $0x18] sm:$0xff]
        %v1049 = vld [vmem:[%s3] sm:$0xff]
        %v1050 = vld [vmem:[%s3 + $0x8] sm:$0xff]
        %v1051 = vld [vmem:[%s3 + $0x10] sm:$0xff]
        %v1052 = vld [vmem:[%s3 + $0x18] sm:$0xff]
        %v1053 = vld [vmem:[%s3 + $0x20] sm:$0xff]
        %v1054 = vld [vmem:[%s3 + $0x28] sm:$0xff]
        %v1055 = vld [vmem:[%s3 + $0x30] sm:$0xff]
        %v1056 = vld [vmem:[%s3 + $0x38] sm:$0xff]
        %v1057 = vld [vmem:[%s3 + $0x40] sm:$0xff]
        %v1058 = vld [vmem:[%s3 + $0x48] sm:$0xff]
        %v1059 = vld [vmem:[%s3 + $0x50] sm:$0xff]
        %v1060 = vld [vmem:[%s3 + $0x58] sm:$0xff]
        %v1061 = vld [vmem:[%s3 + $0x60] sm:$0xff]
        %v1062 = vld [vmem:[%s3 + $0x68] sm:$0xff]
        %v1063 = vld [vmem:[%s3 + $0x70] sm:$0xff]
        %v1064 = vld [vmem:[%s3 + $0x78] sm:$0xff]
        %v1065 = vld [vmem:[%s3 + $0x80] sm:$0xff]
        %v1066 = vld [vmem:[%s3 + $0x88] sm:$0xff]
        %v1067 = vld [vmem:[%s3 + $0x90] sm:$0xff]
        %v1068 = vld [vmem:[%s3 + $0x98] sm:$0xff]
        %v1069 = vld [vmem:[%s3 + $0xa0] sm:$0xff]
        %v1070 = vld [vmem:[%s3 + $0xa8] sm:$0xff]
        %v1071 = vld [vmem:[%s3 + $0xb0] sm:$0xff]
        %v1072 = vld [vmem:[%s3 + $0xb8] sm:$0xff]
        %v1073 = vld [vmem:[%s3 + $0xc0] sm:$0xff]
        %v1074 = vld [vmem:[%s3 + $0xc8] sm:$0xff]
        %v1075 = vld [vmem:[%s3 + $0xd0] sm:$0xff]
        %v1076 = vld [vmem:[%s3 + $0xd8] sm:$0xff]
        %v1077 = vld [vmem:[%s3 + $0xe0] sm:$0xff]
        %v1078 = vld [vmem:[%s3 + $0xe8] sm:$0xff]
        %v1079 = vld [vmem:[%s3 + $0xf0] sm:$0xff]
        %v1080 = vld [vmem:[%s3 + $0xf8] sm:$0xff]
        %v1081 = vld [vmem:[%s3 + $0x100] sm:$0xff]
        %v1082 = vld [vmem:[%s3 + $0x108] sm:$0xff]
        %v1083 = vld [vmem:[%s3 + $0x110] sm:$0xff]
        %v1084 = vld [vmem:[%s3 + $0x118] sm:$0xff]
        %v1085 = vld [vmem:[%s3 + $0x120] sm:$0xff]
        %v1086 = vld [vmem:[%s3 + $0x128] sm:$0xff]
        %v1087 = vld [vmem:[%s3 + $0x130] sm:$0xff]
        %v1088 = vld [vmem:[%s3 + $0x138] sm:$0xff]
        %v1089 = vld [vmem:[%s3 + $0x140] sm:$0xff]
        %v1090 = vld [vmem:[%s3 + $0x148] sm:$0xff]
        %v1091 = vld [vmem:[%s3 + $0x150] sm:$0xff]
        %v1092 = vld [vmem:[%s3 + $0x158] sm:$0xff]
        %v1093 = vld [vmem:[%s3 + $0x160] sm:$0xff]
        %v1094 = vld [vmem:[%s3 + $0x168] sm:$0xff]
        %v1095 = vld [vmem:[%s3 + $0x170] sm:$0xff]
        %v1096 = vld [vmem:[%s3 + $0x178] sm:$0xff]
        %v1097 = vld [vmem:[%s3 + $0x180] sm:$0xff]
        %v1098 = vld [vmem:[%s3 + $0x188] sm:$0xff]
        %v1099 = vld [vmem:[%s3 + $0x190] sm:$0xff]
        %v1100 = vld [vmem:[%s3 + $0x198] sm:$0xff]
        %v1101 = vld [vmem:[%s3 + $0x1a0] sm:$0xff]
        %v1102 = vld [vmem:[%s3 + $0x1a8] sm:$0xff]
        %v1103 = vld [vmem:[%s3 + $0x1b0] sm:$0xff]
        %v1104 = vld [vmem:[%s3 + $0x1b8] sm:$0xff]
        %v1105 = vld [vmem:[%s3 + $0x1c0] sm:$0xff]
        %v1106 = vld [vmem:[%s3 + $0x1c8] sm:$0xff]
        %v1107 = vld [vmem:[%s3 + $0x1d0] sm:$0xff]
        %v1108 = vld [vmem:[%s3 + $0x1d8] sm:$0xff]
        %v1109 = vld [vmem:[%s3 + $0x1e0] sm:$0xff]
        %v1110 = vld [vmem:[%s3 + $0x1e8] sm:$0xff]
        %v1111 = vld [vmem:[%s3 + $0x1f0] sm:$0xff]
        %v1112 = vld [vmem:[%s3 + $0x1f8] sm:$0xff]
        %1113 = vmatprep.subr.mxu0 %v1050
        %1114 = vmatpush1.msra.mxu0 %v1049
        %1115 = vmatprep.subr.mxu0 %v1054
        %1116 = vmatpush1.msra.mxu0 %v1053
        %1117 = vmatprep.subr.mxu0 %v1058
        %1118 = vmatpush1.msra.mxu0 %v1057
        %1119 = vmatprep.subr.mxu0 %v1062
        %1120 = vmatpush1.msra.mxu0 %v1061
        %1121 = vmatprep.subr.mxu0 %v1066
        %1122 = vmatpush1.msra.mxu0 %v1065
        %1123 = vmatprep.subr.mxu0 %v1070
        %1124 = vmatpush1.msra.mxu0 %v1069
        %1125 = vmatprep.subr.mxu0 %v1074
        %1126 = vmatpush1.msra.mxu0 %v1073
        %1127 = vmatprep.subr.mxu0 %v1078
        %1128 = vmatpush1.msra.mxu0 %v1077
        %1129 = vmatprep.subr.mxu0 %v1082
        %1130 = vmatpush1.msra.mxu0 %v1081
        %1131 = vmatprep.subr.mxu0 %v1086
        %1132 = vmatpush1.msra.mxu0 %v1085
        %1133 = vmatprep.subr.mxu0 %v1090
        %1134 = vmatpush1.msra.mxu0 %v1089
        %1135 = vmatprep.subr.mxu0 %v1094
        %1136 = vmatpush1.msra.mxu0 %v1093
        %1137 = vmatprep.subr.mxu0 %v1098
        %1138 = vmatpush1.msra.mxu0 %v1097
        %1139 = vmatprep.subr.mxu0 %v1102
        %1140 = vmatpush1.msra.mxu0 %v1101
        %1141 = vmatprep.subr.mxu0 %v1106
        %1142 = vmatpush1.msra.mxu0 %v1105
        %1143 = vmatprep.subr.mxu0 %v1110
        %1144 = vmatpush1.msra.mxu0 %v1109
        %1145 = vmatprep.subr.mxu0 0.0
        %1146 = vmatpush1.msra.mxu0 0.0
        %1147 = vmatprep.subr.mxu0 0.0
        %1148 = vmatpush1.msra.mxu0 0.0
        %1149 = vmatprep.subr.mxu0 0.0
        %1150 = vmatpush1.msra.mxu0 0.0
        %1151 = vmatprep.subr.mxu0 0.0
        %1152 = vmatpush1.msra.mxu0 0.0
        %1153 = vmatprep.subr.mxu0 0.0
        %1154 = vmatpush1.msra.mxu0 0.0
        %1155 = vmatprep.subr.mxu0 0.0
        %1156 = vmatpush1.msra.mxu0 0.0
        %1157 = vmatprep.subr.mxu0 0.0
        %1158 = vmatpush1.msra.mxu0 0.0
        %1159 = vmatprep.subr.mxu0 0.0
        %1160 = vmatpush1.msra.mxu0 0.0
        %1161 = vmatprep.subr.mxu0 0.0
        %1162 = vmatpush1.msra.mxu0 0.0
        %1163 = vmatprep.subr.mxu0 0.0
        %1164 = vmatpush1.msra.mxu0 0.0
        %1165 = vmatprep.subr.mxu0 0.0
        %1166 = vmatpush1.msra.mxu0 0.0
        %1167 = vmatprep.subr.mxu0 0.0
        %1168 = vmatpush1.msra.mxu0 0.0
        %1169 = vmatprep.subr.mxu0 0.0
        %1170 = vmatpush1.msra.mxu0 0.0
        %1171 = vmatprep.subr.mxu0 0.0
        %1172 = vmatpush1.msra.mxu0 0.0
        %1173 = vmatprep.subr.mxu0 0.0
        %1174 = vmatpush1.msra.mxu0 0.0
        %1175 = vmatprep.subr.mxu0 0.0
        %1176 = vmatpush1.msra.mxu0 0.0
        %1177 = vmatprep.mubr.f32.mxu0 0.0
        %1178 = vmatmul.mubr.f32.gmra.mrb[0].mxu0 %v1040
        %v1179 = vpop.f32.mrb[0].mxu0
        %v1180 = vadd.f32 0.0, %v1179
        %v1181 = vpop.f32.mrb[0].mxu0
        %v1182 = vadd.f32 0.0, %v1181
        %1183 = vdwg.mxu0
        %1184 = vmatprep.subr.mxu0 %v1052
        %1185 = vmatpush1.msra.mxu0 %v1051
        %1186 = vmatprep.subr.mxu0 %v1056
        %1187 = vmatpush1.msra.mxu0 %v1055
        %1188 = vmatprep.subr.mxu0 %v1060
        %1189 = vmatpush1.msra.mxu0 %v1059
        %1190 = vmatprep.subr.mxu0 %v1064
        %1191 = vmatpush1.msra.mxu0 %v1063
        %1192 = vmatprep.subr.mxu0 %v1068
        %1193 = vmatpush1.msra.mxu0 %v1067
        %1194 = vmatprep.subr.mxu0 %v1072
        %1195 = vmatpush1.msra.mxu0 %v1071
        %1196 = vmatprep.subr.mxu0 %v1076
        %1197 = vmatpush1.msra.mxu0 %v1075
        %1198 = vmatprep.subr.mxu0 %v1080
        %1199 = vmatpush1.msra.mxu0 %v1079
        %1200 = vmatprep.subr.mxu0 %v1084
        %1201 = vmatpush1.msra.mxu0 %v1083
        %1202 = vmatprep.subr.mxu0 %v1088
        %1203 = vmatpush1.msra.mxu0 %v1087
        %1204 = vmatprep.subr.mxu0 %v1092
        %1205 = vmatpush1.msra.mxu0 %v1091
        %1206 = vmatprep.subr.mxu0 %v1096
        %1207 = vmatpush1.msra.mxu0 %v1095
        %1208 = vmatprep.subr.mxu0 %v1100
        %1209 = vmatpush1.msra.mxu0 %v1099
        %1210 = vmatprep.subr.mxu0 %v1104
        %1211 = vmatpush1.msra.mxu0 %v1103
        %1212 = vmatprep.subr.mxu0 %v1108
        %1213 = vmatpush1.msra.mxu0 %v1107
        %1214 = vmatprep.subr.mxu0 %v1112
        %1215 = vmatpush1.msra.mxu0 %v1111
        %1216 = vmatprep.subr.mxu0 0.0
        %1217 = vmatpush1.msra.mxu0 0.0
        %1218 = vmatprep.subr.mxu0 0.0
        %1219 = vmatpush1.msra.mxu0 0.0
        %1220 = vmatprep.subr.mxu0 0.0
        %1221 = vmatpush1.msra.mxu0 0.0
        %1222 = vmatprep.subr.mxu0 0.0
        %1223 = vmatpush1.msra.mxu0 0.0
        %1224 = vmatprep.subr.mxu0 0.0
        %1225 = vmatpush1.msra.mxu0 0.0
        %1226 = vmatprep.subr.mxu0 0.0
        %1227 = vmatpush1.msra.mxu0 0.0
        %1228 = vmatprep.subr.mxu0 0.0
        %1229 = vmatpush1.msra.mxu0 0.0
        %1230 = vmatprep.subr.mxu0 0.0
        %1231 = vmatpush1.msra.mxu0 0.0
        %1232 = vmatprep.subr.mxu0 0.0
        %1233 = vmatpush1.msra.mxu0 0.0
        %1234 = vmatprep.subr.mxu0 0.0
        %1235 = vmatpush1.msra.mxu0 0.0
        %1236 = vmatprep.subr.mxu0 0.0
        %1237 = vmatpush1.msra.mxu0 0.0
        %1238 = vmatprep.subr.mxu0 0.0
        %1239 = vmatpush1.msra.mxu0 0.0
        %1240 = vmatprep.subr.mxu0 0.0
        %1241 = vmatpush1.msra.mxu0 0.0
        %1242 = vmatprep.subr.mxu0 0.0
        %1243 = vmatpush1.msra.mxu0 0.0
        %1244 = vmatprep.subr.mxu0 0.0
        %1245 = vmatpush1.msra.mxu0 0.0
        %1246 = vmatprep.subr.mxu0 0.0
        %1247 = vmatpush1.msra.mxu0 0.0
        %1248 = vmatprep.mubr.f32.mxu0 0.0
        %1249 = vmatmul.mubr.f32.gmra.mrb[0].mxu0 %v1040
        %v1250 = vpop.f32.mrb[0].mxu0
        %v1251 = vadd.f32 0.0, %v1250
        %v1252 = vpop.f32.mrb[0].mxu0
        %v1253 = vadd.f32 0.0, %v1252
        %1254 = vdwg.mxu0
        %v1255 = vadd.f32 %v1045, %v1180
        %v1256 = vadd.f32 %v1046, %v1182
        %v1257 = vadd.f32 %v1047, %v1251
        %v1258 = vadd.f32 %v1048, %v1253
        %v1259 = vmul.f32 %v1255, 0.5
        %v1260 = vmul.f32 %v1256, 0.5
        %v1261 = vmul.f32 %v1257, 0.5
        %v1262 = vtanh.pop %v1259
        %v1263 = vtanh.pop %v1260
        %v1264 = vtanh.pop %v1261
        %v1265 = vmul.f32 %v1262, 0.5
        %v1266 = vmul.f32 %v1263, 0.5
        %v1267 = vmul.f32 %v1264, 0.5
        %v1268 = vadd.f32 %v1265, 0.5
        %v1269 = vadd.f32 %v1266, 0.5
        %v1270 = vadd.f32 %v1267, 0.5
        %v1271 = vtanh.pop %v1258
        %v1272 = vmul.f32 %v1269, %v1041
        %v1273 = vmul.f32 %v1268, %v1271
        %v1274 = vadd.f32 %v1272, %v1273
        %v1275 = vtanh.pop %v1274
        %v1276 = vmul.f32 %v1270, %v1275
        %s1277 = scalar_lea.vmem %s447, 8
        %v1278 = vld [vmem:[%s1277] sm:$0xff]
        %1280 = vset.pattern.permute.xlu0 0
        %1281 = vperm.xlu0 %1280, %v1278
        %v1282 = vpop.permute.xlu0 %1281
        %v1284 = vmul.f32 %v1282, %v1276
        %v1285 = vsub.f32 1.0, %v1278
        %1287 = vset.pattern.permute.xlu0 0
        %1288 = vperm.xlu0 %1287, %v1285
        %v1289 = vpop.permute.xlu0 %1288
        %v1291 = vmul.f32 %v1289, %v1040
        %v1292 = vadd.f32 %v1284, %v1291
        %1293 = vst [vmem:[#allocation2] sm:$0xff] %v1292
        %v1294 = vmul.f32 %v1282, %v1274
        %v1295 = vmul.f32 %v1289, %v1041
        %v1296 = vadd.f32 %v1294, %v1295
        %1297 = vst [vmem:[#allocation3] sm:$0xff] %v1296
        %v1298 = vld [vmem:[#allocation2] sm:$0xff]
        %v1299 = vld [vmem:[#allocation3] sm:$0xff]
        %s1300 = smul.u32 2, 4
        %s1301 = smul.addr %s1300, 8
        %s1302 = scalar_lea.vmem [#allocation4], %s1301
        %v1303 = vld [vmem:[%s1302] sm:$0xff]
        %v1304 = vld [vmem:[%s1302 + $0x8] sm:$0xff]
        %v1305 = vld [vmem:[%s1302 + $0x10] sm:$0xff]
        %v1306 = vld [vmem:[%s1302 + $0x18] sm:$0xff]
        %v1307 = vld [vmem:[%s3] sm:$0xff]
        %v1308 = vld [vmem:[%s3 + $0x8] sm:$0xff]
        %v1309 = vld [vmem:[%s3 + $0x10] sm:$0xff]
        %v1310 = vld [vmem:[%s3 + $0x18] sm:$0xff]
        %v1311 = vld [vmem:[%s3 + $0x20] sm:$0xff]
        %v1312 = vld [vmem:[%s3 + $0x28] sm:$0xff]
        %v1313 = vld [vmem:[%s3 + $0x30] sm:$0xff]
        %v1314 = vld [vmem:[%s3 + $0x38] sm:$0xff]
        %v1315 = vld [vmem:[%s3 + $0x40] sm:$0xff]
        %v1316 = vld [vmem:[%s3 + $0x48] sm:$0xff]
        %v1317 = vld [vmem:[%s3 + $0x50] sm:$0xff]
        %v1318 = vld [vmem:[%s3 + $0x58] sm:$0xff]
        %v1319 = vld [vmem:[%s3 + $0x60] sm:$0xff]
        %v1320 = vld [vmem:[%s3 + $0x68] sm:$0xff]
        %v1321 = vld [vmem:[%s3 + $0x70] sm:$0xff]
        %v1322 = vld [vmem:[%s3 + $0x78] sm:$0xff]
        %v1323 = vld [vmem:[%s3 + $0x80] sm:$0xff]
        %v1324 = vld [vmem:[%s3 + $0x88] sm:$0xff]
        %v1325 = vld [vmem:[%s3 + $0x90] sm:$0xff]
        %v1326 = vld [vmem:[%s3 + $0x98] sm:$0xff]
        %v1327 = vld [vmem:[%s3 + $0xa0] sm:$0xff]
        %v1328 = vld [vmem:[%s3 + $0xa8] sm:$0xff]
        %v1329 = vld [vmem:[%s3 + $0xb0] sm:$0xff]
        %v1330 = vld [vmem:[%s3 + $0xb8] sm:$0xff]
        %v1331 = vld [vmem:[%s3 + $0xc0] sm:$0xff]
        %v1332 = vld [vmem:[%s3 + $0xc8] sm:$0xff]
        %v1333 = vld [vmem:[%s3 + $0xd0] sm:$0xff]
        %v1334 = vld [vmem:[%s3 + $0xd8] sm:$0xff]
        %v1335 = vld [vmem:[%s3 + $0xe0] sm:$0xff]
        %v1336 = vld [vmem:[%s3 + $0xe8] sm:$0xff]
        %v1337 = vld [vmem:[%s3 + $0xf0] sm:$0xff]
        %v1338 = vld [vmem:[%s3 + $0xf8] sm:$0xff]
        %v1339 = vld [vmem:[%s3 + $0x100] sm:$0xff]
        %v1340 = vld [vmem:[%s3 + $0x108] sm:$0xff]
        %v1341 = vld [vmem:[%s3 + $0x110] sm:$0xff]
        %v1342 = vld [vmem:[%s3 + $0x118] sm:$0xff]
        %v1343 = vld [vmem:[%s3 + $0x120] sm:$0xff]
        %v1344 = vld [vmem:[%s3 + $0x128] sm:$0xff]
        %v1345 = vld [vmem:[%s3 + $0x130] sm:$0xff]
        %v1346 = vld [vmem:[%s3 + $0x138] sm:$0xff]
        %v1347 = vld [vmem:[%s3 + $0x140] sm:$0xff]
        %v1348 = vld [vmem:[%s3 + $0x148] sm:$0xff]
        %v1349 = vld [vmem:[%s3 + $0x150] sm:$0xff]
        %v1350 = vld [vmem:[%s3 + $0x158] sm:$0xff]
        %v1351 = vld [vmem:[%s3 + $0x160] sm:$0xff]
        %v1352 = vld [vmem:[%s3 + $0x168] sm:$0xff]
        %v1353 = vld [vmem:[%s3 + $0x170] sm:$0xff]
        %v1354 = vld [vmem:[%s3 + $0x178] sm:$0xff]
        %v1355 = vld [vmem:[%s3 + $0x180] sm:$0xff]
        %v1356 = vld [vmem:[%s3 + $0x188] sm:$0xff]
        %v1357 = vld [vmem:[%s3 + $0x190] sm:$0xff]
        %v1358 = vld [vmem:[%s3 + $0x198] sm:$0xff]
        %v1359 = vld [vmem:[%s3 + $0x1a0] sm:$0xff]
        %v1360 = vld [vmem:[%s3 + $0x1a8] sm:$0xff]
        %v1361 = vld [vmem:[%s3 + $0x1b0] sm:$0xff]
        %v1362 = vld [vmem:[%s3 + $0x1b8] sm:$0xff]
        %v1363 = vld [vmem:[%s3 + $0x1c0] sm:$0xff]
        %v1364 = vld [vmem:[%s3 + $0x1c8] sm:$0xff]
        %v1365 = vld [vmem:[%s3 + $0x1d0] sm:$0xff]
        %v1366 = vld [vmem:[%s3 + $0x1d8] sm:$0xff]
        %v1367 = vld [vmem:[%s3 + $0x1e0] sm:$0xff]
        %v1368 = vld [vmem:[%s3 + $0x1e8] sm:$0xff]
        %v1369 = vld [vmem:[%s3 + $0x1f0] sm:$0xff]
        %v1370 = vld [vmem:[%s3 + $0x1f8] sm:$0xff]
        %1371 = vmatprep.subr.mxu0 %v1308
        %1372 = vmatpush1.msra.mxu0 %v1307
        %1373 = vmatprep.subr.mxu0 %v1312
        %1374 = vmatpush1.msra.mxu0 %v1311
        %1375 = vmatprep.subr.mxu0 %v1316
        %1376 = vmatpush1.msra.mxu0 %v1315
        %1377 = vmatprep.subr.mxu0 %v1320
        %1378 = vmatpush1.msra.mxu0 %v1319
        %1379 = vmatprep.subr.mxu0 %v1324
        %1380 = vmatpush1.msra.mxu0 %v1323
        %1381 = vmatprep.subr.mxu0 %v1328
        %1382 = vmatpush1.msra.mxu0 %v1327
        %1383 = vmatprep.subr.mxu0 %v1332
        %1384 = vmatpush1.msra.mxu0 %v1331
        %1385 = vmatprep.subr.mxu0 %v1336
        %1386 = vmatpush1.msra.mxu0 %v1335
        %1387 = vmatprep.subr.mxu0 %v1340
        %1388 = vmatpush1.msra.mxu0 %v1339
        %1389 = vmatprep.subr.mxu0 %v1344
        %1390 = vmatpush1.msra.mxu0 %v1343
        %1391 = vmatprep.subr.mxu0 %v1348
        %1392 = vmatpush1.msra.mxu0 %v1347
        %1393 = vmatprep.subr.mxu0 %v1352
        %1394 = vmatpush1.msra.mxu0 %v1351
        %1395 = vmatprep.subr.mxu0 %v1356
        %1396 = vmatpush1.msra.mxu0 %v1355
        %1397 = vmatprep.subr.mxu0 %v1360
        %1398 = vmatpush1.msra.mxu0 %v1359
        %1399 = vmatprep.subr.mxu0 %v1364
        %1400 = vmatpush1.msra.mxu0 %v1363
        %1401 = vmatprep.subr.mxu0 %v1368
        %1402 = vmatpush1.msra.mxu0 %v1367
        %1403 = vmatprep.subr.mxu0 0.0
        %1404 = vmatpush1.msra.mxu0 0.0
        %1405 = vmatprep.subr.mxu0 0.0
        %1406 = vmatpush1.msra.mxu0 0.0
        %1407 = vmatprep.subr.mxu0 0.0
        %1408 = vmatpush1.msra.mxu0 0.0
        %1409 = vmatprep.subr.mxu0 0.0
        %1410 = vmatpush1.msra.mxu0 0.0
        %1411 = vmatprep.subr.mxu0 0.0
        %1412 = vmatpush1.msra.mxu0 0.0
        %1413 = vmatprep.subr.mxu0 0.0
        %1414 = vmatpush1.msra.mxu0 0.0
        %1415 = vmatprep.subr.mxu0 0.0
        %1416 = vmatpush1.msra.mxu0 0.0
        %1417 = vmatprep.subr.mxu0 0.0
        %1418 = vmatpush1.msra.mxu0 0.0
        %1419 = vmatprep.subr.mxu0 0.0
        %1420 = vmatpush1.msra.mxu0 0.0
        %1421 = vmatprep.subr.mxu0 0.0
        %1422 = vmatpush1.msra.mxu0 0.0
        %1423 = vmatprep.subr.mxu0 0.0
        %1424 = vmatpush1.msra.mxu0 0.0
        %1425 = vmatprep.subr.mxu0 0.0
        %1426 = vmatpush1.msra.mxu0 0.0
        %1427 = vmatprep.subr.mxu0 0.0
        %1428 = vmatpush1.msra.mxu0 0.0
        %1429 = vmatprep.subr.mxu0 0.0
        %1430 = vmatpush1.msra.mxu0 0.0
        %1431 = vmatprep.subr.mxu0 0.0
        %1432 = vmatpush1.msra.mxu0 0.0
        %1433 = vmatprep.subr.mxu0 0.0
        %1434 = vmatpush1.msra.mxu0 0.0
        %1435 = vmatprep.mubr.f32.mxu0 0.0
        %1436 = vmatmul.mubr.f32.gmra.mrb[0].mxu0 %v1298
        %v1437 = vpop.f32.mrb[0].mxu0
        %v1438 = vadd.f32 0.0, %v1437
        %v1439 = vpop.f32.mrb[0].mxu0
        %v1440 = vadd.f32 0.0, %v1439
        %1441 = vdwg.mxu0
        %1442 = vmatprep.subr.mxu0 %v1310
        %1443 = vmatpush1.msra.mxu0 %v1309
        %1444 = vmatprep.subr.mxu0 %v1314
        %1445 = vmatpush1.msra.mxu0 %v1313
        %1446 = vmatprep.subr.mxu0 %v1318
        %1447 = vmatpush1.msra.mxu0 %v1317
        %1448 = vmatprep.subr.mxu0 %v1322
        %1449 = vmatpush1.msra.mxu0 %v1321
        %1450 = vmatprep.subr.mxu0 %v1326
        %1451 = vmatpush1.msra.mxu0 %v1325
        %1452 = vmatprep.subr.mxu0 %v1330
        %1453 = vmatpush1.msra.mxu0 %v1329
        %1454 = vmatprep.subr.mxu0 %v1334
        %1455 = vmatpush1.msra.mxu0 %v1333
        %1456 = vmatprep.subr.mxu0 %v1338
        %1457 = vmatpush1.msra.mxu0 %v1337
        %1458 = vmatprep.subr.mxu0 %v1342
        %1459 = vmatpush1.msra.mxu0 %v1341
        %1460 = vmatprep.subr.mxu0 %v1346
        %1461 = vmatpush1.msra.mxu0 %v1345
        %1462 = vmatprep.subr.mxu0 %v1350
        %1463 = vmatpush1.msra.mxu0 %v1349
        %1464 = vmatprep.subr.mxu0 %v1354
        %1465 = vmatpush1.msra.mxu0 %v1353
        %1466 = vmatprep.subr.mxu0 %v1358
        %1467 = vmatpush1.msra.mxu0 %v1357
        %1468 = vmatprep.subr.mxu0 %v1362
        %1469 = vmatpush1.msra.mxu0 %v1361
        %1470 = vmatprep.subr.mxu0 %v1366
        %1471 = vmatpush1.msra.mxu0 %v1365
        %1472 = vmatprep.subr.mxu0 %v1370
        %1473 = vmatpush1.msra.mxu0 %v1369
        %1474 = vmatprep.subr.mxu0 0.0
        %1475 = vmatpush1.msra.mxu0 0.0
        %1476 = vmatprep.subr.mxu0 0.0
        %1477 = vmatpush1.msra.mxu0 0.0
        %1478 = vmatprep.subr.mxu0 0.0
        %1479 = vmatpush1.msra.mxu0 0.0
        %1480 = vmatprep.subr.mxu0 0.0
        %1481 = vmatpush1.msra.mxu0 0.0
        %1482 = vmatprep.subr.mxu0 0.0
        %1483 = vmatpush1.msra.mxu0 0.0
        %1484 = vmatprep.subr.mxu0 0.0
        %1485 = vmatpush1.msra.mxu0 0.0
        %1486 = vmatprep.subr.mxu0 0.0
        %1487 = vmatpush1.msra.mxu0 0.0
        %1488 = vmatprep.subr.mxu0 0.0
        %1489 = vmatpush1.msra.mxu0 0.0
        %1490 = vmatprep.subr.mxu0 0.0
        %1491 = vmatpush1.msra.mxu0 0.0
        %1492 = vmatprep.subr.mxu0 0.0
        %1493 = vmatpush1.msra.mxu0 0.0
        %1494 = vmatprep.subr.mxu0 0.0
        %1495 = vmatpush1.msra.mxu0 0.0
        %1496 = vmatprep.subr.mxu0 0.0
        %1497 = vmatpush1.msra.mxu0 0.0
        %1498 = vmatprep.subr.mxu0 0.0
        %1499 = vmatpush1.msra.mxu0 0.0
        %1500 = vmatprep.subr.mxu0 0.0
        %1501 = vmatpush1.msra.mxu0 0.0
        %1502 = vmatprep.subr.mxu0 0.0
        %1503 = vmatpush1.msra.mxu0 0.0
        %1504 = vmatprep.subr.mxu0 0.0
        %1505 = vmatpush1.msra.mxu0 0.0
        %1506 = vmatprep.mubr.f32.mxu0 0.0
        %1507 = vmatmul.mubr.f32.gmra.mrb[0].mxu0 %v1298
        %v1508 = vpop.f32.mrb[0].mxu0
        %v1509 = vadd.f32 0.0, %v1508
        %v1510 = vpop.f32.mrb[0].mxu0
        %v1511 = vadd.f32 0.0, %v1510
        %1512 = vdwg.mxu0
        %v1513 = vadd.f32 %v1303, %v1438
        %v1514 = vadd.f32 %v1304, %v1440
        %v1515 = vadd.f32 %v1305, %v1509
        %v1516 = vadd.f32 %v1306, %v1511
        %v1517 = vmul.f32 %v1513, 0.5
        %v1518 = vmul.f32 %v1514, 0.5
        %v1519 = vmul.f32 %v1515, 0.5
        %v1520 = vtanh.pop %v1517
        %v1521 = vtanh.pop %v1518
        %v1522 = vtanh.pop %v1519
        %v1523 = vmul.f32 %v1520, 0.5
        %v1524 = vmul.f32 %v1521, 0.5
        %v1525 = vmul.f32 %v1522, 0.5
        %v1526 = vadd.f32 %v1523, 0.5
        %v1527 = vadd.f32 %v1524, 0.5
        %v1528 = vadd.f32 %v1525, 0.5
        %v1529 = vtanh.pop %v1516
        %v1530 = vmul.f32 %v1527, %v1299
        %v1531 = vmul.f32 %v1526, %v1529
        %v1532 = vadd.f32 %v1530, %v1531
        %v1533 = vtanh.pop %v1532
        %v1534 = vmul.f32 %v1528, %v1533
        %s1535 = scalar_lea.vmem %s447, 16
        %v1536 = vld [vmem:[%s1535] sm:$0xff]
        %1538 = vset.pattern.permute.xlu0 0
        %1539 = vperm.xlu0 %1538, %v1536
        %v1540 = vpop.permute.xlu0 %1539
        %v1542 = vmul.f32 %v1540, %v1534
        %v1543 = vsub.f32 1.0, %v1536
        %1545 = vset.pattern.permute.xlu0 0
        %1546 = vperm.xlu0 %1545, %v1543
        %v1547 = vpop.permute.xlu0 %1546
        %v1549 = vmul.f32 %v1547, %v1298
        %v1550 = vadd.f32 %v1542, %v1549
        %1551 = vst [vmem:[#allocation2] sm:$0xff] %v1550
        %v1552 = vmul.f32 %v1540, %v1532
        %v1553 = vmul.f32 %v1547, %v1299
        %v1554 = vadd.f32 %v1552, %v1553
        %1555 = vst [vmem:[#allocation3] sm:$0xff] %v1554
        %v1556 = vld [vmem:[#allocation2] sm:$0xff]
        %v1557 = vld [vmem:[#allocation3] sm:$0xff]
        %s1558 = smul.u32 3, 4
        %s1559 = smul.addr %s1558, 8
        %s1560 = scalar_lea.vmem [#allocation4], %s1559
        %v1561 = vld [vmem:[%s1560] sm:$0xff]
        %v1562 = vld [vmem:[%s1560 + $0x8] sm:$0xff]
        %v1563 = vld [vmem:[%s1560 + $0x10] sm:$0xff]
        %v1564 = vld [vmem:[%s1560 + $0x18] sm:$0xff]
        %v1565 = vld [vmem:[%s3] sm:$0xff]
        %v1566 = vld [vmem:[%s3 + $0x8] sm:$0xff]
        %v1567 = vld [vmem:[%s3 + $0x10] sm:$0xff]
        %v1568 = vld [vmem:[%s3 + $0x18] sm:$0xff]
        %v1569 = vld [vmem:[%s3 + $0x20] sm:$0xff]
        %v1570 = vld [vmem:[%s3 + $0x28] sm:$0xff]
        %v1571 = vld [vmem:[%s3 + $0x30] sm:$0xff]
        %v1572 = vld [vmem:[%s3 + $0x38] sm:$0xff]
        %v1573 = vld [vmem:[%s3 + $0x40] sm:$0xff]
        %v1574 = vld [vmem:[%s3 + $0x48] sm:$0xff]
        %v1575 = vld [vmem:[%s3 + $0x50] sm:$0xff]
        %v1576 = vld [vmem:[%s3 + $0x58] sm:$0xff]
        %v1577 = vld [vmem:[%s3 + $0x60] sm:$0xff]
        %v1578 = vld [vmem:[%s3 + $0x68] sm:$0xff]
        %v1579 = vld [vmem:[%s3 + $0x70] sm:$0xff]
        %v1580 = vld [vmem:[%s3 + $0x78] sm:$0xff]
        %v1581 = vld [vmem:[%s3 + $0x80] sm:$0xff]
        %v1582 = vld [vmem:[%s3 + $0x88] sm:$0xff]
        %v1583 = vld [vmem:[%s3 + $0x90] sm:$0xff]
        %v1584 = vld [vmem:[%s3 + $0x98] sm:$0xff]
        %v1585 = vld [vmem:[%s3 + $0xa0] sm:$0xff]
        %v1586 = vld [vmem:[%s3 + $0xa8] sm:$0xff]
        %v1587 = vld [vmem:[%s3 + $0xb0] sm:$0xff]
        %v1588 = vld [vmem:[%s3 + $0xb8] sm:$0xff]
        %v1589 = vld [vmem:[%s3 + $0xc0] sm:$0xff]
        %v1590 = vld [vmem:[%s3 + $0xc8] sm:$0xff]
        %v1591 = vld [vmem:[%s3 + $0xd0] sm:$0xff]
        %v1592 = vld [vmem:[%s3 + $0xd8] sm:$0xff]
        %v1593 = vld [vmem:[%s3 + $0xe0] sm:$0xff]
        %v1594 = vld [vmem:[%s3 + $0xe8] sm:$0xff]
        %v1595 = vld [vmem:[%s3 + $0xf0] sm:$0xff]
        %v1596 = vld [vmem:[%s3 + $0xf8] sm:$0xff]
        %v1597 = vld [vmem:[%s3 + $0x100] sm:$0xff]
        %v1598 = vld [vmem:[%s3 + $0x108] sm:$0xff]
        %v1599 = vld [vmem:[%s3 + $0x110] sm:$0xff]
        %v1600 = vld [vmem:[%s3 + $0x118] sm:$0xff]
        %v1601 = vld [vmem:[%s3 + $0x120] sm:$0xff]
        %v1602 = vld [vmem:[%s3 + $0x128] sm:$0xff]
        %v1603 = vld [vmem:[%s3 + $0x130] sm:$0xff]
        %v1604 = vld [vmem:[%s3 + $0x138] sm:$0xff]
        %v1605 = vld [vmem:[%s3 + $0x140] sm:$0xff]
        %v1606 = vld [vmem:[%s3 + $0x148] sm:$0xff]
        %v1607 = vld [vmem:[%s3 + $0x150] sm:$0xff]
        %v1608 = vld [vmem:[%s3 + $0x158] sm:$0xff]
        %v1609 = vld [vmem:[%s3 + $0x160] sm:$0xff]
        %v1610 = vld [vmem:[%s3 + $0x168] sm:$0xff]
        %v1611 = vld [vmem:[%s3 + $0x170] sm:$0xff]
        %v1612 = vld [vmem:[%s3 + $0x178] sm:$0xff]
        %v1613 = vld [vmem:[%s3 + $0x180] sm:$0xff]
        %v1614 = vld [vmem:[%s3 + $0x188] sm:$0xff]
        %v1615 = vld [vmem:[%s3 + $0x190] sm:$0xff]
        %v1616 = vld [vmem:[%s3 + $0x198] sm:$0xff]
        %v1617 = vld [vmem:[%s3 + $0x1a0] sm:$0xff]
        %v1618 = vld [vmem:[%s3 + $0x1a8] sm:$0xff]
        %v1619 = vld [vmem:[%s3 + $0x1b0] sm:$0xff]
        %v1620 = vld [vmem:[%s3 + $0x1b8] sm:$0xff]
        %v1621 = vld [vmem:[%s3 + $0x1c0] sm:$0xff]
        %v1622 = vld [vmem:[%s3 + $0x1c8] sm:$0xff]
        %v1623 = vld [vmem:[%s3 + $0x1d0] sm:$0xff]
        %v1624 = vld [vmem:[%s3 + $0x1d8] sm:$0xff]
        %v1625 = vld [vmem:[%s3 + $0x1e0] sm:$0xff]
        %v1626 = vld [vmem:[%s3 + $0x1e8] sm:$0xff]
        %v1627 = vld [vmem:[%s3 + $0x1f0] sm:$0xff]
        %v1628 = vld [vmem:[%s3 + $0x1f8] sm:$0xff]
        %1629 = vmatprep.subr.mxu0 %v1566
        %1630 = vmatpush1.msra.mxu0 %v1565
        %1631 = vmatprep.subr.mxu0 %v1570
        %1632 = vmatpush1.msra.mxu0 %v1569
        %1633 = vmatprep.subr.mxu0 %v1574
        %1634 = vmatpush1.msra.mxu0 %v1573
        %1635 = vmatprep.subr.mxu0 %v1578
        %1636 = vmatpush1.msra.mxu0 %v1577
        %1637 = vmatprep.subr.mxu0 %v1582
        %1638 = vmatpush1.msra.mxu0 %v1581
        %1639 = vmatprep.subr.mxu0 %v1586
        %1640 = vmatpush1.msra.mxu0 %v1585
        %1641 = vmatprep.subr.mxu0 %v1590
        %1642 = vmatpush1.msra.mxu0 %v1589
        %1643 = vmatprep.subr.mxu0 %v1594
        %1644 = vmatpush1.msra.mxu0 %v1593
        %1645 = vmatprep.subr.mxu0 %v1598
        %1646 = vmatpush1.msra.mxu0 %v1597
        %1647 = vmatprep.subr.mxu0 %v1602
        %1648 = vmatpush1.msra.mxu0 %v1601
        %1649 = vmatprep.subr.mxu0 %v1606
        %1650 = vmatpush1.msra.mxu0 %v1605
        %1651 = vmatprep.subr.mxu0 %v1610
        %1652 = vmatpush1.msra.mxu0 %v1609
        %1653 = vmatprep.subr.mxu0 %v1614
        %1654 = vmatpush1.msra.mxu0 %v1613
        %1655 = vmatprep.subr.mxu0 %v1618
        %1656 = vmatpush1.msra.mxu0 %v1617
        %1657 = vmatprep.subr.mxu0 %v1622
        %1658 = vmatpush1.msra.mxu0 %v1621
        %1659 = vmatprep.subr.mxu0 %v1626
        %1660 = vmatpush1.msra.mxu0 %v1625
        %1661 = vmatprep.subr.mxu0 0.0
        %1662 = vmatpush1.msra.mxu0 0.0
        %1663 = vmatprep.subr.mxu0 0.0
        %1664 = vmatpush1.msra.mxu0 0.0
        %1665 = vmatprep.subr.mxu0 0.0
        %1666 = vmatpush1.msra.mxu0 0.0
        %1667 = vmatprep.subr.mxu0 0.0
        %1668 = vmatpush1.msra.mxu0 0.0
        %1669 = vmatprep.subr.mxu0 0.0
        %1670 = vmatpush1.msra.mxu0 0.0
        %1671 = vmatprep.subr.mxu0 0.0
        %1672 = vmatpush1.msra.mxu0 0.0
        %1673 = vmatprep.subr.mxu0 0.0
        %1674 = vmatpush1.msra.mxu0 0.0
        %1675 = vmatprep.subr.mxu0 0.0
        %1676 = vmatpush1.msra.mxu0 0.0
        %1677 = vmatprep.subr.mxu0 0.0
        %1678 = vmatpush1.msra.mxu0 0.0
        %1679 = vmatprep.subr.mxu0 0.0
        %1680 = vmatpush1.msra.mxu0 0.0
        %1681 = vmatprep.subr.mxu0 0.0
        %1682 = vmatpush1.msra.mxu0 0.0
        %1683 = vmatprep.subr.mxu0 0.0
        %1684 = vmatpush1.msra.mxu0 0.0
        %1685 = vmatprep.subr.mxu0 0.0
        %1686 = vmatpush1.msra.mxu0 0.0
        %1687 = vmatprep.subr.mxu0 0.0
        %1688 = vmatpush1.msra.mxu0 0.0
        %1689 = vmatprep.subr.mxu0 0.0
        %1690 = vmatpush1.msra.mxu0 0.0
        %1691 = vmatprep.subr.mxu0 0.0
        %1692 = vmatpush1.msra.mxu0 0.0
        %1693 = vmatprep.mubr.f32.mxu0 0.0
        %1694 = vmatmul.mubr.f32.gmra.mrb[0].mxu0 %v1556
        %v1695 = vpop.f32.mrb[0].mxu0
        %v1696 = vadd.f32 0.0, %v1695
        %v1697 = vpop.f32.mrb[0].mxu0
        %v1698 = vadd.f32 0.0, %v1697
        %1699 = vdwg.mxu0
        %1700 = vmatprep.subr.mxu0 %v1568
        %1701 = vmatpush1.msra.mxu0 %v1567
        %1702 = vmatprep.subr.mxu0 %v1572
        %1703 = vmatpush1.msra.mxu0 %v1571
        %1704 = vmatprep.subr.mxu0 %v1576
        %1705 = vmatpush1.msra.mxu0 %v1575
        %1706 = vmatprep.subr.mxu0 %v1580
        %1707 = vmatpush1.msra.mxu0 %v1579
        %1708 = vmatprep.subr.mxu0 %v1584
        %1709 = vmatpush1.msra.mxu0 %v1583
        %1710 = vmatprep.subr.mxu0 %v1588
        %1711 = vmatpush1.msra.mxu0 %v1587
        %1712 = vmatprep.subr.mxu0 %v1592
        %1713 = vmatpush1.msra.mxu0 %v1591
        %1714 = vmatprep.subr.mxu0 %v1596
        %1715 = vmatpush1.msra.mxu0 %v1595
        %1716 = vmatprep.subr.mxu0 %v1600
        %1717 = vmatpush1.msra.mxu0 %v1599
        %1718 = vmatprep.subr.mxu0 %v1604
        %1719 = vmatpush1.msra.mxu0 %v1603
        %1720 = vmatprep.subr.mxu0 %v1608
        %1721 = vmatpush1.msra.mxu0 %v1607
        %1722 = vmatprep.subr.mxu0 %v1612
        %1723 = vmatpush1.msra.mxu0 %v1611
        %1724 = vmatprep.subr.mxu0 %v1616
        %1725 = vmatpush1.msra.mxu0 %v1615
        %1726 = vmatprep.subr.mxu0 %v1620
        %1727 = vmatpush1.msra.mxu0 %v1619
        %1728 = vmatprep.subr.mxu0 %v1624
        %1729 = vmatpush1.msra.mxu0 %v1623
        %1730 = vmatprep.subr.mxu0 %v1628
        %1731 = vmatpush1.msra.mxu0 %v1627
        %1732 = vmatprep.subr.mxu0 0.0
        %1733 = vmatpush1.msra.mxu0 0.0
        %1734 = vmatprep.subr.mxu0 0.0
        %1735 = vmatpush1.msra.mxu0 0.0
        %1736 = vmatprep.subr.mxu0 0.0
        %1737 = vmatpush1.msra.mxu0 0.0
        %1738 = vmatprep.subr.mxu0 0.0
        %1739 = vmatpush1.msra.mxu0 0.0
        %1740 = vmatprep.subr.mxu0 0.0
        %1741 = vmatpush1.msra.mxu0 0.0
        %1742 = vmatprep.subr.mxu0 0.0
        %1743 = vmatpush1.msra.mxu0 0.0
        %1744 = vmatprep.subr.mxu0 0.0
        %1745 = vmatpush1.msra.mxu0 0.0
        %1746 = vmatprep.subr.mxu0 0.0
        %1747 = vmatpush1.msra.mxu0 0.0
        %1748 = vmatprep.subr.mxu0 0.0
        %1749 = vmatpush1.msra.mxu0 0.0
        %1750 = vmatprep.subr.mxu0 0.0
        %1751 = vmatpush1.msra.mxu0 0.0
        %1752 = vmatprep.subr.mxu0 0.0
        %1753 = vmatpush1.msra.mxu0 0.0
        %1754 = vmatprep.subr.mxu0 0.0
        %1755 = vmatpush1.msra.mxu0 0.0
        %1756 = vmatprep.subr.mxu0 0.0
        %1757 = vmatpush1.msra.mxu0 0.0
        %1758 = vmatprep.subr.mxu0 0.0
        %1759 = vmatpush1.msra.mxu0 0.0
        %1760 = vmatprep.subr.mxu0 0.0
        %1761 = vmatpush1.msra.mxu0 0.0
        %1762 = vmatprep.subr.mxu0 0.0
        %1763 = vmatpush1.msra.mxu0 0.0
        %1764 = vmatprep.mubr.f32.mxu0 0.0
        %1765 = vmatmul.mubr.f32.gmra.mrb[0].mxu0 %v1556
        %v1766 = vpop.f32.mrb[0].mxu0
        %v1767 = vadd.f32 0.0, %v1766
        %v1768 = vpop.f32.mrb[0].mxu0
        %v1769 = vadd.f32 0.0, %v1768
        %1770 = vdwg.mxu0
        %v1771 = vadd.f32 %v1561, %v1696
        %v1772 = vadd.f32 %v1562, %v1698
        %v1773 = vadd.f32 %v1563, %v1767
        %v1774 = vadd.f32 %v1564, %v1769
        %v1775 = vmul.f32 %v1771, 0.5
        %v1776 = vmul.f32 %v1772, 0.5
        %v1777 = vmul.f32 %v1773, 0.5
        %v1778 = vtanh.pop %v1775
        %v1779 = vtanh.pop %v1776
        %v1780 = vtanh.pop %v1777
        %v1781 = vmul.f32 %v1778, 0.5
        %v1782 = vmul.f32 %v1779, 0.5
        %v1783 = vmul.f32 %v1780, 0.5
        %v1784 = vadd.f32 %v1781, 0.5
        %v1785 = vadd.f32 %v1782, 0.5
        %v1786 = vadd.f32 %v1783, 0.5
        %v1787 = vtanh.pop %v1774
        %v1788 = vmul.f32 %v1785, %v1557
        %v1789 = vmul.f32 %v1784, %v1787
        %v1790 = vadd.f32 %v1788, %v1789
        %v1791 = vtanh.pop %v1790
        %v1792 = vmul.f32 %v1786, %v1791
        %s1793 = scalar_lea.vmem %s447, 24
        %v1794 = vld [vmem:[%s1793] sm:$0xff]
        %1796 = vset.pattern.permute.xlu0 0
        %1797 = vperm.xlu0 %1796, %v1794
        %v1798 = vpop.permute.xlu0 %1797
        %v1800 = vmul.f32 %v1798, %v1792
        %v1801 = vsub.f32 1.0, %v1794
        %1803 = vset.pattern.permute.xlu0 0
        %1804 = vperm.xlu0 %1803, %v1801
        %v1805 = vpop.permute.xlu0 %1804
        %v1807 = vmul.f32 %v1805, %v1556
        %v1808 = vadd.f32 %v1800, %v1807
        %1809 = vst [vmem:[#allocation2] sm:$0xff] %v1808
        %v1810 = vmul.f32 %v1798, %v1790
        %v1811 = vmul.f32 %v1805, %v1557
        %v1812 = vadd.f32 %v1810, %v1811
        %1813 = vst [vmem:[#allocation3] sm:$0xff] %v1812
        %v1814 = vld [vmem:[#allocation2] sm:$0xff]
        %v1815 = vld [vmem:[#allocation3] sm:$0xff]
        %s1816 = smul.u32 4, 4
        %s1817 = smul.addr %s1816, 8
        %s1818 = scalar_lea.vmem [#allocation4], %s1817
        %v1819 = vld [vmem:[%s1818] sm:$0xff]
        %v1820 = vld [vmem:[%s1818 + $0x8] sm:$0xff]
        %v1821 = vld [vmem:[%s1818 + $0x10] sm:$0xff]
        %v1822 = vld [vmem:[%s1818 + $0x18] sm:$0xff]
        %v1823 = vld [vmem:[%s3] sm:$0xff]
        %v1824 = vld [vmem:[%s3 + $0x8] sm:$0xff]
        %v1825 = vld [vmem:[%s3 + $0x10] sm:$0xff]
        %v1826 = vld [vmem:[%s3 + $0x18] sm:$0xff]
        %v1827 = vld [vmem:[%s3 + $0x20] sm:$0xff]
        %v1828 = vld [vmem:[%s3 + $0x28] sm:$0xff]
        %v1829 = vld [vmem:[%s3 + $0x30] sm:$0xff]
        %v1830 = vld [vmem:[%s3 + $0x38] sm:$0xff]
        %v1831 = vld [vmem:[%s3 + $0x40] sm:$0xff]
        %v1832 = vld [vmem:[%s3 + $0x48] sm:$0xff]
        %v1833 = vld [vmem:[%s3 + $0x50] sm:$0xff]
        %v1834 = vld [vmem:[%s3 + $0x58] sm:$0xff]
        %v1835 = vld [vmem:[%s3 + $0x60] sm:$0xff]
        %v1836 = vld [vmem:[%s3 + $0x68] sm:$0xff]
        %v1837 = vld [vmem:[%s3 + $0x70] sm:$0xff]
        %v1838 = vld [vmem:[%s3 + $0x78] sm:$0xff]
        %v1839 = vld [vmem:[%s3 + $0x80] sm:$0xff]
        %v1840 = vld [vmem:[%s3 + $0x88] sm:$0xff]
        %v1841 = vld [vmem:[%s3 + $0x90] sm:$0xff]
        %v1842 = vld [vmem:[%s3 + $0x98] sm:$0xff]
        %v1843 = vld [vmem:[%s3 + $0xa0] sm:$0xff]
        %v1844 = vld [vmem:[%s3 + $0xa8] sm:$0xff]
        %v1845 = vld [vmem:[%s3 + $0xb0] sm:$0xff]
        %v1846 = vld [vmem:[%s3 + $0xb8] sm:$0xff]
        %v1847 = vld [vmem:[%s3 + $0xc0] sm:$0xff]
        %v1848 = vld [vmem:[%s3 + $0xc8] sm:$0xff]
        %v1849 = vld [vmem:[%s3 + $0xd0] sm:$0xff]
        %v1850 = vld [vmem:[%s3 + $0xd8] sm:$0xff]
        %v1851 = vld [vmem:[%s3 + $0xe0] sm:$0xff]
        %v1852 = vld [vmem:[%s3 + $0xe8] sm:$0xff]
        %v1853 = vld [vmem:[%s3 + $0xf0] sm:$0xff]
        %v1854 = vld [vmem:[%s3 + $0xf8] sm:$0xff]
        %v1855 = vld [vmem:[%s3 + $0x100] sm:$0xff]
        %v1856 = vld [vmem:[%s3 + $0x108] sm:$0xff]
        %v1857 = vld [vmem:[%s3 + $0x110] sm:$0xff]
        %v1858 = vld [vmem:[%s3 + $0x118] sm:$0xff]
        %v1859 = vld [vmem:[%s3 + $0x120] sm:$0xff]
        %v1860 = vld [vmem:[%s3 + $0x128] sm:$0xff]
        %v1861 = vld [vmem:[%s3 + $0x130] sm:$0xff]
        %v1862 = vld [vmem:[%s3 + $0x138] sm:$0xff]
        %v1863 = vld [vmem:[%s3 + $0x140] sm:$0xff]
        %v1864 = vld [vmem:[%s3 + $0x148] sm:$0xff]
        %v1865 = vld [vmem:[%s3 + $0x150] sm:$0xff]
        %v1866 = vld [vmem:[%s3 + $0x158] sm:$0xff]
        %v1867 = vld [vmem:[%s3 + $0x160] sm:$0xff]
        %v1868 = vld [vmem:[%s3 + $0x168] sm:$0xff]
        %v1869 = vld [vmem:[%s3 + $0x170] sm:$0xff]
        %v1870 = vld [vmem:[%s3 + $0x178] sm:$0xff]
        %v1871 = vld [vmem:[%s3 + $0x180] sm:$0xff]
        %v1872 = vld [vmem:[%s3 + $0x188] sm:$0xff]
        %v1873 = vld [vmem:[%s3 + $0x190] sm:$0xff]
        %v1874 = vld [vmem:[%s3 + $0x198] sm:$0xff]
        %v1875 = vld [vmem:[%s3 + $0x1a0] sm:$0xff]
        %v1876 = vld [vmem:[%s3 + $0x1a8] sm:$0xff]
        %v1877 = vld [vmem:[%s3 + $0x1b0] sm:$0xff]
        %v1878 = vld [vmem:[%s3 + $0x1b8] sm:$0xff]
        %v1879 = vld [vmem:[%s3 + $0x1c0] sm:$0xff]
        %v1880 = vld [vmem:[%s3 + $0x1c8] sm:$0xff]
        %v1881 = vld [vmem:[%s3 + $0x1d0] sm:$0xff]
        %v1882 = vld [vmem:[%s3 + $0x1d8] sm:$0xff]
        %v1883 = vld [vmem:[%s3 + $0x1e0] sm:$0xff]
        %v1884 = vld [vmem:[%s3 + $0x1e8] sm:$0xff]
        %v1885 = vld [vmem:[%s3 + $0x1f0] sm:$0xff]
        %v1886 = vld [vmem:[%s3 + $0x1f8] sm:$0xff]
        %1887 = vmatprep.subr.mxu0 %v1824
        %1888 = vmatpush1.msra.mxu0 %v1823
        %1889 = vmatprep.subr.mxu0 %v1828
        %1890 = vmatpush1.msra.mxu0 %v1827
        %1891 = vmatprep.subr.mxu0 %v1832
        %1892 = vmatpush1.msra.mxu0 %v1831
        %1893 = vmatprep.subr.mxu0 %v1836
        %1894 = vmatpush1.msra.mxu0 %v1835
        %1895 = vmatprep.subr.mxu0 %v1840
        %1896 = vmatpush1.msra.mxu0 %v1839
        %1897 = vmatprep.subr.mxu0 %v1844
        %1898 = vmatpush1.msra.mxu0 %v1843
        %1899 = vmatprep.subr.mxu0 %v1848
        %1900 = vmatpush1.msra.mxu0 %v1847
        %1901 = vmatprep.subr.mxu0 %v1852
        %1902 = vmatpush1.msra.mxu0 %v1851
        %1903 = vmatprep.subr.mxu0 %v1856
        %1904 = vmatpush1.msra.mxu0 %v1855
        %1905 = vmatprep.subr.mxu0 %v1860
        %1906 = vmatpush1.msra.mxu0 %v1859
        %1907 = vmatprep.subr.mxu0 %v1864
        %1908 = vmatpush1.msra.mxu0 %v1863
        %1909 = vmatprep.subr.mxu0 %v1868
        %1910 = vmatpush1.msra.mxu0 %v1867
        %1911 = vmatprep.subr.mxu0 %v1872
        %1912 = vmatpush1.msra.mxu0 %v1871
        %1913 = vmatprep.subr.mxu0 %v1876
        %1914 = vmatpush1.msra.mxu0 %v1875
        %1915 = vmatprep.subr.mxu0 %v1880
        %1916 = vmatpush1.msra.mxu0 %v1879
        %1917 = vmatprep.subr.mxu0 %v1884
        %1918 = vmatpush1.msra.mxu0 %v1883
        %1919 = vmatprep.subr.mxu0 0.0
        %1920 = vmatpush1.msra.mxu0 0.0
        %1921 = vmatprep.subr.mxu0 0.0
        %1922 = vmatpush1.msra.mxu0 0.0
        %1923 = vmatprep.subr.mxu0 0.0
        %1924 = vmatpush1.msra.mxu0 0.0
        %1925 = vmatprep.subr.mxu0 0.0
        %1926 = vmatpush1.msra.mxu0 0.0
        %1927 = vmatprep.subr.mxu0 0.0
        %1928 = vmatpush1.msra.mxu0 0.0
        %1929 = vmatprep.subr.mxu0 0.0
        %1930 = vmatpush1.msra.mxu0 0.0
        %1931 = vmatprep.subr.mxu0 0.0
        %1932 = vmatpush1.msra.mxu0 0.0
        %1933 = vmatprep.subr.mxu0 0.0
        %1934 = vmatpush1.msra.mxu0 0.0
        %1935 = vmatprep.subr.mxu0 0.0
        %1936 = vmatpush1.msra.mxu0 0.0
        %1937 = vmatprep.subr.mxu0 0.0
        %1938 = vmatpush1.msra.mxu0 0.0
        %1939 = vmatprep.subr.mxu0 0.0
        %1940 = vmatpush1.msra.mxu0 0.0
        %1941 = vmatprep.subr.mxu0 0.0
        %1942 = vmatpush1.msra.mxu0 0.0
        %1943 = vmatprep.subr.mxu0 0.0
        %1944 = vmatpush1.msra.mxu0 0.0
        %1945 = vmatprep.subr.mxu0 0.0
        %1946 = vmatpush1.msra.mxu0 0.0
        %1947 = vmatprep.subr.mxu0 0.0
        %1948 = vmatpush1.msra.mxu0 0.0
        %1949 = vmatprep.subr.mxu0 0.0
        %1950 = vmatpush1.msra.mxu0 0.0
        %1951 = vmatprep.mubr.f32.mxu0 0.0
        %1952 = vmatmul.mubr.f32.gmra.mrb[0].mxu0 %v1814
        %v1953 = vpop.f32.mrb[0].mxu0
        %v1954 = vadd.f32 0.0, %v1953
        %v1955 = vpop.f32.mrb[0].mxu0
        %v1956 = vadd.f32 0.0, %v1955
        %1957 = vdwg.mxu0
        %1958 = vmatprep.subr.mxu0 %v1826
        %1959 = vmatpush1.msra.mxu0 %v1825
        %1960 = vmatprep.subr.mxu0 %v1830
        %1961 = vmatpush1.msra.mxu0 %v1829
        %1962 = vmatprep.subr.mxu0 %v1834
        %1963 = vmatpush1.msra.mxu0 %v1833
        %1964 = vmatprep.subr.mxu0 %v1838
        %1965 = vmatpush1.msra.mxu0 %v1837
        %1966 = vmatprep.subr.mxu0 %v1842
        %1967 = vmatpush1.msra.mxu0 %v1841
        %1968 = vmatprep.subr.mxu0 %v1846
        %1969 = vmatpush1.msra.mxu0 %v1845
        %1970 = vmatprep.subr.mxu0 %v1850
        %1971 = vmatpush1.msra.mxu0 %v1849
        %1972 = vmatprep.subr.mxu0 %v1854
        %1973 = vmatpush1.msra.mxu0 %v1853
        %1974 = vmatprep.subr.mxu0 %v1858
        %1975 = vmatpush1.msra.mxu0 %v1857
        %1976 = vmatprep.subr.mxu0 %v1862
        %1977 = vmatpush1.msra.mxu0 %v1861
        %1978 = vmatprep.subr.mxu0 %v1866
        %1979 = vmatpush1.msra.mxu0 %v1865
        %1980 = vmatprep.subr.mxu0 %v1870
        %1981 = vmatpush1.msra.mxu0 %v1869
        %1982 = vmatprep.subr.mxu0 %v1874
        %1983 = vmatpush1.msra.mxu0 %v1873
        %1984 = vmatprep.subr.mxu0 %v1878
        %1985 = vmatpush1.msra.mxu0 %v1877
        %1986 = vmatprep.subr.mxu0 %v1882
        %1987 = vmatpush1.msra.mxu0 %v1881
        %1988 = vmatprep.subr.mxu0 %v1886
        %1989 = vmatpush1.msra.mxu0 %v1885
        %1990 = vmatprep.subr.mxu0 0.0
        %1991 = vmatpush1.msra.mxu0 0.0
        %1992 = vmatprep.subr.mxu0 0.0
        %1993 = vmatpush1.msra.mxu0 0.0
        %1994 = vmatprep.subr.mxu0 0.0
        %1995 = vmatpush1.msra.mxu0 0.0
        %1996 = vmatprep.subr.mxu0 0.0
        %1997 = vmatpush1.msra.mxu0 0.0
        %1998 = vmatprep.subr.mxu0 0.0
        %1999 = vmatpush1.msra.mxu0 0.0
        %2000 = vmatprep.subr.mxu0 0.0
        %2001 = vmatpush1.msra.mxu0 0.0
        %2002 = vmatprep.subr.mxu0 0.0
        %2003 = vmatpush1.msra.mxu0 0.0
        %2004 = vmatprep.subr.mxu0 0.0
        %2005 = vmatpush1.msra.mxu0 0.0
        %2006 = vmatprep.subr.mxu0 0.0
        %2007 = vmatpush1.msra.mxu0 0.0
        %2008 = vmatprep.subr.mxu0 0.0
        %2009 = vmatpush1.msra.mxu0 0.0
        %2010 = vmatprep.subr.mxu0 0.0
        %2011 = vmatpush1.msra.mxu0 0.0
        %2012 = vmatprep.subr.mxu0 0.0
        %2013 = vmatpush1.msra.mxu0 0.0
        %2014 = vmatprep.subr.mxu0 0.0
        %2015 = vmatpush1.msra.mxu0 0.0
        %2016 = vmatprep.subr.mxu0 0.0
        %2017 = vmatpush1.msra.mxu0 0.0
        %2018 = vmatprep.subr.mxu0 0.0
        %2019 = vmatpush1.msra.mxu0 0.0
        %2020 = vmatprep.subr.mxu0 0.0
        %2021 = vmatpush1.msra.mxu0 0.0
        %2022 = vmatprep.mubr.f32.mxu0 0.0
        %2023 = vmatmul.mubr.f32.gmra.mrb[0].mxu0 %v1814
        %v2024 = vpop.f32.mrb[0].mxu0
        %v2025 = vadd.f32 0.0, %v2024
        %v2026 = vpop.f32.mrb[0].mxu0
        %v2027 = vadd.f32 0.0, %v2026
        %2028 = vdwg.mxu0
        %v2029 = vadd.f32 %v1819, %v1954
        %v2030 = vadd.f32 %v1820, %v1956
        %v2031 = vadd.f32 %v1821, %v2025
        %v2032 = vadd.f32 %v1822, %v2027
        %v2033 = vmul.f32 %v2029, 0.5
        %v2034 = vmul.f32 %v2030, 0.5
        %v2035 = vmul.f32 %v2031, 0.5
        %v2036 = vtanh.pop %v2033
        %v2037 = vtanh.pop %v2034
        %v2038 = vtanh.pop %v2035
        %v2039 = vmul.f32 %v2036, 0.5
        %v2040 = vmul.f32 %v2037, 0.5
        %v2041 = vmul.f32 %v2038, 0.5
        %v2042 = vadd.f32 %v2039, 0.5
        %v2043 = vadd.f32 %v2040, 0.5
        %v2044 = vadd.f32 %v2041, 0.5
        %v2045 = vtanh.pop %v2032
        %v2046 = vmul.f32 %v2043, %v1815
        %v2047 = vmul.f32 %v2042, %v2045
        %v2048 = vadd.f32 %v2046, %v2047
        %v2049 = vtanh.pop %v2048
        %v2050 = vmul.f32 %v2044, %v2049
        %s2051 = scalar_lea.vmem %s447, 32
        %v2052 = vld [vmem:[%s2051] sm:$0xff]
        %2054 = vset.pattern.permute.xlu0 0
        %2055 = vperm.xlu0 %2054, %v2052
        %v2056 = vpop.permute.xlu0 %2055
        %v2058 = vmul.f32 %v2056, %v2050
        %v2059 = vsub.f32 1.0, %v2052
        %2061 = vset.pattern.permute.xlu0 0
        %2062 = vperm.xlu0 %2061, %v2059
        %v2063 = vpop.permute.xlu0 %2062
        %v2065 = vmul.f32 %v2063, %v1814
        %v2066 = vadd.f32 %v2058, %v2065
        %2067 = vst [vmem:[#allocation2] sm:$0xff] %v2066
        %v2068 = vmul.f32 %v2056, %v2048
        %v2069 = vmul.f32 %v2063, %v1815
        %v2070 = vadd.f32 %v2068, %v2069
        %2071 = vst [vmem:[#allocation3] sm:$0xff] %v2070
        %v2072 = vld [vmem:[#allocation2] sm:$0xff]
        %v2073 = vld [vmem:[#allocation3] sm:$0xff]
        %s2074 = smul.u32 5, 4
        %s2075 = smul.addr %s2074, 8
        %s2076 = scalar_lea.vmem [#allocation4], %s2075
        %v2077 = vld [vmem:[%s2076] sm:$0xff]
        %v2078 = vld [vmem:[%s2076 + $0x8] sm:$0xff]
        %v2079 = vld [vmem:[%s2076 + $0x10] sm:$0xff]
        %v2080 = vld [vmem:[%s2076 + $0x18] sm:$0xff]
        %v2081 = vld [vmem:[%s3] sm:$0xff]
        %v2082 = vld [vmem:[%s3 + $0x8] sm:$0xff]
        %v2083 = vld [vmem:[%s3 + $0x10] sm:$0xff]
        %v2084 = vld [vmem:[%s3 + $0x18] sm:$0xff]
        %v2085 = vld [vmem:[%s3 + $0x20] sm:$0xff]
        %v2086 = vld [vmem:[%s3 + $0x28] sm:$0xff]
        %v2087 = vld [vmem:[%s3 + $0x30] sm:$0xff]
        %v2088 = vld [vmem:[%s3 + $0x38] sm:$0xff]
        %v2089 = vld [vmem:[%s3 + $0x40] sm:$0xff]
        %v2090 = vld [vmem:[%s3 + $0x48] sm:$0xff]
        %v2091 = vld [vmem:[%s3 + $0x50] sm:$0xff]
        %v2092 = vld [vmem:[%s3 + $0x58] sm:$0xff]
        %v2093 = vld [vmem:[%s3 + $0x60] sm:$0xff]
        %v2094 = vld [vmem:[%s3 + $0x68] sm:$0xff]
        %v2095 = vld [vmem:[%s3 + $0x70] sm:$0xff]
        %v2096 = vld [vmem:[%s3 + $0x78] sm:$0xff]
        %v2097 = vld [vmem:[%s3 + $0x80] sm:$0xff]
        %v2098 = vld [vmem:[%s3 + $0x88] sm:$0xff]
        %v2099 = vld [vmem:[%s3 + $0x90] sm:$0xff]
        %v2100 = vld [vmem:[%s3 + $0x98] sm:$0xff]
        %v2101 = vld [vmem:[%s3 + $0xa0] sm:$0xff]
        %v2102 = vld [vmem:[%s3 + $0xa8] sm:$0xff]
        %v2103 = vld [vmem:[%s3 + $0xb0] sm:$0xff]
        %v2104 = vld [vmem:[%s3 + $0xb8] sm:$0xff]
        %v2105 = vld [vmem:[%s3 + $0xc0] sm:$0xff]
        %v2106 = vld [vmem:[%s3 + $0xc8] sm:$0xff]
        %v2107 = vld [vmem:[%s3 + $0xd0] sm:$0xff]
        %v2108 = vld [vmem:[%s3 + $0xd8] sm:$0xff]
        %v2109 = vld [vmem:[%s3 + $0xe0] sm:$0xff]
        %v2110 = vld [vmem:[%s3 + $0xe8] sm:$0xff]
        %v2111 = vld [vmem:[%s3 + $0xf0] sm:$0xff]
        %v2112 = vld [vmem:[%s3 + $0xf8] sm:$0xff]
        %v2113 = vld [vmem:[%s3 + $0x100] sm:$0xff]
        %v2114 = vld [vmem:[%s3 + $0x108] sm:$0xff]
        %v2115 = vld [vmem:[%s3 + $0x110] sm:$0xff]
        %v2116 = vld [vmem:[%s3 + $0x118] sm:$0xff]
        %v2117 = vld [vmem:[%s3 + $0x120] sm:$0xff]
        %v2118 = vld [vmem:[%s3 + $0x128] sm:$0xff]
        %v2119 = vld [vmem:[%s3 + $0x130] sm:$0xff]
        %v2120 = vld [vmem:[%s3 + $0x138] sm:$0xff]
        %v2121 = vld [vmem:[%s3 + $0x140] sm:$0xff]
        %v2122 = vld [vmem:[%s3 + $0x148] sm:$0xff]
        %v2123 = vld [vmem:[%s3 + $0x150] sm:$0xff]
        %v2124 = vld [vmem:[%s3 + $0x158] sm:$0xff]
        %v2125 = vld [vmem:[%s3 + $0x160] sm:$0xff]
        %v2126 = vld [vmem:[%s3 + $0x168] sm:$0xff]
        %v2127 = vld [vmem:[%s3 + $0x170] sm:$0xff]
        %v2128 = vld [vmem:[%s3 + $0x178] sm:$0xff]
        %v2129 = vld [vmem:[%s3 + $0x180] sm:$0xff]
        %v2130 = vld [vmem:[%s3 + $0x188] sm:$0xff]
        %v2131 = vld [vmem:[%s3 + $0x190] sm:$0xff]
        %v2132 = vld [vmem:[%s3 + $0x198] sm:$0xff]
        %v2133 = vld [vmem:[%s3 + $0x1a0] sm:$0xff]
        %v2134 = vld [vmem:[%s3 + $0x1a8] sm:$0xff]
        %v2135 = vld [vmem:[%s3 + $0x1b0] sm:$0xff]
        %v2136 = vld [vmem:[%s3 + $0x1b8] sm:$0xff]
        %v2137 = vld [vmem:[%s3 + $0x1c0] sm:$0xff]
        %v2138 = vld [vmem:[%s3 + $0x1c8] sm:$0xff]
        %v2139 = vld [vmem:[%s3 + $0x1d0] sm:$0xff]
        %v2140 = vld [vmem:[%s3 + $0x1d8] sm:$0xff]
        %v2141 = vld [vmem:[%s3 + $0x1e0] sm:$0xff]
        %v2142 = vld [vmem:[%s3 + $0x1e8] sm:$0xff]
        %v2143 = vld [vmem:[%s3 + $0x1f0] sm:$0xff]
        %v2144 = vld [vmem:[%s3 + $0x1f8] sm:$0xff]
        %2145 = vmatprep.subr.mxu0 %v2082
        %2146 = vmatpush1.msra.mxu0 %v2081
        %2147 = vmatprep.subr.mxu0 %v2086
        %2148 = vmatpush1.msra.mxu0 %v2085
        %2149 = vmatprep.subr.mxu0 %v2090
        %2150 = vmatpush1.msra.mxu0 %v2089
        %2151 = vmatprep.subr.mxu0 %v2094
        %2152 = vmatpush1.msra.mxu0 %v2093
        %2153 = vmatprep.subr.mxu0 %v2098
        %2154 = vmatpush1.msra.mxu0 %v2097
        %2155 = vmatprep.subr.mxu0 %v2102
        %2156 = vmatpush1.msra.mxu0 %v2101
        %2157 = vmatprep.subr.mxu0 %v2106
        %2158 = vmatpush1.msra.mxu0 %v2105
        %2159 = vmatprep.subr.mxu0 %v2110
        %2160 = vmatpush1.msra.mxu0 %v2109
        %2161 = vmatprep.subr.mxu0 %v2114
        %2162 = vmatpush1.msra.mxu0 %v2113
        %2163 = vmatprep.subr.mxu0 %v2118
        %2164 = vmatpush1.msra.mxu0 %v2117
        %2165 = vmatprep.subr.mxu0 %v2122
        %2166 = vmatpush1.msra.mxu0 %v2121
        %2167 = vmatprep.subr.mxu0 %v2126
        %2168 = vmatpush1.msra.mxu0 %v2125
        %2169 = vmatprep.subr.mxu0 %v2130
        %2170 = vmatpush1.msra.mxu0 %v2129
        %2171 = vmatprep.subr.mxu0 %v2134
        %2172 = vmatpush1.msra.mxu0 %v2133
        %2173 = vmatprep.subr.mxu0 %v2138
        %2174 = vmatpush1.msra.mxu0 %v2137
        %2175 = vmatprep.subr.mxu0 %v2142
        %2176 = vmatpush1.msra.mxu0 %v2141
        %2177 = vmatprep.subr.mxu0 0.0
        %2178 = vmatpush1.msra.mxu0 0.0
        %2179 = vmatprep.subr.mxu0 0.0
        %2180 = vmatpush1.msra.mxu0 0.0
        %2181 = vmatprep.subr.mxu0 0.0
        %2182 = vmatpush1.msra.mxu0 0.0
        %2183 = vmatprep.subr.mxu0 0.0
        %2184 = vmatpush1.msra.mxu0 0.0
        %2185 = vmatprep.subr.mxu0 0.0
        %2186 = vmatpush1.msra.mxu0 0.0
        %2187 = vmatprep.subr.mxu0 0.0
        %2188 = vmatpush1.msra.mxu0 0.0
        %2189 = vmatprep.subr.mxu0 0.0
        %2190 = vmatpush1.msra.mxu0 0.0
        %2191 = vmatprep.subr.mxu0 0.0
        %2192 = vmatpush1.msra.mxu0 0.0
        %2193 = vmatprep.subr.mxu0 0.0
        %2194 = vmatpush1.msra.mxu0 0.0
        %2195 = vmatprep.subr.mxu0 0.0
        %2196 = vmatpush1.msra.mxu0 0.0
        %2197 = vmatprep.subr.mxu0 0.0
        %2198 = vmatpush1.msra.mxu0 0.0
        %2199 = vmatprep.subr.mxu0 0.0
        %2200 = vmatpush1.msra.mxu0 0.0
        %2201 = vmatprep.subr.mxu0 0.0
        %2202 = vmatpush1.msra.mxu0 0.0
        %2203 = vmatprep.subr.mxu0 0.0
        %2204 = vmatpush1.msra.mxu0 0.0
        %2205 = vmatprep.subr.mxu0 0.0
        %2206 = vmatpush1.msra.mxu0 0.0
        %2207 = vmatprep.subr.mxu0 0.0
        %2208 = vmatpush1.msra.mxu0 0.0
        %2209 = vmatprep.mubr.f32.mxu0 0.0
        %2210 = vmatmul.mubr.f32.gmra.mrb[0].mxu0 %v2072
        %v2211 = vpop.f32.mrb[0].mxu0
        %v2212 = vadd.f32 0.0, %v2211
        %v2213 = vpop.f32.mrb[0].mxu0
        %v2214 = vadd.f32 0.0, %v2213
        %2215 = vdwg.mxu0
        %2216 = vmatprep.subr.mxu0 %v2084
        %2217 = vmatpush1.msra.mxu0 %v2083
        %2218 = vmatprep.subr.mxu0 %v2088
        %2219 = vmatpush1.msra.mxu0 %v2087
        %2220 = vmatprep.subr.mxu0 %v2092
        %2221 = vmatpush1.msra.mxu0 %v2091
        %2222 = vmatprep.subr.mxu0 %v2096
        %2223 = vmatpush1.msra.mxu0 %v2095
        %2224 = vmatprep.subr.mxu0 %v2100
        %2225 = vmatpush1.msra.mxu0 %v2099
        %2226 = vmatprep.subr.mxu0 %v2104
        %2227 = vmatpush1.msra.mxu0 %v2103
        %2228 = vmatprep.subr.mxu0 %v2108
        %2229 = vmatpush1.msra.mxu0 %v2107
        %2230 = vmatprep.subr.mxu0 %v2112
        %2231 = vmatpush1.msra.mxu0 %v2111
        %2232 = vmatprep.subr.mxu0 %v2116
        %2233 = vmatpush1.msra.mxu0 %v2115
        %2234 = vmatprep.subr.mxu0 %v2120
        %2235 = vmatpush1.msra.mxu0 %v2119
        %2236 = vmatprep.subr.mxu0 %v2124
        %2237 = vmatpush1.msra.mxu0 %v2123
        %2238 = vmatprep.subr.mxu0 %v2128
        %2239 = vmatpush1.msra.mxu0 %v2127
        %2240 = vmatprep.subr.mxu0 %v2132
        %2241 = vmatpush1.msra.mxu0 %v2131
        %2242 = vmatprep.subr.mxu0 %v2136
        %2243 = vmatpush1.msra.mxu0 %v2135
        %2244 = vmatprep.subr.mxu0 %v2140
        %2245 = vmatpush1.msra.mxu0 %v2139
        %2246 = vmatprep.subr.mxu0 %v2144
        %2247 = vmatpush1.msra.mxu0 %v2143
        %2248 = vmatprep.subr.mxu0 0.0
        %2249 = vmatpush1.msra.mxu0 0.0
        %2250 = vmatprep.subr.mxu0 0.0
        %2251 = vmatpush1.msra.mxu0 0.0
        %2252 = vmatprep.subr.mxu0 0.0
        %2253 = vmatpush1.msra.mxu0 0.0
        %2254 = vmatprep.subr.mxu0 0.0
        %2255 = vmatpush1.msra.mxu0 0.0
        %2256 = vmatprep.subr.mxu0 0.0
        %2257 = vmatpush1.msra.mxu0 0.0
        %2258 = vmatprep.subr.mxu0 0.0
        %2259 = vmatpush1.msra.mxu0 0.0
        %2260 = vmatprep.subr.mxu0 0.0
        %2261 = vmatpush1.msra.mxu0 0.0
        %2262 = vmatprep.subr.mxu0 0.0
        %2263 = vmatpush1.msra.mxu0 0.0
        %2264 = vmatprep.subr.mxu0 0.0
        %2265 = vmatpush1.msra.mxu0 0.0
        %2266 = vmatprep.subr.mxu0 0.0
        %2267 = vmatpush1.msra.mxu0 0.0
        %2268 = vmatprep.subr.mxu0 0.0
        %2269 = vmatpush1.msra.mxu0 0.0
        %2270 = vmatprep.subr.mxu0 0.0
        %2271 = vmatpush1.msra.mxu0 0.0
        %2272 = vmatprep.subr.mxu0 0.0
        %2273 = vmatpush1.msra.mxu0 0.0
        %2274 = vmatprep.subr.mxu0 0.0
        %2275 = vmatpush1.msra.mxu0 0.0
        %2276 = vmatprep.subr.mxu0 0.0
        %2277 = vmatpush1.msra.mxu0 0.0
        %2278 = vmatprep.subr.mxu0 0.0
        %2279 = vmatpush1.msra.mxu0 0.0
        %2280 = vmatprep.mubr.f32.mxu0 0.0
        %2281 = vmatmul.mubr.f32.gmra.mrb[0].mxu0 %v2072
        %v2282 = vpop.f32.mrb[0].mxu0
        %v2283 = vadd.f32 0.0, %v2282
        %v2284 = vpop.f32.mrb[0].mxu0
        %v2285 = vadd.f32 0.0, %v2284
        %2286 = vdwg.mxu0
        %v2287 = vadd.f32 %v2077, %v2212
        %v2288 = vadd.f32 %v2078, %v2214
        %v2289 = vadd.f32 %v2079, %v2283
        %v2290 = vadd.f32 %v2080, %v2285
        %v2291 = vmul.f32 %v2287, 0.5
        %v2292 = vmul.f32 %v2288, 0.5
        %v2293 = vmul.f32 %v2289, 0.5
        %v2294 = vtanh.pop %v2291
        %v2295 = vtanh.pop %v2292
        %v2296 = vtanh.pop %v2293
        %v2297 = vmul.f32 %v2294, 0.5
        %v2298 = vmul.f32 %v2295, 0.5
        %v2299 = vmul.f32 %v2296, 0.5
        %v2300 = vadd.f32 %v2297, 0.5
        %v2301 = vadd.f32 %v2298, 0.5
        %v2302 = vadd.f32 %v2299, 0.5
        %v2303 = vtanh.pop %v2290
        %v2304 = vmul.f32 %v2301, %v2073
        %v2305 = vmul.f32 %v2300, %v2303
        %v2306 = vadd.f32 %v2304, %v2305
        %v2307 = vtanh.pop %v2306
        %v2308 = vmul.f32 %v2302, %v2307
        %s2309 = scalar_lea.vmem %s447, 40
        %v2310 = vld [vmem:[%s2309] sm:$0xff]
        %2312 = vset.pattern.permute.xlu0 0
        %2313 = vperm.xlu0 %2312, %v2310
        %v2314 = vpop.permute.xlu0 %2313
        %v2316 = vmul.f32 %v2314, %v2308
        %v2317 = vsub.f32 1.0, %v2310
        %2319 = vset.pattern.permute.xlu0 0
        %2320 = vperm.xlu0 %2319, %v2317
        %v2321 = vpop.permute.xlu0 %2320
        %v2323 = vmul.f32 %v2321, %v2072
        %v2324 = vadd.f32 %v2316, %v2323
        %2325 = vst [vmem:[#allocation2] sm:$0xff] %v2324
        %v2326 = vmul.f32 %v2314, %v2306
        %v2327 = vmul.f32 %v2321, %v2073
        %v2328 = vadd.f32 %v2326, %v2327
        %2329 = vst [vmem:[#allocation3] sm:$0xff] %v2328
        %v2330 = vld [vmem:[#allocation2] sm:$0xff]
        %v2331 = vld [vmem:[#allocation3] sm:$0xff]
        %s2332 = smul.u32 6, 4
        %s2333 = smul.addr %s2332, 8
        %s2334 = scalar_lea.vmem [#allocation4], %s2333
        %v2335 = vld [vmem:[%s2334] sm:$0xff]
        %v2336 = vld [vmem:[%s2334 + $0x8] sm:$0xff]
        %v2337 = vld [vmem:[%s2334 + $0x10] sm:$0xff]
        %v2338 = vld [vmem:[%s2334 + $0x18] sm:$0xff]
        %v2339 = vld [vmem:[%s3] sm:$0xff]
        %v2340 = vld [vmem:[%s3 + $0x8] sm:$0xff]
        %v2341 = vld [vmem:[%s3 + $0x10] sm:$0xff]
        %v2342 = vld [vmem:[%s3 + $0x18] sm:$0xff]
        %v2343 = vld [vmem:[%s3 + $0x20] sm:$0xff]
        %v2344 = vld [vmem:[%s3 + $0x28] sm:$0xff]
        %v2345 = vld [vmem:[%s3 + $0x30] sm:$0xff]
        %v2346 = vld [vmem:[%s3 + $0x38] sm:$0xff]
        %v2347 = vld [vmem:[%s3 + $0x40] sm:$0xff]
        %v2348 = vld [vmem:[%s3 + $0x48] sm:$0xff]
        %v2349 = vld [vmem:[%s3 + $0x50] sm:$0xff]
        %v2350 = vld [vmem:[%s3 + $0x58] sm:$0xff]
        %v2351 = vld [vmem:[%s3 + $0x60] sm:$0xff]
        %v2352 = vld [vmem:[%s3 + $0x68] sm:$0xff]
        %v2353 = vld [vmem:[%s3 + $0x70] sm:$0xff]
        %v2354 = vld [vmem:[%s3 + $0x78] sm:$0xff]
        %v2355 = vld [vmem:[%s3 + $0x80] sm:$0xff]
        %v2356 = vld [vmem:[%s3 + $0x88] sm:$0xff]
        %v2357 = vld [vmem:[%s3 + $0x90] sm:$0xff]
        %v2358 = vld [vmem:[%s3 + $0x98] sm:$0xff]
        %v2359 = vld [vmem:[%s3 + $0xa0] sm:$0xff]
        %v2360 = vld [vmem:[%s3 + $0xa8] sm:$0xff]
        %v2361 = vld [vmem:[%s3 + $0xb0] sm:$0xff]
        %v2362 = vld [vmem:[%s3 + $0xb8] sm:$0xff]
        %v2363 = vld [vmem:[%s3 + $0xc0] sm:$0xff]
        %v2364 = vld [vmem:[%s3 + $0xc8] sm:$0xff]
        %v2365 = vld [vmem:[%s3 + $0xd0] sm:$0xff]
        %v2366 = vld [vmem:[%s3 + $0xd8] sm:$0xff]
        %v2367 = vld [vmem:[%s3 + $0xe0] sm:$0xff]
        %v2368 = vld [vmem:[%s3 + $0xe8] sm:$0xff]
        %v2369 = vld [vmem:[%s3 + $0xf0] sm:$0xff]
        %v2370 = vld [vmem:[%s3 + $0xf8] sm:$0xff]
        %v2371 = vld [vmem:[%s3 + $0x100] sm:$0xff]
        %v2372 = vld [vmem:[%s3 + $0x108] sm:$0xff]
        %v2373 = vld [vmem:[%s3 + $0x110] sm:$0xff]
        %v2374 = vld [vmem:[%s3 + $0x118] sm:$0xff]
        %v2375 = vld [vmem:[%s3 + $0x120] sm:$0xff]
        %v2376 = vld [vmem:[%s3 + $0x128] sm:$0xff]
        %v2377 = vld [vmem:[%s3 + $0x130] sm:$0xff]
        %v2378 = vld [vmem:[%s3 + $0x138] sm:$0xff]
        %v2379 = vld [vmem:[%s3 + $0x140] sm:$0xff]
        %v2380 = vld [vmem:[%s3 + $0x148] sm:$0xff]
        %v2381 = vld [vmem:[%s3 + $0x150] sm:$0xff]
        %v2382 = vld [vmem:[%s3 + $0x158] sm:$0xff]
        %v2383 = vld [vmem:[%s3 + $0x160] sm:$0xff]
        %v2384 = vld [vmem:[%s3 + $0x168] sm:$0xff]
        %v2385 = vld [vmem:[%s3 + $0x170] sm:$0xff]
        %v2386 = vld [vmem:[%s3 + $0x178] sm:$0xff]
        %v2387 = vld [vmem:[%s3 + $0x180] sm:$0xff]
        %v2388 = vld [vmem:[%s3 + $0x188] sm:$0xff]
        %v2389 = vld [vmem:[%s3 + $0x190] sm:$0xff]
        %v2390 = vld [vmem:[%s3 + $0x198] sm:$0xff]
        %v2391 = vld [vmem:[%s3 + $0x1a0] sm:$0xff]
        %v2392 = vld [vmem:[%s3 + $0x1a8] sm:$0xff]
        %v2393 = vld [vmem:[%s3 + $0x1b0] sm:$0xff]
        %v2394 = vld [vmem:[%s3 + $0x1b8] sm:$0xff]
        %v2395 = vld [vmem:[%s3 + $0x1c0] sm:$0xff]
        %v2396 = vld [vmem:[%s3 + $0x1c8] sm:$0xff]
        %v2397 = vld [vmem:[%s3 + $0x1d0] sm:$0xff]
        %v2398 = vld [vmem:[%s3 + $0x1d8] sm:$0xff]
        %v2399 = vld [vmem:[%s3 + $0x1e0] sm:$0xff]
        %v2400 = vld [vmem:[%s3 + $0x1e8] sm:$0xff]
        %v2401 = vld [vmem:[%s3 + $0x1f0] sm:$0xff]
        %v2402 = vld [vmem:[%s3 + $0x1f8] sm:$0xff]
        %2403 = vmatprep.subr.mxu0 %v2340
        %2404 = vmatpush1.msra.mxu0 %v2339
        %2405 = vmatprep.subr.mxu0 %v2344
        %2406 = vmatpush1.msra.mxu0 %v2343
        %2407 = vmatprep.subr.mxu0 %v2348
        %2408 = vmatpush1.msra.mxu0 %v2347
        %2409 = vmatprep.subr.mxu0 %v2352
        %2410 = vmatpush1.msra.mxu0 %v2351
        %2411 = vmatprep.subr.mxu0 %v2356
        %2412 = vmatpush1.msra.mxu0 %v2355
        %2413 = vmatprep.subr.mxu0 %v2360
        %2414 = vmatpush1.msra.mxu0 %v2359
        %2415 = vmatprep.subr.mxu0 %v2364
        %2416 = vmatpush1.msra.mxu0 %v2363
        %2417 = vmatprep.subr.mxu0 %v2368
        %2418 = vmatpush1.msra.mxu0 %v2367
        %2419 = vmatprep.subr.mxu0 %v2372
        %2420 = vmatpush1.msra.mxu0 %v2371
        %2421 = vmatprep.subr.mxu0 %v2376
        %2422 = vmatpush1.msra.mxu0 %v2375
        %2423 = vmatprep.subr.mxu0 %v2380
        %2424 = vmatpush1.msra.mxu0 %v2379
        %2425 = vmatprep.subr.mxu0 %v2384
        %2426 = vmatpush1.msra.mxu0 %v2383
        %2427 = vmatprep.subr.mxu0 %v2388
        %2428 = vmatpush1.msra.mxu0 %v2387
        %2429 = vmatprep.subr.mxu0 %v2392
        %2430 = vmatpush1.msra.mxu0 %v2391
        %2431 = vmatprep.subr.mxu0 %v2396
        %2432 = vmatpush1.msra.mxu0 %v2395
        %2433 = vmatprep.subr.mxu0 %v2400
        %2434 = vmatpush1.msra.mxu0 %v2399
        %2435 = vmatprep.subr.mxu0 0.0
        %2436 = vmatpush1.msra.mxu0 0.0
        %2437 = vmatprep.subr.mxu0 0.0
        %2438 = vmatpush1.msra.mxu0 0.0
        %2439 = vmatprep.subr.mxu0 0.0
        %2440 = vmatpush1.msra.mxu0 0.0
        %2441 = vmatprep.subr.mxu0 0.0
        %2442 = vmatpush1.msra.mxu0 0.0
        %2443 = vmatprep.subr.mxu0 0.0
        %2444 = vmatpush1.msra.mxu0 0.0
        %2445 = vmatprep.subr.mxu0 0.0
        %2446 = vmatpush1.msra.mxu0 0.0
        %2447 = vmatprep.subr.mxu0 0.0
        %2448 = vmatpush1.msra.mxu0 0.0
        %2449 = vmatprep.subr.mxu0 0.0
        %2450 = vmatpush1.msra.mxu0 0.0
        %2451 = vmatprep.subr.mxu0 0.0
        %2452 = vmatpush1.msra.mxu0 0.0
        %2453 = vmatprep.subr.mxu0 0.0
        %2454 = vmatpush1.msra.mxu0 0.0
        %2455 = vmatprep.subr.mxu0 0.0
        %2456 = vmatpush1.msra.mxu0 0.0
        %2457 = vmatprep.subr.mxu0 0.0
        %2458 = vmatpush1.msra.mxu0 0.0
        %2459 = vmatprep.subr.mxu0 0.0
        %2460 = vmatpush1.msra.mxu0 0.0
        %2461 = vmatprep.subr.mxu0 0.0
        %2462 = vmatpush1.msra.mxu0 0.0
        %2463 = vmatprep.subr.mxu0 0.0
        %2464 = vmatpush1.msra.mxu0 0.0
        %2465 = vmatprep.subr.mxu0 0.0
        %2466 = vmatpush1.msra.mxu0 0.0
        %2467 = vmatprep.mubr.f32.mxu0 0.0
        %2468 = vmatmul.mubr.f32.gmra.mrb[0].mxu0 %v2330
        %v2469 = vpop.f32.mrb[0].mxu0
        %v2470 = vadd.f32 0.0, %v2469
        %v2471 = vpop.f32.mrb[0].mxu0
        %v2472 = vadd.f32 0.0, %v2471
        %2473 = vdwg.mxu0
        %2474 = vmatprep.subr.mxu0 %v2342
        %2475 = vmatpush1.msra.mxu0 %v2341
        %2476 = vmatprep.subr.mxu0 %v2346
        %2477 = vmatpush1.msra.mxu0 %v2345
        %2478 = vmatprep.subr.mxu0 %v2350
        %2479 = vmatpush1.msra.mxu0 %v2349
        %2480 = vmatprep.subr.mxu0 %v2354
        %2481 = vmatpush1.msra.mxu0 %v2353
        %2482 = vmatprep.subr.mxu0 %v2358
        %2483 = vmatpush1.msra.mxu0 %v2357
        %2484 = vmatprep.subr.mxu0 %v2362
        %2485 = vmatpush1.msra.mxu0 %v2361
        %2486 = vmatprep.subr.mxu0 %v2366
        %2487 = vmatpush1.msra.mxu0 %v2365
        %2488 = vmatprep.subr.mxu0 %v2370
        %2489 = vmatpush1.msra.mxu0 %v2369
        %2490 = vmatprep.subr.mxu0 %v2374
        %2491 = vmatpush1.msra.mxu0 %v2373
        %2492 = vmatprep.subr.mxu0 %v2378
        %2493 = vmatpush1.msra.mxu0 %v2377
        %2494 = vmatprep.subr.mxu0 %v2382
        %2495 = vmatpush1.msra.mxu0 %v2381
        %2496 = vmatprep.subr.mxu0 %v2386
        %2497 = vmatpush1.msra.mxu0 %v2385
        %2498 = vmatprep.subr.mxu0 %v2390
        %2499 = vmatpush1.msra.mxu0 %v2389
        %2500 = vmatprep.subr.mxu0 %v2394
        %2501 = vmatpush1.msra.mxu0 %v2393
        %2502 = vmatprep.subr.mxu0 %v2398
        %2503 = vmatpush1.msra.mxu0 %v2397
        %2504 = vmatprep.subr.mxu0 %v2402
        %2505 = vmatpush1.msra.mxu0 %v2401
        %2506 = vmatprep.subr.mxu0 0.0
        %2507 = vmatpush1.msra.mxu0 0.0
        %2508 = vmatprep.subr.mxu0 0.0
        %2509 = vmatpush1.msra.mxu0 0.0
        %2510 = vmatprep.subr.mxu0 0.0
        %2511 = vmatpush1.msra.mxu0 0.0
        %2512 = vmatprep.subr.mxu0 0.0
        %2513 = vmatpush1.msra.mxu0 0.0
        %2514 = vmatprep.subr.mxu0 0.0
        %2515 = vmatpush1.msra.mxu0 0.0
        %2516 = vmatprep.subr.mxu0 0.0
        %2517 = vmatpush1.msra.mxu0 0.0
        %2518 = vmatprep.subr.mxu0 0.0
        %2519 = vmatpush1.msra.mxu0 0.0
        %2520 = vmatprep.subr.mxu0 0.0
        %2521 = vmatpush1.msra.mxu0 0.0
        %2522 = vmatprep.subr.mxu0 0.0
        %2523 = vmatpush1.msra.mxu0 0.0
        %2524 = vmatprep.subr.mxu0 0.0
        %2525 = vmatpush1.msra.mxu0 0.0
        %2526 = vmatprep.subr.mxu0 0.0
        %2527 = vmatpush1.msra.mxu0 0.0
        %2528 = vmatprep.subr.mxu0 0.0
        %2529 = vmatpush1.msra.mxu0 0.0
        %2530 = vmatprep.subr.mxu0 0.0
        %2531 = vmatpush1.msra.mxu0 0.0
        %2532 = vmatprep.subr.mxu0 0.0
        %2533 = vmatpush1.msra.mxu0 0.0
        %2534 = vmatprep.subr.mxu0 0.0
        %2535 = vmatpush1.msra.mxu0 0.0
        %2536 = vmatprep.subr.mxu0 0.0
        %2537 = vmatpush1.msra.mxu0 0.0
        %2538 = vmatprep.mubr.f32.mxu0 0.0
        %2539 = vmatmul.mubr.f32.gmra.mrb[0].mxu0 %v2330
        %v2540 = vpop.f32.mrb[0].mxu0
        %v2541 = vadd.f32 0.0, %v2540
        %v2542 = vpop.f32.mrb[0].mxu0
        %v2543 = vadd.f32 0.0, %v2542
        %2544 = vdwg.mxu0
        %v2545 = vadd.f32 %v2335, %v2470
        %v2546 = vadd.f32 %v2336, %v2472
        %v2547 = vadd.f32 %v2337, %v2541
        %v2548 = vadd.f32 %v2338, %v2543
        %v2549 = vmul.f32 %v2545, 0.5
        %v2550 = vmul.f32 %v2546, 0.5
        %v2551 = vmul.f32 %v2547, 0.5
        %v2552 = vtanh.pop %v2549
        %v2553 = vtanh.pop %v2550
        %v2554 = vtanh.pop %v2551
        %v2555 = vmul.f32 %v2552, 0.5
        %v2556 = vmul.f32 %v2553, 0.5
        %v2557 = vmul.f32 %v2554, 0.5
        %v2558 = vadd.f32 %v2555, 0.5
        %v2559 = vadd.f32 %v2556, 0.5
        %v2560 = vadd.f32 %v2557, 0.5
        %v2561 = vtanh.pop %v2548
        %v2562 = vmul.f32 %v2559, %v2331
        %v2563 = vmul.f32 %v2558, %v2561
        %v2564 = vadd.f32 %v2562, %v2563
        %v2565 = vtanh.pop %v2564
        %v2566 = vmul.f32 %v2560, %v2565
        %s2567 = scalar_lea.vmem %s447, 48
        %v2568 = vld [vmem:[%s2567] sm:$0xff]
        %2570 = vset.pattern.permute.xlu0 0
        %2571 = vperm.xlu0 %2570, %v2568
        %v2572 = vpop.permute.xlu0 %2571
        %v2574 = vmul.f32 %v2572, %v2566
        %v2575 = vsub.f32 1.0, %v2568
        %2577 = vset.pattern.permute.xlu0 0
        %2578 = vperm.xlu0 %2577, %v2575
        %v2579 = vpop.permute.xlu0 %2578
        %v2581 = vmul.f32 %v2579, %v2330
        %v2582 = vadd.f32 %v2574, %v2581
        %2583 = vst [vmem:[#allocation2] sm:$0xff] %v2582
        %v2584 = vmul.f32 %v2572, %v2564
        %v2585 = vmul.f32 %v2579, %v2331
        %v2586 = vadd.f32 %v2584, %v2585
        %2587 = vst [vmem:[#allocation3] sm:$0xff] %v2586
        %v2588 = vld [vmem:[#allocation2] sm:$0xff]
        %v2589 = vld [vmem:[#allocation3] sm:$0xff]
        %s2590 = smul.u32 7, 4
        %s2591 = smul.addr %s2590, 8
        %s2592 = scalar_lea.vmem [#allocation4], %s2591
        %v2593 = vld [vmem:[%s2592] sm:$0xff]
        %v2594 = vld [vmem:[%s2592 + $0x8] sm:$0xff]
        %v2595 = vld [vmem:[%s2592 + $0x10] sm:$0xff]
        %v2596 = vld [vmem:[%s2592 + $0x18] sm:$0xff]
        %v2597 = vld [vmem:[%s3] sm:$0xff]
        %v2598 = vld [vmem:[%s3 + $0x8] sm:$0xff]
        %v2599 = vld [vmem:[%s3 + $0x10] sm:$0xff]
        %v2600 = vld [vmem:[%s3 + $0x18] sm:$0xff]
        %v2601 = vld [vmem:[%s3 + $0x20] sm:$0xff]
        %v2602 = vld [vmem:[%s3 + $0x28] sm:$0xff]
        %v2603 = vld [vmem:[%s3 + $0x30] sm:$0xff]
        %v2604 = vld [vmem:[%s3 + $0x38] sm:$0xff]
        %v2605 = vld [vmem:[%s3 + $0x40] sm:$0xff]
        %v2606 = vld [vmem:[%s3 + $0x48] sm:$0xff]
        %v2607 = vld [vmem:[%s3 + $0x50] sm:$0xff]
        %v2608 = vld [vmem:[%s3 + $0x58] sm:$0xff]
        %v2609 = vld [vmem:[%s3 + $0x60] sm:$0xff]
        %v2610 = vld [vmem:[%s3 + $0x68] sm:$0xff]
        %v2611 = vld [vmem:[%s3 + $0x70] sm:$0xff]
        %v2612 = vld [vmem:[%s3 + $0x78] sm:$0xff]
        %v2613 = vld [vmem:[%s3 + $0x80] sm:$0xff]
        %v2614 = vld [vmem:[%s3 + $0x88] sm:$0xff]
        %v2615 = vld [vmem:[%s3 + $0x90] sm:$0xff]
        %v2616 = vld [vmem:[%s3 + $0x98] sm:$0xff]
        %v2617 = vld [vmem:[%s3 + $0xa0] sm:$0xff]
        %v2618 = vld [vmem:[%s3 + $0xa8] sm:$0xff]
        %v2619 = vld [vmem:[%s3 + $0xb0] sm:$0xff]
        %v2620 = vld [vmem:[%s3 + $0xb8] sm:$0xff]
        %v2621 = vld [vmem:[%s3 + $0xc0] sm:$0xff]
        %v2622 = vld [vmem:[%s3 + $0xc8] sm:$0xff]
        %v2623 = vld [vmem:[%s3 + $0xd0] sm:$0xff]
        %v2624 = vld [vmem:[%s3 + $0xd8] sm:$0xff]
        %v2625 = vld [vmem:[%s3 + $0xe0] sm:$0xff]
        %v2626 = vld [vmem:[%s3 + $0xe8] sm:$0xff]
        %v2627 = vld [vmem:[%s3 + $0xf0] sm:$0xff]
        %v2628 = vld [vmem:[%s3 + $0xf8] sm:$0xff]
        %v2629 = vld [vmem:[%s3 + $0x100] sm:$0xff]
        %v2630 = vld [vmem:[%s3 + $0x108] sm:$0xff]
        %v2631 = vld [vmem:[%s3 + $0x110] sm:$0xff]
        %v2632 = vld [vmem:[%s3 + $0x118] sm:$0xff]
        %v2633 = vld [vmem:[%s3 + $0x120] sm:$0xff]
        %v2634 = vld [vmem:[%s3 + $0x128] sm:$0xff]
        %v2635 = vld [vmem:[%s3 + $0x130] sm:$0xff]
        %v2636 = vld [vmem:[%s3 + $0x138] sm:$0xff]
        %v2637 = vld [vmem:[%s3 + $0x140] sm:$0xff]
        %v2638 = vld [vmem:[%s3 + $0x148] sm:$0xff]
        %v2639 = vld [vmem:[%s3 + $0x150] sm:$0xff]
        %v2640 = vld [vmem:[%s3 + $0x158] sm:$0xff]
        %v2641 = vld [vmem:[%s3 + $0x160] sm:$0xff]
        %v2642 = vld [vmem:[%s3 + $0x168] sm:$0xff]
        %v2643 = vld [vmem:[%s3 + $0x170] sm:$0xff]
        %v2644 = vld [vmem:[%s3 + $0x178] sm:$0xff]
        %v2645 = vld [vmem:[%s3 + $0x180] sm:$0xff]
        %v2646 = vld [vmem:[%s3 + $0x188] sm:$0xff]
        %v2647 = vld [vmem:[%s3 + $0x190] sm:$0xff]
        %v2648 = vld [vmem:[%s3 + $0x198] sm:$0xff]
        %v2649 = vld [vmem:[%s3 + $0x1a0] sm:$0xff]
        %v2650 = vld [vmem:[%s3 + $0x1a8] sm:$0xff]
        %v2651 = vld [vmem:[%s3 + $0x1b0] sm:$0xff]
        %v2652 = vld [vmem:[%s3 + $0x1b8] sm:$0xff]
        %v2653 = vld [vmem:[%s3 + $0x1c0] sm:$0xff]
        %v2654 = vld [vmem:[%s3 + $0x1c8] sm:$0xff]
        %v2655 = vld [vmem:[%s3 + $0x1d0] sm:$0xff]
        %v2656 = vld [vmem:[%s3 + $0x1d8] sm:$0xff]
        %v2657 = vld [vmem:[%s3 + $0x1e0] sm:$0xff]
        %v2658 = vld [vmem:[%s3 + $0x1e8] sm:$0xff]
        %v2659 = vld [vmem:[%s3 + $0x1f0] sm:$0xff]
        %v2660 = vld [vmem:[%s3 + $0x1f8] sm:$0xff]
        %2661 = vmatprep.subr.mxu0 %v2598
        %2662 = vmatpush1.msra.mxu0 %v2597
        %2663 = vmatprep.subr.mxu0 %v2602
        %2664 = vmatpush1.msra.mxu0 %v2601
        %2665 = vmatprep.subr.mxu0 %v2606
        %2666 = vmatpush1.msra.mxu0 %v2605
        %2667 = vmatprep.subr.mxu0 %v2610
        %2668 = vmatpush1.msra.mxu0 %v2609
        %2669 = vmatprep.subr.mxu0 %v2614
        %2670 = vmatpush1.msra.mxu0 %v2613
        %2671 = vmatprep.subr.mxu0 %v2618
        %2672 = vmatpush1.msra.mxu0 %v2617
        %2673 = vmatprep.subr.mxu0 %v2622
        %2674 = vmatpush1.msra.mxu0 %v2621
        %2675 = vmatprep.subr.mxu0 %v2626
        %2676 = vmatpush1.msra.mxu0 %v2625
        %2677 = vmatprep.subr.mxu0 %v2630
        %2678 = vmatpush1.msra.mxu0 %v2629
        %2679 = vmatprep.subr.mxu0 %v2634
        %2680 = vmatpush1.msra.mxu0 %v2633
        %2681 = vmatprep.subr.mxu0 %v2638
        %2682 = vmatpush1.msra.mxu0 %v2637
        %2683 = vmatprep.subr.mxu0 %v2642
        %2684 = vmatpush1.msra.mxu0 %v2641
        %2685 = vmatprep.subr.mxu0 %v2646
        %2686 = vmatpush1.msra.mxu0 %v2645
        %2687 = vmatprep.subr.mxu0 %v2650
        %2688 = vmatpush1.msra.mxu0 %v2649
        %2689 = vmatprep.subr.mxu0 %v2654
        %2690 = vmatpush1.msra.mxu0 %v2653
        %2691 = vmatprep.subr.mxu0 %v2658
        %2692 = vmatpush1.msra.mxu0 %v2657
        %2693 = vmatprep.subr.mxu0 0.0
        %2694 = vmatpush1.msra.mxu0 0.0
        %2695 = vmatprep.subr.mxu0 0.0
        %2696 = vmatpush1.msra.mxu0 0.0
        %2697 = vmatprep.subr.mxu0 0.0
        %2698 = vmatpush1.msra.mxu0 0.0
        %2699 = vmatprep.subr.mxu0 0.0
        %2700 = vmatpush1.msra.mxu0 0.0
        %2701 = vmatprep.subr.mxu0 0.0
        %2702 = vmatpush1.msra.mxu0 0.0
        %2703 = vmatprep.subr.mxu0 0.0
        %2704 = vmatpush1.msra.mxu0 0.0
        %2705 = vmatprep.subr.mxu0 0.0
        %2706 = vmatpush1.msra.mxu0 0.0
        %2707 = vmatprep.subr.mxu0 0.0
        %2708 = vmatpush1.msra.mxu0 0.0
        %2709 = vmatprep.subr.mxu0 0.0
        %2710 = vmatpush1.msra.mxu0 0.0
        %2711 = vmatprep.subr.mxu0 0.0
        %2712 = vmatpush1.msra.mxu0 0.0
        %2713 = vmatprep.subr.mxu0 0.0
        %2714 = vmatpush1.msra.mxu0 0.0
        %2715 = vmatprep.subr.mxu0 0.0
        %2716 = vmatpush1.msra.mxu0 0.0
        %2717 = vmatprep.subr.mxu0 0.0
        %2718 = vmatpush1.msra.mxu0 0.0
        %2719 = vmatprep.subr.mxu0 0.0
        %2720 = vmatpush1.msra.mxu0 0.0
        %2721 = vmatprep.subr.mxu0 0.0
        %2722 = vmatpush1.msra.mxu0 0.0
        %2723 = vmatprep.subr.mxu0 0.0
        %2724 = vmatpush1.msra.mxu0 0.0
        %2725 = vmatprep.mubr.f32.mxu0 0.0
        %2726 = vmatmul.mubr.f32.gmra.mrb[0].mxu0 %v2588
        %v2727 = vpop.f32.mrb[0].mxu0
        %v2728 = vadd.f32 0.0, %v2727
        %v2729 = vpop.f32.mrb[0].mxu0
        %v2730 = vadd.f32 0.0, %v2729
        %2731 = vdwg.mxu0
        %2732 = vmatprep.subr.mxu0 %v2600
        %2733 = vmatpush1.msra.mxu0 %v2599
        %2734 = vmatprep.subr.mxu0 %v2604
        %2735 = vmatpush1.msra.mxu0 %v2603
        %2736 = vmatprep.subr.mxu0 %v2608
        %2737 = vmatpush1.msra.mxu0 %v2607
        %2738 = vmatprep.subr.mxu0 %v2612
        %2739 = vmatpush1.msra.mxu0 %v2611
        %2740 = vmatprep.subr.mxu0 %v2616
        %2741 = vmatpush1.msra.mxu0 %v2615
        %2742 = vmatprep.subr.mxu0 %v2620
        %2743 = vmatpush1.msra.mxu0 %v2619
        %2744 = vmatprep.subr.mxu0 %v2624
        %2745 = vmatpush1.msra.mxu0 %v2623
        %2746 = vmatprep.subr.mxu0 %v2628
        %2747 = vmatpush1.msra.mxu0 %v2627
        %2748 = vmatprep.subr.mxu0 %v2632
        %2749 = vmatpush1.msra.mxu0 %v2631
        %2750 = vmatprep.subr.mxu0 %v2636
        %2751 = vmatpush1.msra.mxu0 %v2635
        %2752 = vmatprep.subr.mxu0 %v2640
        %2753 = vmatpush1.msra.mxu0 %v2639
        %2754 = vmatprep.subr.mxu0 %v2644
        %2755 = vmatpush1.msra.mxu0 %v2643
        %2756 = vmatprep.subr.mxu0 %v2648
        %2757 = vmatpush1.msra.mxu0 %v2647
        %2758 = vmatprep.subr.mxu0 %v2652
        %2759 = vmatpush1.msra.mxu0 %v2651
        %2760 = vmatprep.subr.mxu0 %v2656
        %2761 = vmatpush1.msra.mxu0 %v2655
        %2762 = vmatprep.subr.mxu0 %v2660
        %2763 = vmatpush1.msra.mxu0 %v2659
        %2764 = vmatprep.subr.mxu0 0.0
        %2765 = vmatpush1.msra.mxu0 0.0
        %2766 = vmatprep.subr.mxu0 0.0
        %2767 = vmatpush1.msra.mxu0 0.0
        %2768 = vmatprep.subr.mxu0 0.0
        %2769 = vmatpush1.msra.mxu0 0.0
        %2770 = vmatprep.subr.mxu0 0.0
        %2771 = vmatpush1.msra.mxu0 0.0
        %2772 = vmatprep.subr.mxu0 0.0
        %2773 = vmatpush1.msra.mxu0 0.0
        %2774 = vmatprep.subr.mxu0 0.0
        %2775 = vmatpush1.msra.mxu0 0.0
        %2776 = vmatprep.subr.mxu0 0.0
        %2777 = vmatpush1.msra.mxu0 0.0
        %2778 = vmatprep.subr.mxu0 0.0
        %2779 = vmatpush1.msra.mxu0 0.0
        %2780 = vmatprep.subr.mxu0 0.0
        %2781 = vmatpush1.msra.mxu0 0.0
        %2782 = vmatprep.subr.mxu0 0.0
        %2783 = vmatpush1.msra.mxu0 0.0
        %2784 = vmatprep.subr.mxu0 0.0
        %2785 = vmatpush1.msra.mxu0 0.0
        %2786 = vmatprep.subr.mxu0 0.0
        %2787 = vmatpush1.msra.mxu0 0.0
        %2788 = vmatprep.subr.mxu0 0.0
        %2789 = vmatpush1.msra.mxu0 0.0
        %2790 = vmatprep.subr.mxu0 0.0
        %2791 = vmatpush1.msra.mxu0 0.0
        %2792 = vmatprep.subr.mxu0 0.0
        %2793 = vmatpush1.msra.mxu0 0.0
        %2794 = vmatprep.subr.mxu0 0.0
        %2795 = vmatpush1.msra.mxu0 0.0
        %2796 = vmatprep.mubr.f32.mxu0 0.0
        %2797 = vmatmul.mubr.f32.gmra.mrb[0].mxu0 %v2588
        %v2798 = vpop.f32.mrb[0].mxu0
        %v2799 = vadd.f32 0.0, %v2798
        %v2800 = vpop.f32.mrb[0].mxu0
        %v2801 = vadd.f32 0.0, %v2800
        %2802 = vdwg.mxu0
        %v2803 = vadd.f32 %v2593, %v2728
        %v2804 = vadd.f32 %v2594, %v2730
        %v2805 = vadd.f32 %v2595, %v2799
        %v2806 = vadd.f32 %v2596, %v2801
        %v2807 = vmul.f32 %v2803, 0.5
        %v2808 = vmul.f32 %v2804, 0.5
        %v2809 = vmul.f32 %v2805, 0.5
        %v2810 = vtanh.pop %v2807
        %v2811 = vtanh.pop %v2808
        %v2812 = vtanh.pop %v2809
        %v2813 = vmul.f32 %v2810, 0.5
        %v2814 = vmul.f32 %v2811, 0.5
        %v2815 = vmul.f32 %v2812, 0.5
        %v2816 = vadd.f32 %v2813, 0.5
        %v2817 = vadd.f32 %v2814, 0.5
        %v2818 = vadd.f32 %v2815, 0.5
        %v2819 = vtanh.pop %v2806
        %v2820 = vmul.f32 %v2817, %v2589
        %v2821 = vmul.f32 %v2816, %v2819
        %v2822 = vadd.f32 %v2820, %v2821
        %v2823 = vtanh.pop %v2822
        %v2824 = vmul.f32 %v2818, %v2823
        %s2825 = scalar_lea.vmem %s447, 56
        %v2826 = vld [vmem:[%s2825] sm:$0xff]
        %2828 = vset.pattern.permute.xlu0 0
        %2829 = vperm.xlu0 %2828, %v2826
        %v2830 = vpop.permute.xlu0 %2829
        %v2832 = vmul.f32 %v2830, %v2824
        %v2833 = vsub.f32 1.0, %v2826
        %2835 = vset.pattern.permute.xlu0 0
        %2836 = vperm.xlu0 %2835, %v2833
        %v2837 = vpop.permute.xlu0 %2836
        %v2839 = vmul.f32 %v2837, %v2588
        %v2840 = vadd.f32 %v2832, %v2839
        %2841 = vst [vmem:[#allocation2] sm:$0xff] %v2840
        %v2842 = vmul.f32 %v2830, %v2822
        %v2843 = vmul.f32 %v2837, %v2589
        %v2844 = vadd.f32 %v2842, %v2843
        %2845 = vst [vmem:[#allocation3] sm:$0xff] %v2844
        %p2846 = scmp.eq.s32.totalorder %s30, 2
        // Predicated region
        $region69: #{tpu_custom_call.1} parent=63 // pred_check
          %p2847 = pneg %p2846
        $region70: #{tpu_custom_call.1} parent=63 // pred_check_branch
          %2849 = sbr.rel (%p2847) target = $region72
        $region71: #{tpu_custom_call.1} parent=63 // pred_region
          %v2850 = vld [vmem:[#allocation2] sm:$0xff]
          %v2851 = vld [vmem:[%s5] sm:$0xff]
          %v2852 = vld [vmem:[%s5 + $0x8] sm:$0xff]
          %v2853 = vld [vmem:[%s5 + $0x10] sm:$0xff]
          %v2854 = vld [vmem:[%s5 + $0x18] sm:$0xff]
          %v2855 = vld [vmem:[%s5 + $0x20] sm:$0xff]
          %v2856 = vld [vmem:[%s5 + $0x28] sm:$0xff]
          %v2857 = vld [vmem:[%s5 + $0x30] sm:$0xff]
          %v2858 = vld [vmem:[%s5 + $0x38] sm:$0xff]
          %v2859 = vld [vmem:[%s5 + $0x40] sm:$0xff]
          %v2860 = vld [vmem:[%s5 + $0x48] sm:$0xff]
          %v2861 = vld [vmem:[%s5 + $0x50] sm:$0xff]
          %v2862 = vld [vmem:[%s5 + $0x58] sm:$0xff]
          %v2863 = vld [vmem:[%s5 + $0x60] sm:$0xff]
          %v2864 = vld [vmem:[%s5 + $0x68] sm:$0xff]
          %v2865 = vld [vmem:[%s5 + $0x70] sm:$0xff]
          %v2866 = vld [vmem:[%s5 + $0x78] sm:$0xff]
          %v2867 = vld [vmem:[%s6] sm:$0x1]
          %v2869 = vlaneseq
          %v2870 = vshrl.u32 %v2869, 7
          %v2871 = vsub.s32 0, %v2870
          %v2872 = vrot.slane %v2867, %v2871
          %2874 = vmatprep.subr.mxu0 0.0
          %2875 = vmatpush1.msra.mxu0 %v2851
          %2876 = vmatprep.subr.mxu0 0.0
          %2877 = vmatpush1.msra.mxu0 %v2852
          %2878 = vmatprep.subr.mxu0 0.0
          %2879 = vmatpush1.msra.mxu0 %v2853
          %2880 = vmatprep.subr.mxu0 0.0
          %2881 = vmatpush1.msra.mxu0 %v2854
          %2882 = vmatprep.subr.mxu0 0.0
          %2883 = vmatpush1.msra.mxu0 %v2855
          %2884 = vmatprep.subr.mxu0 0.0
          %2885 = vmatpush1.msra.mxu0 %v2856
          %2886 = vmatprep.subr.mxu0 0.0
          %2887 = vmatpush1.msra.mxu0 %v2857
          %2888 = vmatprep.subr.mxu0 0.0
          %2889 = vmatpush1.msra.mxu0 %v2858
          %2890 = vmatprep.subr.mxu0 0.0
          %2891 = vmatpush1.msra.mxu0 %v2859
          %2892 = vmatprep.subr.mxu0 0.0
          %2893 = vmatpush1.msra.mxu0 %v2860
          %2894 = vmatprep.subr.mxu0 0.0
          %2895 = vmatpush1.msra.mxu0 %v2861
          %2896 = vmatprep.subr.mxu0 0.0
          %2897 = vmatpush1.msra.mxu0 %v2862
          %2898 = vmatprep.subr.mxu0 0.0
          %2899 = vmatpush1.msra.mxu0 %v2863
          %2900 = vmatprep.subr.mxu0 0.0
          %2901 = vmatpush1.msra.mxu0 %v2864
          %2902 = vmatprep.subr.mxu0 0.0
          %2903 = vmatpush1.msra.mxu0 %v2865
          %2904 = vmatprep.subr.mxu0 0.0
          %2905 = vmatpush1.msra.mxu0 %v2866
          %2906 = vmatprep.subr.mxu0 0.0
          %2907 = vmatpush1.msra.mxu0 0.0
          %2908 = vmatprep.subr.mxu0 0.0
          %2909 = vmatpush1.msra.mxu0 0.0
          %2910 = vmatprep.subr.mxu0 0.0
          %2911 = vmatpush1.msra.mxu0 0.0
          %2912 = vmatprep.subr.mxu0 0.0
          %2913 = vmatpush1.msra.mxu0 0.0
          %2914 = vmatprep.subr.mxu0 0.0
          %2915 = vmatpush1.msra.mxu0 0.0
          %2916 = vmatprep.subr.mxu0 0.0
          %2917 = vmatpush1.msra.mxu0 0.0
          %2918 = vmatprep.subr.mxu0 0.0
          %2919 = vmatpush1.msra.mxu0 0.0
          %2920 = vmatprep.subr.mxu0 0.0
          %2921 = vmatpush1.msra.mxu0 0.0
          %2922 = vmatprep.subr.mxu0 0.0
          %2923 = vmatpush1.msra.mxu0 0.0
          %2924 = vmatprep.subr.mxu0 0.0
          %2925 = vmatpush1.msra.mxu0 0.0
          %2926 = vmatprep.subr.mxu0 0.0
          %2927 = vmatpush1.msra.mxu0 0.0
          %2928 = vmatprep.subr.mxu0 0.0
          %2929 = vmatpush1.msra.mxu0 0.0
          %2930 = vmatprep.subr.mxu0 0.0
          %2931 = vmatpush1.msra.mxu0 0.0
          %2932 = vmatprep.subr.mxu0 0.0
          %2933 = vmatpush1.msra.mxu0 0.0
          %2934 = vmatprep.subr.mxu0 0.0
          %2935 = vmatpush1.msra.mxu0 0.0
          %2936 = vmatprep.subr.mxu0 0.0
          %2937 = vmatpush1.msra.mxu0 0.0
          %2938 = vmatprep.mubr.f32.mxu0 0.0
          %2939 = vmatmul.mubr.f32.gmra.mrb[0].mxu0 %v2850
          %v2940 = vpop.f32.mrb[0].mxu0
          %v2941 = vadd.f32 %v2872, %v2940
          %v2942 = vpop.f32.mrb[0].mxu0
          %2943 = vdwg.mxu0
          %v2944 = vmax.f32 %v2941, 0.0
          %v2945 = vld [vmem:[%s7] sm:$0xff]
          %v2946 = vld [vmem:[%s7 + $0x8] sm:$0xff]
          %v2947 = vld [vmem:[%s7 + $0x10] sm:$0xff]
          %v2948 = vld [vmem:[%s7 + $0x18] sm:$0xff]
          %v2949 = vld [vmem:[%s7 + $0x20] sm:$0xff]
          %v2950 = vld [vmem:[%s7 + $0x28] sm:$0xff]
          %v2951 = vld [vmem:[%s7 + $0x30] sm:$0xff]
          %v2952 = vld [vmem:[%s7 + $0x38] sm:$0xff]
          %v2953 = vld [vmem:[%s7 + $0x40] sm:$0xff]
          %v2954 = vld [vmem:[%s7 + $0x48] sm:$0xff]
          %v2955 = vld [vmem:[%s7 + $0x50] sm:$0xff]
          %v2956 = vld [vmem:[%s7 + $0x58] sm:$0xff]
          %v2957 = vld [vmem:[%s7 + $0x60] sm:$0xff]
          %v2958 = vld [vmem:[%s7 + $0x68] sm:$0xff]
          %v2959 = vld [vmem:[%s7 + $0x70] sm:$0xff]
          %v2960 = vld [vmem:[%s7 + $0x78] sm:$0xff]
          %v2961 = vld [vmem:[%s8] sm:$0x1]
          %v2963 = vlaneseq
          %v2964 = vshrl.u32 %v2963, 7
          %v2965 = vsub.s32 0, %v2964
          %v2966 = vrot.slane %v2961, %v2965
          %2968 = vmatprep.subr.mxu0 0.0
          %2969 = vmatpush1.msra.mxu0 %v2945
          %2970 = vmatprep.subr.mxu0 0.0
          %2971 = vmatpush1.msra.mxu0 %v2946
          %2972 = vmatprep.subr.mxu0 0.0
          %2973 = vmatpush1.msra.mxu0 %v2947
          %2974 = vmatprep.subr.mxu0 0.0
          %2975 = vmatpush1.msra.mxu0 %v2948
          %2976 = vmatprep.subr.mxu0 0.0
          %2977 = vmatpush1.msra.mxu0 %v2949
          %2978 = vmatprep.subr.mxu0 0.0
          %2979 = vmatpush1.msra.mxu0 %v2950
          %2980 = vmatprep.subr.mxu0 0.0
          %2981 = vmatpush1.msra.mxu0 %v2951
          %2982 = vmatprep.subr.mxu0 0.0
          %2983 = vmatpush1.msra.mxu0 %v2952
          %2984 = vmatprep.subr.mxu0 0.0
          %2985 = vmatpush1.msra.mxu0 %v2953
          %2986 = vmatprep.subr.mxu0 0.0
          %2987 = vmatpush1.msra.mxu0 %v2954
          %2988 = vmatprep.subr.mxu0 0.0
          %2989 = vmatpush1.msra.mxu0 %v2955
          %2990 = vmatprep.subr.mxu0 0.0
          %2991 = vmatpush1.msra.mxu0 %v2956
          %2992 = vmatprep.subr.mxu0 0.0
          %2993 = vmatpush1.msra.mxu0 %v2957
          %2994 = vmatprep.subr.mxu0 0.0
          %2995 = vmatpush1.msra.mxu0 %v2958
          %2996 = vmatprep.subr.mxu0 0.0
          %2997 = vmatpush1.msra.mxu0 %v2959
          %2998 = vmatprep.subr.mxu0 0.0
          %2999 = vmatpush1.msra.mxu0 %v2960
          %3000 = vmatprep.subr.mxu0 0.0
          %3001 = vmatpush1.msra.mxu0 0.0
          %3002 = vmatprep.subr.mxu0 0.0
          %3003 = vmatpush1.msra.mxu0 0.0
          %3004 = vmatprep.subr.mxu0 0.0
          %3005 = vmatpush1.msra.mxu0 0.0
          %3006 = vmatprep.subr.mxu0 0.0
          %3007 = vmatpush1.msra.mxu0 0.0
          %3008 = vmatprep.subr.mxu0 0.0
          %3009 = vmatpush1.msra.mxu0 0.0
          %3010 = vmatprep.subr.mxu0 0.0
          %3011 = vmatpush1.msra.mxu0 0.0
          %3012 = vmatprep.subr.mxu0 0.0
          %3013 = vmatpush1.msra.mxu0 0.0
          %3014 = vmatprep.subr.mxu0 0.0
          %3015 = vmatpush1.msra.mxu0 0.0
          %3016 = vmatprep.subr.mxu0 0.0
          %3017 = vmatpush1.msra.mxu0 0.0
          %3018 = vmatprep.subr.mxu0 0.0
          %3019 = vmatpush1.msra.mxu0 0.0
          %3020 = vmatprep.subr.mxu0 0.0
          %3021 = vmatpush1.msra.mxu0 0.0
          %3022 = vmatprep.subr.mxu0 0.0
          %3023 = vmatpush1.msra.mxu0 0.0
          %3024 = vmatprep.subr.mxu0 0.0
          %3025 = vmatpush1.msra.mxu0 0.0
          %3026 = vmatprep.subr.mxu0 0.0
          %3027 = vmatpush1.msra.mxu0 0.0
          %3028 = vmatprep.subr.mxu0 0.0
          %3029 = vmatpush1.msra.mxu0 0.0
          %3030 = vmatprep.subr.mxu0 0.0
          %3031 = vmatpush1.msra.mxu0 0.0
          %3032 = vmatprep.mubr.f32.mxu0 0.0
          %3033 = vmatmul.mubr.f32.gmra.mrb[0].mxu0 %v2944
          %v3034 = vpop.f32.mrb[0].mxu0
          %v3035 = vadd.f32 %v2966, %v3034
          %v3036 = vpop.f32.mrb[0].mxu0
          %3037 = vdwg.mxu0
          %v3038 = vld [vmem:[%s9] sm:$0x1]
          %v3040 = vlaneseq
          %v3041 = vshrl.u32 %v3040, 7
          %v3042 = vsub.s32 0, %v3041
          %v3043 = vrot.slane %v3038, %v3042
          %v3045 = vmul.f32 %v3035, %v3043
          %v3046 = vld [vmem:[%s10] sm:$0x1]
          %v3048 = vlaneseq
          %v3049 = vshrl.u32 %v3048, 7
          %v3050 = vsub.s32 0, %v3049
          %v3051 = vrot.slane %v3046, %v3050
          %v3053 = vadd.f32 %v3045, %v3051
          %3054 = vst [vmem:[%s428] sm:$0xff] %v3053
        $region72: #{tpu_custom_call.1} parent=63 // pred_fallthru
          _
        %s3055 = sand.u32 %s290, 1
        %s3056 = scalar_lea.sflag [#allocation6], %s3055
        %s3057 = sand.u32 %s290, 1
        %s3058 = smul.addr %s3057, 8
        %s3059 = scalar_lea.vmem [#allocation5], %s3058
        // Predicated region
        $region73: #{tpu_custom_call.1} parent=63 // pred_check
          %p3060 = pneg %p300
        $region74: #{tpu_custom_call.1} parent=63 // pred_check_branch
          %3062 = sbr.rel (%p3060) target = $region76
        $region75: #{tpu_custom_call.1} parent=63 // pred_region
          %s3064 = ssub.s32 128, 128
          %3065 = vsyncadd %s3056, %s3064
          %s3066 = smul.addr %s29, 128
          %s3067 = scalar_lea.hbm %s11, %s3066
          %s3069 = sshll.u32 %s3059, 4
          %s3070 = int_to_ptr.vmem [resolvable:$true] %s3069
          %3072 = dma.vmem_to_hbm [thread:$0]  %s3070, 128, %s3067, %s3056
        $region76: #{tpu_custom_call.1} parent=63 // pred_fallthru
          _
      $region64: #{tpu_custom_call.1} parent=5 // pred_fallthru
        _
      %p3073 = scmp.le.s32.totalorder 2, %s20
      // Predicated region
      $region77: #{tpu_custom_call.1} parent=5 // pred_check
        %p3074 = pneg %p3073
      $region78: #{tpu_custom_call.1} parent=5 // pred_check_branch
        %3076 = sbr.rel (%p3074) target = $region80
      $region79: #{tpu_custom_call.1} parent=5 // pred_region
        %s3077 = ssub.s32 %s20, 2
        // Predicated region
        $region81: #{tpu_custom_call.1} parent=79 // pred_check
          %p3078 = pneg %p306
        $region82: #{tpu_custom_call.1} parent=79 // pred_check_branch
          %3080 = sbr.rel (%p3078) target = $region84
        $region83: #{tpu_custom_call.1} parent=79 // pred_region
          %s3081 = sand.u32 %s291, 1
          %s3082 = scalar_lea.sflag [#allocation6], %s3081
          %s3083 = sand.u32 %s291, 1
          %s3084 = smul.addr %s3083, 8
          %s3085 = scalar_lea.vmem [#allocation5], %s3084
          %3086 = dma.done %s3082, 128
        $region84: #{tpu_custom_call.1} parent=79 // pred_fallthru
          _
      $region80: #{tpu_custom_call.1} parent=5 // pred_fallthru
        _
    $region6: #{tpu_custom_call.1} parent=1 // loop_footer
      %s24 = sadd.s32 1, %s20
    $region7: #{tpu_custom_call.1} parent=1 // loop_footer_branch
      %19 = sbr.rel target = $region3
    $region8: #{tpu_custom_call.1} parent=1 // loop_exit
      _
    %3087 = vsyncpa [#allocation6], 1
    %s3088 = scalar_lea.sflag [#allocation6], 1
    %3089 = vsyncpa %s3088, 1

</llo_original>
